<compile_context>
chip_gen: v5e
topology: v5e:2x2
jax: 0.10.0
libtpu: 0.0.40
codegen_flags: <defaults>
</compile_context>

<pallas_src>
import jax
import jax.numpy as jnp
from jax import lax
from jax.experimental import pallas as pl
from jax.experimental.pallas import tpu as pltpu


# ----------------------------- tiny preference-embedding Linear -----------------------------

def _matmul_bias_kernel(x_ref, w_ref, b_ref, o_ref):
    o_ref[...] = (jnp.dot(x_ref[...], w_ref[...],
                          preferred_element_type=jnp.float32) + b_ref[...])


def linear_pallas(x2d, w, b):
    """x2d: (M, K), w: (K, N), b: (N,) -> (M, N). Single full-tile block."""
    M, K = x2d.shape
    N = w.shape[1]
    return pl.pallas_call(
        _matmul_bias_kernel,
        out_shape=jax.ShapeDtypeStruct((M, N), jnp.float32),
        grid=(1,),
        in_specs=[
            pl.BlockSpec((M, K), lambda i: (0, 0)),
            pl.BlockSpec((K, N), lambda i: (0, 0)),
            pl.BlockSpec((1, N), lambda i: (0, 0)),
        ],
        out_specs=pl.BlockSpec((M, N), lambda i: (0, 0)),
    )(x2d, w, b.reshape(1, N))


# ----------------------------- gating (plain-JAX glue) -----------------------------

def _cv_squared(x):
    eps = 1e-10
    return jnp.var(x, ddof=1) / (jnp.mean(x) ** 2 + eps)


def topk_gating(pref_emb, w_gate, k):
    """Deterministic instance-level top-k softmax gating. Returns (gates (B, ne), loss)."""
    num_experts = w_gate.shape[1]
    logits = jnp.dot(pref_emb, w_gate)                   # tiny glue matmul
    top_vals, top_idx = jax.lax.top_k(logits, k)
    top_w = jax.nn.softmax(top_vals, axis=-1)
    gates = jnp.zeros_like(logits)
    for j in range(k):
        gates = gates + jax.nn.one_hot(top_idx[:, j], num_experts) * top_w[:, j:j + 1]
    importance = gates.sum(axis=0)
    return gates, _cv_squared(importance)


# ----------------------------- fused whole-encoder kernel -----------------------------

def _make_encoder_kernel(mp, B, Nn, Din):
    E = mp['embedding_dim']
    H = mp['head_num']
    D = mp['qkv_dim']
    HD = H * D
    ne = mp['num_experts']
    L = mp['encoder_layer_num']
    N1 = Nn + 1
    scale = 1.0 / (float(D) ** 0.5)

    def kernel(gates_ref, data_ref, pref_ref,
               emb_w_ref, emb_b_ref,
               wproj_ref, wcomb_ref, bcomb_ref,
               g1_ref, bt1_ref, w1_ref, bb1_ref, w2_ref, bb2_ref,
               g2_ref, bt2_ref,
               o_ref, x_scr):
        b = pl.program_id(0)
        dat = data_ref[0]                                          # (Nn, Din)

        # --- MoE Linear input embedding: all experts, instance-gated accumulation ---
        emb = None
        for e in range(ne):                                        # static unroll
            ye = jnp.dot(dat, emb_w_ref[e],
                         preferred_element_type=jnp.float32) + emb_b_ref[e]
            term = gates_ref[b * ne + e] * ye                      # gates slot 0 = embedding
            emb = term if emb is None else emb + term

        # token block [embedded nodes ; embedded preference], built in VMEM scratch
        x_scr[0:Nn, :] = emb
        x_scr[Nn:N1, :] = pref_ref[pl.ds(b, 1), :]
        x = x_scr[...]                                             # (N1, E)

        for l in range(L):                                         # static unroll over layers
            # fused [q1 | k1 | v1 | v2] projection, lane-dense (N1, 4*HD) output
            proj = jnp.dot(x, wproj_ref[l], preferred_element_type=jnp.float32)

            # per-head self attention over all N1 tokens
            heads = []
            for h in range(H):                                     # static unroll
                lo, hi = h * D, (h + 1) * D
                qh = proj[:, lo:hi]                                # (N1, D)
                kh = proj[:, HD + lo:HD + hi]
                vh = proj[:, 2 * HD + lo:2 * HD + hi]
                s = lax.dot_general(qh, kh, (((1,), (1,)), ((), ())),
                                    preferred_element_type=jnp.float32) * scale
                m = jnp.max(s, axis=-1, keepdims=True)
                pexp = jnp.exp(s - m)
                wts = pexp * pl.reciprocal(jnp.sum(pexp, axis=-1, keepdims=True),
                                           approx=True)
                heads.append(jnp.dot(wts, vh, preferred_element_type=jnp.float32))
            attn = jnp.concatenate(heads, axis=1)                  # (N1, HD)

            # pref-key attention branch: softmax over a single key == 1 -> Wv2(pref_node)
            # broadcast onto the node rows (all but the last, pref, row).
            v2_row = proj[N1 - 1:N1, 3 * HD:4 * HD]                # (1, HD)
            row_ids = lax.broadcasted_iota(jnp.int32, (N1, 1), 0)
            add_mask = (row_ids < (N1 - 1)).astype(jnp.float32)
            out_concat = attn + add_mask * v2_row

            # multi-head combine + residual + InstanceNorm1d (normalize over node axis)
            mh = jnp.dot(out_concat, wcomb_ref[l],
                         preferred_element_type=jnp.float32) + bcomb_ref[l]
            added1 = x + mh
            mu1 = jnp.mean(added1, axis=0, keepdims=True)
            var1 = jnp.mean((added1 - mu1) ** 2, axis=0, keepdims=True)
            out1 = (added1 - mu1) * lax.rsqrt(var1 + 1e-5) * g1_ref[l] + bt1_ref[l]

            # MoE feed-forward: all experts in-kernel, gate-weighted vreg accumulation
            acc = None
            for e in range(ne):                                    # static unroll
                idx = l * ne + e
                h1 = jnp.dot(out1, w1_ref[idx],
                             preferred_element_type=jnp.float32) + bb1_ref[idx]
                h1 = jnp.maximum(h1, 0.0)
                ye = jnp.dot(h1, w2_ref[idx],
                             preferred_element_type=jnp.float32) + bb2_ref[idx]
                g = gates_ref[(l + 1) * B * ne + b * ne + e]       # gates slot l+1 = layer l
                term = g * ye
                acc = term if acc is None else acc + term

            # residual + InstanceNorm1d
            added2 = out1 + acc
            mu2 = jnp.mean(added2, axis=0, keepdims=True)
            var2 = jnp.mean((added2 - mu2) ** 2, axis=0, keepdims=True)
            x = (added2 - mu2) * lax.rsqrt(var2 + 1e-5) * g2_ref[l] + bt2_ref[l]

        # return out[:, :-1] (drop the preference token)
        o_ref[0] = x[0:Nn, :]

    return kernel


# ----------------------------- Encoder forward -----------------------------

def tsp_encoder_forward(params, data, pref, mp):
    E = mp['embedding_dim']
    H = mp['head_num']
    D = mp['qkv_dim']
    HD = H * D
    ne = mp['num_experts']
    FF = mp['ff_hidden_dim']
    L = mp['encoder_layer_num']
    k = mp['topk']
    B, Nn, Din = data.shape
    N1 = Nn + 1

    # preference embedding (tiny Linear(2, E))
    emb_pref = linear_pallas(pref, params['emb_pref_w'], params['emb_pref_b'])      # (B, E)

    # ---- top-k gating glue (plain JAX; tiny) ----
    gates_list = []
    g0, moe_loss = topk_gating(emb_pref, params['emb_moe']['w_gate'], k)
    gates_list.append(g0)
    for lp in params['layers']:
        gl, ll = topk_gating(emb_pref, lp['moe']['w_gate'], k)
        gates_list.append(gl)
        moe_loss = moe_loss + ll
    gates_flat = jnp.stack(gates_list, axis=0).reshape(-1)        # ((L+1)*B*ne,)

    # ---- stacked per-layer weights (fused [Wq1|Wk1|Wv1|Wv2] -> 128-lane projection) ----
    w_proj_all = jnp.stack(
        [jnp.concatenate([lp['wq1'], lp['wk1'], lp['wv1'], lp['wv2']], axis=1)
         for lp in params['layers']], axis=0)                                        # (L, E, 4HD)
    wcomb_all = jnp.stack([lp['combine_w'] for lp in params['layers']], axis=0)      # (L, HD, E)
    bcomb_all = jnp.stack([lp['combine_b'].reshape(1, E) for lp in params['layers']], axis=0)
    g1_all = jnp.stack([lp['norm1_g'].reshape(1, E) for lp in params['layers']], axis=0)
    b1_all = jnp.stack([lp['norm1_b'].reshape(1, E) for lp in params['layers']], axis=0)
    g2_all = jnp.stack([lp['norm2_g'].reshape(1, E) for lp in params['layers']], axis=0)
    b2_all = jnp.stack([lp['norm2_b'].reshape(1, E) for lp in params['layers']], axis=0)
    ffw1 = jnp.concatenate([lp['moe']['w1'] for lp in params['layers']], axis=0)     # (L*ne, E, FF)
    ffb1 = jnp.concatenate([lp['moe']['b1'].reshape(ne, 1, FF) for lp in params['layers']], axis=0)
    ffw2 = jnp.concatenate([lp['moe']['w2'] for lp in params['layers']], axis=0)     # (L*ne, FF, E)
    ffb2 = jnp.concatenate([lp['moe']['b2'].reshape(ne, 1, E) for lp in params['layers']], axis=0)
    emb_w = params['emb_moe']['w']                                                   # (ne, Din, E)
    emb_b = params['emb_moe']['b'].reshape(ne, 1, E)

    out = pl.pallas_call(
        _make_encoder_kernel(mp, B, Nn, Din),
        out_shape=jax.ShapeDtypeStruct((B, Nn, E), jnp.float32),
        grid=(B,),
        in_specs=[
            pl.BlockSpec(memory_space=pltpu.MemorySpace.SMEM),        # gates ((L+1)*B*ne,)
            pl.BlockSpec((1, Nn, Din), lambda b: (b, 0, 0)),          # data
            pl.BlockSpec((B, E), lambda b: (0, 0)),                   # emb_pref
            pl.BlockSpec((ne, Din, E), lambda b: (0, 0, 0)),          # embedding expert W
            pl.BlockSpec((ne, 1, E), lambda b: (0, 0, 0)),            # embedding expert b
            pl.BlockSpec((L, E, 4 * HD), lambda b: (0, 0, 0)),        # fused qkv/v2 W
            pl.BlockSpec((L, HD, E), lambda b: (0, 0, 0)),            # combine W
            pl.BlockSpec((L, 1, E), lambda b: (0, 0, 0)),             # combine b
            pl.BlockSpec((L, 1, E), lambda b: (0, 0, 0)),             # norm1 gamma
            pl.BlockSpec((L, 1, E), lambda b: (0, 0, 0)),             # norm1 beta
            pl.BlockSpec((L * ne, E, FF), lambda b: (0, 0, 0)),       # expert W1
            pl.BlockSpec((L * ne, 1, FF), lambda b: (0, 0, 0)),       # expert b1
            pl.BlockSpec((L * ne, FF, E), lambda b: (0, 0, 0)),       # expert W2
            pl.BlockSpec((L * ne, 1, E), lambda b: (0, 0, 0)),        # expert b2
            pl.BlockSpec((L, 1, E), lambda b: (0, 0, 0)),             # norm2 gamma
            pl.BlockSpec((L, 1, E), lambda b: (0, 0, 0)),             # norm2 beta
        ],
        out_specs=pl.BlockSpec((1, Nn, E), lambda b: (b, 0, 0)),
        scratch_shapes=[pltpu.VMEM((N1, E), jnp.float32)],            # token block scratch
        compiler_params=pltpu.CompilerParams(dimension_semantics=("parallel",)),
    )(gates_flat, data, emb_pref, emb_w, emb_b,
      w_proj_all, wcomb_all, bcomb_all, g1_all, b1_all,
      ffw1, ffb1, ffw2, ffb2, g2_all, b2_all)

    return out, moe_loss, emb_pref


# ----------------------------- Parameter init -----------------------------

def init_params(key, mp):
    E = mp['embedding_dim']
    HD = mp['head_num'] * mp['qkv_dim']
    ff = mp['ff_hidden_dim']
    ne = mp['num_experts']
    L = mp['encoder_layer_num']

    keys = {'k': key}

    def nxt():
        keys['k'], sub = jax.random.split(keys['k'])
        return sub

    def dense(shape, fan_in):
        return (1.0 / float(fan_in) ** 0.5) * jax.random.normal(nxt(), shape, jnp.float32)

    params = {
        'emb_pref_w': dense((2, E), 2),
        'emb_pref_b': dense((E,), 2),
        'emb_moe': {
            'w_gate': dense((E, ne), E),
            'w': dense((ne, 4, E), 4),
            'b': dense((ne, E), 4),
        },
        'layers': [],
    }
    for _ in range(L):
        lp = {
            'wq1': dense((E, HD), E), 'wk1': dense((E, HD), E), 'wv1': dense((E, HD), E),
            # wq2/wk2 kept for parameter parity; they provably do not affect the forward
            # output (softmax over a single pref key is identically 1).
            'wq2': dense((E, HD), E), 'wk2': dense((E, HD), E), 'wv2': dense((E, HD), E),
            'combine_w': dense((HD, E), HD), 'combine_b': dense((E,), HD),
            'norm1_g': jnp.ones((E,), jnp.float32), 'norm1_b': jnp.zeros((E,), jnp.float32),
            'norm2_g': jnp.ones((E,), jnp.float32), 'norm2_b': jnp.zeros((E,), jnp.float32),
            'moe': {
                'w_gate': dense((E, ne), E),
                'w1': dense((ne, E, ff), E), 'b1': dense((ne, ff), E),
                'w2': dense((ne, ff, E), ff), 'b2': dense((ne, E), ff),
            },
        }
        params['layers'].append(lp)
    return params


# ----------------------------- Main -----------------------------

if __name__ == "__main__":
    model_params = dict(
        embedding_dim=32,
        head_num=4,
        qkv_dim=8,
        encoder_layer_num=2,
        ff_hidden_dim=64,
        num_experts=4,
        topk=2,
        routing_level='instance',
        routing_method='input_choice',
    )

    key = jax.random.PRNGKey(0)
    kp, kd, kpref = jax.random.split(key, 3)
    params = init_params(kp, model_params)

    B, Nn = 2, 8
    data = jax.random.uniform(kd, (B, Nn, 4), jnp.float32)          # bi-objective TSP coords
    pref_raw = jax.random.uniform(kpref, (B, 2), jnp.float32)
    pref = pref_raw / pref_raw.sum(axis=-1, keepdims=True)          # preference weights

    fwd = jax.jit(lambda p, d, pr: tsp_encoder_forward(p, d, pr, model_params))
    out, moe_loss, emb_pref = fwd(params, data, pref)
    jax.block_until_ready((out, moe_loss, emb_pref))

    assert out.shape == (B, Nn, model_params['embedding_dim'])
    assert emb_pref.shape == (B, model_params['embedding_dim'])
    assert moe_loss.shape == ()
    assert bool(jnp.all(jnp.isfinite(out)))
    print("KERNEL_OK")
</pallas_src>

<mosaic_0001>
module attributes {stable_mosaic.version = 11 : i64} {
  func.func @_matmul_bias_kernel(%arg0: i32, %arg1: memref<2x2xf32, #tpu.memory_space<vmem>>, %arg2: memref<2x32xf32, #tpu.memory_space<vmem>>, %arg3: memref<1x32xf32, #tpu.memory_space<vmem>>, %arg4: memref<2x32xf32, #tpu.memory_space<vmem>>) attributes {dimension_semantics = [#tpu.dimension_semantics<arbitrary>], iteration_bounds = array<i64: 1>, scalar_prefetch = 0 : i64, scratch_operands = 0 : i64, tpu.core_type = #tpu.core_type<tc>, window_params = [{pipeline_mode = #tpu.pipeline_mode<synchronous>, transform_indices = @transform_0, window_bounds = array<i64: 2, 2>}, {pipeline_mode = #tpu.pipeline_mode<synchronous>, transform_indices = @transform_1, window_bounds = array<i64: 2, 32>}, {pipeline_mode = #tpu.pipeline_mode<synchronous>, transform_indices = @transform_2, window_bounds = array<i64: 1, 32>}, {pipeline_mode = #tpu.pipeline_mode<synchronous>, transform_indices = @transform_3, window_bounds = array<i64: 2, 32>}]} {
    %c0 = arith.constant 0 : index
    %c0_0 = arith.constant 0 : index
    %0 = vector.load %arg1[%c0, %c0_0] : memref<2x2xf32, #tpu.memory_space<vmem>>, vector<2x2xf32>
    %c0_1 = arith.constant 0 : index
    %c0_2 = arith.constant 0 : index
    %1 = vector.load %arg2[%c0_1, %c0_2] : memref<2x32xf32, #tpu.memory_space<vmem>>, vector<2x32xf32>
    %cst = arith.constant dense<0.000000e+00> : vector<2x32xf32>
    %2 = tpu.matmul %0, %1, %cst {dimension_numbers = #tpu.dot_dimension_numbers<[1], [0], [0], [1], [0, 0, 1, 1], [], []>} : vector<2x2xf32>, vector<2x32xf32>, vector<2x32xf32> -> vector<2x32xf32>
    %c0_3 = arith.constant 0 : index
    %c0_4 = arith.constant 0 : index
    %3 = vector.load %arg3[%c0_3, %c0_4] : memref<1x32xf32, #tpu.memory_space<vmem>>, vector<1x32xf32>
    %4 = vector.broadcast %3 : vector<1x32xf32> to vector<2x32xf32>
    %5 = arith.addf %2, %4 : vector<2x32xf32>
    %c0_5 = arith.constant 0 : index
    %c0_6 = arith.constant 0 : index
    %6 = vector.load %arg4[%c0_5, %c0_6] : memref<2x32xf32, #tpu.memory_space<vmem>>, vector<2x32xf32>
    tpu.vector_store %arg4[%c0_5, %c0_6], %5 {strides = array<i32>} : memref<2x32xf32, #tpu.memory_space<vmem>>, vector<2x32xf32>,
    return
  }
  func.func @transform_0(%arg0: i32) -> (i32, i32) {
    %c0_i32 = arith.constant 0 : i32
    %c0_i32_0 = arith.constant 0 : i32
    %c0_i32_1 = arith.constant 0 : i32
    return %c0_i32, %c0_i32_0 : i32, i32
  }
  func.func @transform_1(%arg0: i32) -> (i32, i32) {
    %c0_i32 = arith.constant 0 : i32
    %c0_i32_0 = arith.constant 0 : i32
    %c0_i32_1 = arith.constant 0 : i32
    return %c0_i32, %c0_i32_0 : i32, i32
  }
  func.func @transform_2(%arg0: i32) -> (i32, i32) {
    %c0_i32 = arith.constant 0 : i32
    %c0_i32_0 = arith.constant 0 : i32
    %c0_i32_1 = arith.constant 0 : i32
    return %c0_i32, %c0_i32_0 : i32, i32
  }
  func.func @transform_3(%arg0: i32) -> (i32, i32) {
    %c0_i32 = arith.constant 0 : i32
    %c0_i32_0 = arith.constant 0 : i32
    %c0_i32_1 = arith.constant 0 : i32
    return %c0_i32, %c0_i32_0 : i32, i32
  }
}

module attributes {stable_mosaic.version = 11 : i64} {
  func.func @kernel(%arg0: i32, %arg1: memref<24xf32, #tpu.memory_space<smem>>, %arg2: memref<1x8x4xf32, #tpu.memory_space<vmem>>, %arg3: memref<2x32xf32, #tpu.memory_space<vmem>>, %arg4: memref<4x4x32xf32, #tpu.memory_space<vmem>>, %arg5: memref<4x1x32xf32, #tpu.memory_space<vmem>>, %arg6: memref<2x32x128xf32, #tpu.memory_space<vmem>>, %arg7: memref<2x32x32xf32, #tpu.memory_space<vmem>>, %arg8: memref<2x1x32xf32, #tpu.memory_space<vmem>>, %arg9: memref<2x1x32xf32, #tpu.memory_space<vmem>>, %arg10: memref<2x1x32xf32, #tpu.memory_space<vmem>>, %arg11: memref<8x32x64xf32, #tpu.memory_space<vmem>>, %arg12: memref<8x1x64xf32, #tpu.memory_space<vmem>>, %arg13: memref<8x64x32xf32, #tpu.memory_space<vmem>>, %arg14: memref<8x1x32xf32, #tpu.memory_space<vmem>>, %arg15: memref<2x1x32xf32, #tpu.memory_space<vmem>>, %arg16: memref<2x1x32xf32, #tpu.memory_space<vmem>>, %arg17: memref<1x8x32xf32, #tpu.memory_space<vmem>>, %arg18: memref<9x32xf32, #tpu.memory_space<vmem>>) attributes {dimension_semantics = [#tpu.dimension_semantics<parallel>], iteration_bounds = array<i64: 2>, scalar_prefetch = 0 : i64, scratch_operands = 1 : i64, tpu.core_type = #tpu.core_type<tc>, window_params = [{transform_indices = @transform_0, window_bounds = array<i64: 24>}, {transform_indices = @transform_1, window_bounds = array<i64: 1, 8, 4>}, {pipeline_mode = #tpu.pipeline_mode<synchronous>, transform_indices = @transform_2, window_bounds = array<i64: 2, 32>}, {pipeline_mode = #tpu.pipeline_mode<synchronous>, transform_indices = @transform_3, window_bounds = array<i64: 4, 4, 32>}, {pipeline_mode = #tpu.pipeline_mode<synchronous>, transform_indices = @transform_4, window_bounds = array<i64: 4, 1, 32>}, {pipeline_mode = #tpu.pipeline_mode<synchronous>, transform_indices = @transform_5, window_bounds = array<i64: 2, 32, 128>}, {pipeline_mode = #tpu.pipeline_mode<synchronous>, transform_indices = @transform_6, window_bounds = array<i64: 2, 32, 32>}, {pipeline_mode = #tpu.pipeline_mode<synchronous>, transform_indices = @transform_7, window_bounds = array<i64: 2, 1, 32>}, {pipeline_mode = #tpu.pipeline_mode<synchronous>, transform_indices = @transform_8, window_bounds = array<i64: 2, 1, 32>}, {pipeline_mode = #tpu.pipeline_mode<synchronous>, transform_indices = @transform_9, window_bounds = array<i64: 2, 1, 32>}, {pipeline_mode = #tpu.pipeline_mode<synchronous>, transform_indices = @transform_10, window_bounds = array<i64: 8, 32, 64>}, {pipeline_mode = #tpu.pipeline_mode<synchronous>, transform_indices = @transform_11, window_bounds = array<i64: 8, 1, 64>}, {pipeline_mode = #tpu.pipeline_mode<synchronous>, transform_indices = @transform_12, window_bounds = array<i64: 8, 64, 32>}, {pipeline_mode = #tpu.pipeline_mode<synchronous>, transform_indices = @transform_13, window_bounds = array<i64: 8, 1, 32>}, {pipeline_mode = #tpu.pipeline_mode<synchronous>, transform_indices = @transform_14, window_bounds = array<i64: 2, 1, 32>}, {pipeline_mode = #tpu.pipeline_mode<synchronous>, transform_indices = @transform_15, window_bounds = array<i64: 2, 1, 32>}, {transform_indices = @transform_16, window_bounds = array<i64: 1, 8, 32>}]} {
    %c0 = arith.constant 0 : index
    %c0_0 = arith.constant 0 : index
    %c0_1 = arith.constant 0 : index
    %0 = vector.load %arg2[%c0, %c0_0, %c0_1] : memref<1x8x4xf32, #tpu.memory_space<vmem>>, vector<1x8x4xf32>
    %1 = vector.shape_cast %0 : vector<1x8x4xf32> to vector<8x4xf32>
    %c0_2 = arith.constant 0 : index
    %c0_3 = arith.constant 0 : index
    %c0_4 = arith.constant 0 : index
    %2 = vector.load %arg4[%c0_2, %c0_3, %c0_4] : memref<4x4x32xf32, #tpu.memory_space<vmem>>, vector<1x4x32xf32>
    %3 = vector.shape_cast %2 : vector<1x4x32xf32> to vector<4x32xf32>
    %cst = arith.constant dense<0.000000e+00> : vector<8x32xf32>
    %4 = tpu.matmul %1, %3, %cst {dimension_numbers = #tpu.dot_dimension_numbers<[1], [0], [0], [1], [0, 0, 1, 1], [], []>} : vector<8x4xf32>, vector<4x32xf32>, vector<8x32xf32> -> vector<8x32xf32>
    %c0_5 = arith.constant 0 : index
    %c0_6 = arith.constant 0 : index
    %c0_7 = arith.constant 0 : index
    %5 = vector.load %arg5[%c0_5, %c0_6, %c0_7] : memref<4x1x32xf32, #tpu.memory_space<vmem>>, vector<1x1x32xf32>
    %6 = vector.shape_cast %5 : vector<1x1x32xf32> to vector<1x32xf32>
    %7 = vector.broadcast %6 : vector<1x32xf32> to vector<8x32xf32>
    %8 = arith.addf %4, %7 : vector<8x32xf32>
    %c4_i32 = arith.constant 4 : i32
    %9 = arith.muli %arg0, %c4_i32 : i32
    %c0_i32 = arith.constant 0 : i32
    %10 = arith.addi %9, %c0_i32 : i32
    %11 = arith.index_cast %10 : i32 to index
    %12 = memref.load %arg1[%11] : memref<24xf32, #tpu.memory_space<smem>>
    %13 = vector.broadcast %12 : f32 to vector<8x32xf32>
    %14 = arith.mulf %13, %8 : vector<8x32xf32>
    %c1 = arith.constant 1 : index
    %c0_8 = arith.constant 0 : index
    %c0_9 = arith.constant 0 : index
    %15 = vector.load %arg4[%c1, %c0_8, %c0_9] : memref<4x4x32xf32, #tpu.memory_space<vmem>>, vector<1x4x32xf32>
    %16 = vector.shape_cast %15 : vector<1x4x32xf32> to vector<4x32xf32>
    %cst_10 = arith.constant dense<0.000000e+00> : vector<8x32xf32>
    %17 = tpu.matmul %1, %16, %cst_10 {dimension_numbers = #tpu.dot_dimension_numbers<[1], [0], [0], [1], [0, 0, 1, 1], [], []>} : vector<8x4xf32>, vector<4x32xf32>, vector<8x32xf32> -> vector<8x32xf32>
    %c1_11 = arith.constant 1 : index
    %c0_12 = arith.constant 0 : index
    %c0_13 = arith.constant 0 : index
    %18 = vector.load %arg5[%c1_11, %c0_12, %c0_13] : memref<4x1x32xf32, #tpu.memory_space<vmem>>, vector<1x1x32xf32>
    %19 = vector.shape_cast %18 : vector<1x1x32xf32> to vector<1x32xf32>
    %20 = vector.broadcast %19 : vector<1x32xf32> to vector<8x32xf32>
    %21 = arith.addf %17, %20 : vector<8x32xf32>
    %c4_i32_14 = arith.constant 4 : i32
    %22 = arith.muli %arg0, %c4_i32_14 : i32
    %c1_i32 = arith.constant 1 : i32
    %23 = arith.addi %22, %c1_i32 : i32
    %24 = arith.index_cast %23 : i32 to index
    %25 = memref.load %arg1[%24] : memref<24xf32, #tpu.memory_space<smem>>
    %26 = vector.broadcast %25 : f32 to vector<8x32xf32>
    %27 = arith.mulf %26, %21 : vector<8x32xf32>
    %28 = arith.addf %14, %27 : vector<8x32xf32>
    %c2 = arith.constant 2 : index
    %c0_15 = arith.constant 0 : index
    %c0_16 = arith.constant 0 : index
    %29 = vector.load %arg4[%c2, %c0_15, %c0_16] : memref<4x4x32xf32, #tpu.memory_space<vmem>>, vector<1x4x32xf32>
    %30 = vector.shape_cast %29 : vector<1x4x32xf32> to vector<4x32xf32>
    %cst_17 = arith.constant dense<0.000000e+00> : vector<8x32xf32>
    %31 = tpu.matmul %1, %30, %cst_17 {dimension_numbers = #tpu.dot_dimension_numbers<[1], [0], [0], [1], [0, 0, 1, 1], [], []>} : vector<8x4xf32>, vector<4x32xf32>, vector<8x32xf32> -> vector<8x32xf32>
    %c2_18 = arith.constant 2 : index
    %c0_19 = arith.constant 0 : index
    %c0_20 = arith.constant 0 : index
    %32 = vector.load %arg5[%c2_18, %c0_19, %c0_20] : memref<4x1x32xf32, #tpu.memory_space<vmem>>, vector<1x1x32xf32>
    %33 = vector.shape_cast %32 : vector<1x1x32xf32> to vector<1x32xf32>
    %34 = vector.broadcast %33 : vector<1x32xf32> to vector<8x32xf32>
    %35 = arith.addf %31, %34 : vector<8x32xf32>
    %c4_i32_21 = arith.constant 4 : i32
    %36 = arith.muli %arg0, %c4_i32_21 : i32
    %c2_i32 = arith.constant 2 : i32
    %37 = arith.addi %36, %c2_i32 : i32
    %38 = arith.index_cast %37 : i32 to index
    %39 = memref.load %arg1[%38] : memref<24xf32, #tpu.memory_space<smem>>
    %40 = vector.broadcast %39 : f32 to vector<8x32xf32>
    %41 = arith.mulf %40, %35 : vector<8x32xf32>
    %42 = arith.addf %28, %41 : vector<8x32xf32>
    %c3 = arith.constant 3 : index
    %c0_22 = arith.constant 0 : index
    %c0_23 = arith.constant 0 : index
    %43 = vector.load %arg4[%c3, %c0_22, %c0_23] : memref<4x4x32xf32, #tpu.memory_space<vmem>>, vector<1x4x32xf32>
    %44 = vector.shape_cast %43 : vector<1x4x32xf32> to vector<4x32xf32>
    %cst_24 = arith.constant dense<0.000000e+00> : vector<8x32xf32>
    %45 = tpu.matmul %1, %44, %cst_24 {dimension_numbers = #tpu.dot_dimension_numbers<[1], [0], [0], [1], [0, 0, 1, 1], [], []>} : vector<8x4xf32>, vector<4x32xf32>, vector<8x32xf32> -> vector<8x32xf32>
    %c3_25 = arith.constant 3 : index
    %c0_26 = arith.constant 0 : index
    %c0_27 = arith.constant 0 : index
    %46 = vector.load %arg5[%c3_25, %c0_26, %c0_27] : memref<4x1x32xf32, #tpu.memory_space<vmem>>, vector<1x1x32xf32>
    %47 = vector.shape_cast %46 : vector<1x1x32xf32> to vector<1x32xf32>
    %48 = vector.broadcast %47 : vector<1x32xf32> to vector<8x32xf32>
    %49 = arith.addf %45, %48 : vector<8x32xf32>
    %c4_i32_28 = arith.constant 4 : i32
    %50 = arith.muli %arg0, %c4_i32_28 : i32
    %c3_i32 = arith.constant 3 : i32
    %51 = arith.addi %50, %c3_i32 : i32
    %52 = arith.index_cast %51 : i32 to index
    %53 = memref.load %arg1[%52] : memref<24xf32, #tpu.memory_space<smem>>
    %54 = vector.broadcast %53 : f32 to vector<8x32xf32>
    %55 = arith.mulf %54, %49 : vector<8x32xf32>
    %56 = arith.addf %42, %55 : vector<8x32xf32>
    %c0_29 = arith.constant 0 : index
    %c0_30 = arith.constant 0 : index
    %57 = vector.load %arg18[%c0_29, %c0_30] : memref<9x32xf32, #tpu.memory_space<vmem>>, vector<8x32xf32>
    tpu.vector_store %arg18[%c0_29, %c0_30], %56 {strides = array<i32>} : memref<9x32xf32, #tpu.memory_space<vmem>>, vector<8x32xf32>,
    %58 = arith.index_cast %arg0 : i32 to index
    %c0_31 = arith.constant 0 : index
    %59 = vector.load %arg3[%58, %c0_31] : memref<2x32xf32, #tpu.memory_space<vmem>>, vector<1x32xf32>
    %c8 = arith.constant 8 : index
    %c0_32 = arith.constant 0 : index
    %60 = vector.load %arg18[%c8, %c0_32] : memref<9x32xf32, #tpu.memory_space<vmem>>, vector<1x32xf32>
    tpu.vector_store %arg18[%c8, %c0_32], %59 {strides = array<i32>} : memref<9x32xf32, #tpu.memory_space<vmem>>, vector<1x32xf32>,
    %c0_33 = arith.constant 0 : index
    %c0_34 = arith.constant 0 : index
    %61 = vector.load %arg18[%c0_33, %c0_34] : memref<9x32xf32, #tpu.memory_space<vmem>>, vector<9x32xf32>
    %c0_35 = arith.constant 0 : index
    %c0_36 = arith.constant 0 : index
    %c0_37 = arith.constant 0 : index
    %62 = vector.load %arg6[%c0_35, %c0_36, %c0_37] : memref<2x32x128xf32, #tpu.memory_space<vmem>>, vector<1x32x128xf32>
    %63 = vector.shape_cast %62 : vector<1x32x128xf32> to vector<32x128xf32>
    %cst_38 = arith.constant dense<0.000000e+00> : vector<9x128xf32>
    %64 = tpu.matmul %61, %63, %cst_38 {dimension_numbers = #tpu.dot_dimension_numbers<[1], [0], [0], [1], [0, 0, 1, 1], [], []>} : vector<9x32xf32>, vector<32x128xf32>, vector<9x128xf32> -> vector<9x128xf32>
    %65 = vector.extract_strided_slice %64 {offsets = [0, 0], sizes = [9, 8], strides = [1, 1]} : vector<9x128xf32> to vector<9x8xf32>
    %66 = vector.extract_strided_slice %64 {offsets = [0, 32], sizes = [9, 8], strides = [1, 1]} : vector<9x128xf32> to vector<9x8xf32>
    %67 = vector.extract_strided_slice %64 {offsets = [0, 64], sizes = [9, 8], strides = [1, 1]} : vector<9x128xf32> to vector<9x8xf32>
    %cst_39 = arith.constant dense<0.000000e+00> : vector<9x9xf32>
    %68 = tpu.matmul %65, %66, %cst_39 {dimension_numbers = #tpu.dot_dimension_numbers<[1], [1], [0], [0], [0, 0, 1, 0], [], []>} : vector<9x8xf32>, vector<9x8xf32>, vector<9x9xf32> -> vector<9x9xf32>
    %cst_40 = arith.constant 0.353553385 : f32
    %69 = vector.broadcast %cst_40 : f32 to vector<9x9xf32>
    %70 = arith.mulf %68, %69 : vector<9x9xf32>
    %cst_41 = arith.constant dense<0xFF800000> : vector<9xf32>
    %71 = vector.multi_reduction <maximumf>, %70, %cst_41 [1] : vector<9x9xf32> to vector<9xf32>
    %72 = vector.shape_cast %71 : vector<9xf32> to vector<9x1xf32>
    %73 = vector.broadcast %72 : vector<9x1xf32> to vector<9x9xf32>
    %74 = arith.subf %70, %73 : vector<9x9xf32>
    %75 = math.exp %74 : vector<9x9xf32>
    %cst_42 = arith.constant dense<0.000000e+00> : vector<9xf32>
    %76 = vector.multi_reduction <add>, %75, %cst_42 [1] : vector<9x9xf32> to vector<9xf32>
    %77 = vector.shape_cast %76 : vector<9xf32> to vector<9x1xf32>
    %78 = tpu.reciprocal %77 {approx = true} : vector<9x1xf32> -> vector<9x1xf32>
    %79 = vector.broadcast %78 : vector<9x1xf32> to vector<9x9xf32>
    %80 = arith.mulf %75, %79 : vector<9x9xf32>
    %cst_43 = arith.constant dense<0.000000e+00> : vector<9x8xf32>
    %81 = tpu.matmul %80, %67, %cst_43 {dimension_numbers = #tpu.dot_dimension_numbers<[1], [0], [0], [1], [0, 0, 1, 1], [], []>} : vector<9x9xf32>, vector<9x8xf32>, vector<9x8xf32> -> vector<9x8xf32>
    %82 = vector.extract_strided_slice %64 {offsets = [0, 8], sizes = [9, 8], strides = [1, 1]} : vector<9x128xf32> to vector<9x8xf32>
    %83 = vector.extract_strided_slice %64 {offsets = [0, 40], sizes = [9, 8], strides = [1, 1]} : vector<9x128xf32> to vector<9x8xf32>
    %84 = vector.extract_strided_slice %64 {offsets = [0, 72], sizes = [9, 8], strides = [1, 1]} : vector<9x128xf32> to vector<9x8xf32>
    %cst_44 = arith.constant dense<0.000000e+00> : vector<9x9xf32>
    %85 = tpu.matmul %82, %83, %cst_44 {dimension_numbers = #tpu.dot_dimension_numbers<[1], [1], [0], [0], [0, 0, 1, 0], [], []>} : vector<9x8xf32>, vector<9x8xf32>, vector<9x9xf32> -> vector<9x9xf32>
    %cst_45 = arith.constant 0.353553385 : f32
    %86 = vector.broadcast %cst_45 : f32 to vector<9x9xf32>
    %87 = arith.mulf %85, %86 : vector<9x9xf32>
    %cst_46 = arith.constant dense<0xFF800000> : vector<9xf32>
    %88 = vector.multi_reduction <maximumf>, %87, %cst_46 [1] : vector<9x9xf32> to vector<9xf32>
    %89 = vector.shape_cast %88 : vector<9xf32> to vector<9x1xf32>
    %90 = vector.broadcast %89 : vector<9x1xf32> to vector<9x9xf32>
    %91 = arith.subf %87, %90 : vector<9x9xf32>
    %92 = math.exp %91 : vector<9x9xf32>
    %cst_47 = arith.constant dense<0.000000e+00> : vector<9xf32>
    %93 = vector.multi_reduction <add>, %92, %cst_47 [1] : vector<9x9xf32> to vector<9xf32>
    %94 = vector.shape_cast %93 : vector<9xf32> to vector<9x1xf32>
    %95 = tpu.reciprocal %94 {approx = true} : vector<9x1xf32> -> vector<9x1xf32>
    %96 = vector.broadcast %95 : vector<9x1xf32> to vector<9x9xf32>
    %97 = arith.mulf %92, %96 : vector<9x9xf32>
    %cst_48 = arith.constant dense<0.000000e+00> : vector<9x8xf32>
    %98 = tpu.matmul %97, %84, %cst_48 {dimension_numbers = #tpu.dot_dimension_numbers<[1], [0], [0], [1], [0, 0, 1, 1], [], []>} : vector<9x9xf32>, vector<9x8xf32>, vector<9x8xf32> -> vector<9x8xf32>
    %99 = vector.extract_strided_slice %64 {offsets = [0, 16], sizes = [9, 8], strides = [1, 1]} : vector<9x128xf32> to vector<9x8xf32>
    %100 = vector.extract_strided_slice %64 {offsets = [0, 48], sizes = [9, 8], strides = [1, 1]} : vector<9x128xf32> to vector<9x8xf32>
    %101 = vector.extract_strided_slice %64 {offsets = [0, 80], sizes = [9, 8], strides = [1, 1]} : vector<9x128xf32> to vector<9x8xf32>
    %cst_49 = arith.constant dense<0.000000e+00> : vector<9x9xf32>
    %102 = tpu.matmul %99, %100, %cst_49 {dimension_numbers = #tpu.dot_dimension_numbers<[1], [1], [0], [0], [0, 0, 1, 0], [], []>} : vector<9x8xf32>, vector<9x8xf32>, vector<9x9xf32> -> vector<9x9xf32>
    %cst_50 = arith.constant 0.353553385 : f32
    %103 = vector.broadcast %cst_50 : f32 to vector<9x9xf32>
    %104 = arith.mulf %102, %103 : vector<9x9xf32>
    %cst_51 = arith.constant dense<0xFF800000> : vector<9xf32>
    %105 = vector.multi_reduction <maximumf>, %104, %cst_51 [1] : vector<9x9xf32> to vector<9xf32>
    %106 = vector.shape_cast %105 : vector<9xf32> to vector<9x1xf32>
    %107 = vector.broadcast %106 : vector<9x1xf32> to vector<9x9xf32>
    %108 = arith.subf %104, %107 : vector<9x9xf32>
    %109 = math.exp %108 : vector<9x9xf32>
    %cst_52 = arith.constant dense<0.000000e+00> : vector<9xf32>
    %110 = vector.multi_reduction <add>, %109, %cst_52 [1] : vector<9x9xf32> to vector<9xf32>
    %111 = vector.shape_cast %110 : vector<9xf32> to vector<9x1xf32>
    %112 = tpu.reciprocal %111 {approx = true} : vector<9x1xf32> -> vector<9x1xf32>
    %113 = vector.broadcast %112 : vector<9x1xf32> to vector<9x9xf32>
    %114 = arith.mulf %109, %113 : vector<9x9xf32>
    %cst_53 = arith.constant dense<0.000000e+00> : vector<9x8xf32>
    %115 = tpu.matmul %114, %101, %cst_53 {dimension_numbers = #tpu.dot_dimension_numbers<[1], [0], [0], [1], [0, 0, 1, 1], [], []>} : vector<9x9xf32>, vector<9x8xf32>, vector<9x8xf32> -> vector<9x8xf32>
    %116 = vector.extract_strided_slice %64 {offsets = [0, 24], sizes = [9, 8], strides = [1, 1]} : vector<9x128xf32> to vector<9x8xf32>
    %117 = vector.extract_strided_slice %64 {offsets = [0, 56], sizes = [9, 8], strides = [1, 1]} : vector<9x128xf32> to vector<9x8xf32>
    %118 = vector.extract_strided_slice %64 {offsets = [0, 88], sizes = [9, 8], strides = [1, 1]} : vector<9x128xf32> to vector<9x8xf32>
    %cst_54 = arith.constant dense<0.000000e+00> : vector<9x9xf32>
    %119 = tpu.matmul %116, %117, %cst_54 {dimension_numbers = #tpu.dot_dimension_numbers<[1], [1], [0], [0], [0, 0, 1, 0], [], []>} : vector<9x8xf32>, vector<9x8xf32>, vector<9x9xf32> -> vector<9x9xf32>
    %cst_55 = arith.constant 0.353553385 : f32
    %120 = vector.broadcast %cst_55 : f32 to vector<9x9xf32>
    %121 = arith.mulf %119, %120 : vector<9x9xf32>
    %cst_56 = arith.constant dense<0xFF800000> : vector<9xf32>
    %122 = vector.multi_reduction <maximumf>, %121, %cst_56 [1] : vector<9x9xf32> to vector<9xf32>
    %123 = vector.shape_cast %122 : vector<9xf32> to vector<9x1xf32>
    %124 = vector.broadcast %123 : vector<9x1xf32> to vector<9x9xf32>
    %125 = arith.subf %121, %124 : vector<9x9xf32>
    %126 = math.exp %125 : vector<9x9xf32>
    %cst_57 = arith.constant dense<0.000000e+00> : vector<9xf32>
    %127 = vector.multi_reduction <add>, %126, %cst_57 [1] : vector<9x9xf32> to vector<9xf32>
    %128 = vector.shape_cast %127 : vector<9xf32> to vector<9x1xf32>
    %129 = tpu.reciprocal %128 {approx = true} : vector<9x1xf32> -> vector<9x1xf32>
    %130 = vector.broadcast %129 : vector<9x1xf32> to vector<9x9xf32>
    %131 = arith.mulf %126, %130 : vector<9x9xf32>
    %cst_58 = arith.constant dense<0.000000e+00> : vector<9x8xf32>
    %132 = tpu.matmul %131, %118, %cst_58 {dimension_numbers = #tpu.dot_dimension_numbers<[1], [0], [0], [1], [0, 0, 1, 1], [], []>} : vector<9x9xf32>, vector<9x8xf32>, vector<9x8xf32> -> vector<9x8xf32>
    %133 = tpu.concatenate %81, %98, %115, %132 in 1 : vector<9x8xf32>, vector<9x8xf32>, vector<9x8xf32>, vector<9x8xf32> -> vector<9x32xf32>
    %134 = vector.extract_strided_slice %64 {offsets = [8, 96], sizes = [1, 32], strides = [1, 1]} : vector<9x128xf32> to vector<1x32xf32>
    %135 = tpu.iota {dimensions = array<i32: 0>} : vector<9x1xi32>
    %c8_i32 = arith.constant 8 : i32
    %136 = vector.broadcast %c8_i32 : i32 to vector<9x1xi32>
    %137 = arith.cmpi slt, %135, %136 : vector<9x1xi32>
    %138 = arith.extui %137 : vector<9x1xi1> to vector<9x1xi32>
    %139 = arith.sitofp %138 : vector<9x1xi32> to vector<9x1xf32>
    %140 = vector.broadcast %139 : vector<9x1xf32> to vector<9x32xf32>
    %141 = vector.broadcast %134 : vector<1x32xf32> to vector<9x32xf32>
    %142 = arith.mulf %140, %141 : vector<9x32xf32>
    %143 = arith.addf %133, %142 : vector<9x32xf32>
    %c0_59 = arith.constant 0 : index
    %c0_60 = arith.constant 0 : index
    %c0_61 = arith.constant 0 : index
    %144 = vector.load %arg7[%c0_59, %c0_60, %c0_61] : memref<2x32x32xf32, #tpu.memory_space<vmem>>, vector<1x32x32xf32>
    %145 = vector.shape_cast %144 : vector<1x32x32xf32> to vector<32x32xf32>
    %cst_62 = arith.constant dense<0.000000e+00> : vector<9x32xf32>
    %146 = tpu.matmul %143, %145, %cst_62 {dimension_numbers = #tpu.dot_dimension_numbers<[1], [0], [0], [1], [0, 0, 1, 1], [], []>} : vector<9x32xf32>, vector<32x32xf32>, vector<9x32xf32> -> vector<9x32xf32>
    %c0_63 = arith.constant 0 : index
    %c0_64 = arith.constant 0 : index
    %c0_65 = arith.constant 0 : index
    %147 = vector.load %arg8[%c0_63, %c0_64, %c0_65] : memref<2x1x32xf32, #tpu.memory_space<vmem>>, vector<1x1x32xf32>
    %148 = vector.shape_cast %147 : vector<1x1x32xf32> to vector<1x32xf32>
    %149 = vector.broadcast %148 : vector<1x32xf32> to vector<9x32xf32>
    %150 = arith.addf %146, %149 : vector<9x32xf32>
    %151 = arith.addf %61, %150 : vector<9x32xf32>
    %cst_66 = arith.constant dense<0.000000e+00> : vector<32xf32>
    %152 = vector.multi_reduction <add>, %151, %cst_66 [0] : vector<9x32xf32> to vector<32xf32>
    %153 = vector.shape_cast %152 : vector<32xf32> to vector<1x32xf32>
    %cst_67 = arith.constant 9.000000e+00 : f32
    %154 = vector.broadcast %cst_67 : f32 to vector<1x32xf32>
    %155 = arith.divf %153, %154 : vector<1x32xf32>
    %156 = vector.broadcast %155 : vector<1x32xf32> to vector<9x32xf32>
    %157 = arith.subf %151, %156 : vector<9x32xf32>
    %158 = arith.mulf %157, %157 : vector<9x32xf32>
    %cst_68 = arith.constant dense<0.000000e+00> : vector<32xf32>
    %159 = vector.multi_reduction <add>, %158, %cst_68 [0] : vector<9x32xf32> to vector<32xf32>
    %160 = vector.shape_cast %159 : vector<32xf32> to vector<1x32xf32>
    %cst_69 = arith.constant 9.000000e+00 : f32
    %161 = vector.broadcast %cst_69 : f32 to vector<1x32xf32>
    %162 = arith.divf %160, %161 : vector<1x32xf32>
    %163 = vector.broadcast %155 : vector<1x32xf32> to vector<9x32xf32>
    %164 = arith.subf %151, %163 : vector<9x32xf32>
    %cst_70 = arith.constant 9.99999974E-6 : f32
    %165 = vector.broadcast %cst_70 : f32 to vector<1x32xf32>
    %166 = arith.addf %162, %165 : vector<1x32xf32>
    %167 = math.rsqrt %166 : vector<1x32xf32>
    %168 = vector.broadcast %167 : vector<1x32xf32> to vector<9x32xf32>
    %169 = arith.mulf %164, %168 : vector<9x32xf32>
    %c0_71 = arith.constant 0 : index
    %c0_72 = arith.constant 0 : index
    %c0_73 = arith.constant 0 : index
    %170 = vector.load %arg9[%c0_71, %c0_72, %c0_73] : memref<2x1x32xf32, #tpu.memory_space<vmem>>, vector<1x1x32xf32>
    %171 = vector.shape_cast %170 : vector<1x1x32xf32> to vector<1x32xf32>
    %172 = vector.broadcast %171 : vector<1x32xf32> to vector<9x32xf32>
    %173 = arith.mulf %169, %172 : vector<9x32xf32>
    %c0_74 = arith.constant 0 : index
    %c0_75 = arith.constant 0 : index
    %c0_76 = arith.constant 0 : index
    %174 = vector.load %arg10[%c0_74, %c0_75, %c0_76] : memref<2x1x32xf32, #tpu.memory_space<vmem>>, vector<1x1x32xf32>
    %175 = vector.shape_cast %174 : vector<1x1x32xf32> to vector<1x32xf32>
    %176 = vector.broadcast %175 : vector<1x32xf32> to vector<9x32xf32>
    %177 = arith.addf %173, %176 : vector<9x32xf32>
    %c0_77 = arith.constant 0 : index
    %c0_78 = arith.constant 0 : index
    %c0_79 = arith.constant 0 : index
    %178 = vector.load %arg11[%c0_77, %c0_78, %c0_79] : memref<8x32x64xf32, #tpu.memory_space<vmem>>, vector<1x32x64xf32>
    %179 = vector.shape_cast %178 : vector<1x32x64xf32> to vector<32x64xf32>
    %cst_80 = arith.constant dense<0.000000e+00> : vector<9x64xf32>
    %180 = tpu.matmul %177, %179, %cst_80 {dimension_numbers = #tpu.dot_dimension_numbers<[1], [0], [0], [1], [0, 0, 1, 1], [], []>} : vector<9x32xf32>, vector<32x64xf32>, vector<9x64xf32> -> vector<9x64xf32>
    %c0_81 = arith.constant 0 : index
    %c0_82 = arith.constant 0 : index
    %c0_83 = arith.constant 0 : index
    %181 = vector.load %arg12[%c0_81, %c0_82, %c0_83] : memref<8x1x64xf32, #tpu.memory_space<vmem>>, vector<1x1x64xf32>
    %182 = vector.shape_cast %181 : vector<1x1x64xf32> to vector<1x64xf32>
    %183 = vector.broadcast %182 : vector<1x64xf32> to vector<9x64xf32>
    %184 = arith.addf %180, %183 : vector<9x64xf32>
    %cst_84 = arith.constant 0.000000e+00 : f32
    %185 = vector.broadcast %cst_84 : f32 to vector<9x64xf32>
    %186 = arith.maximumf %184, %185 : vector<9x64xf32>
    %c0_85 = arith.constant 0 : index
    %c0_86 = arith.constant 0 : index
    %c0_87 = arith.constant 0 : index
    %187 = vector.load %arg13[%c0_85, %c0_86, %c0_87] : memref<8x64x32xf32, #tpu.memory_space<vmem>>, vector<1x64x32xf32>
    %188 = vector.shape_cast %187 : vector<1x64x32xf32> to vector<64x32xf32>
    %cst_88 = arith.constant dense<0.000000e+00> : vector<9x32xf32>
    %189 = tpu.matmul %186, %188, %cst_88 {dimension_numbers = #tpu.dot_dimension_numbers<[1], [0], [0], [1], [0, 0, 1, 1], [], []>} : vector<9x64xf32>, vector<64x32xf32>, vector<9x32xf32> -> vector<9x32xf32>
    %c0_89 = arith.constant 0 : index
    %c0_90 = arith.constant 0 : index
    %c0_91 = arith.constant 0 : index
    %190 = vector.load %arg14[%c0_89, %c0_90, %c0_91] : memref<8x1x32xf32, #tpu.memory_space<vmem>>, vector<1x1x32xf32>
    %191 = vector.shape_cast %190 : vector<1x1x32xf32> to vector<1x32xf32>
    %192 = vector.broadcast %191 : vector<1x32xf32> to vector<9x32xf32>
    %193 = arith.addf %189, %192 : vector<9x32xf32>
    %c4_i32_92 = arith.constant 4 : i32
    %194 = arith.muli %arg0, %c4_i32_92 : i32
    %c8_i32_93 = arith.constant 8 : i32
    %195 = arith.addi %c8_i32_93, %194 : i32
    %c0_i32_94 = arith.constant 0 : i32
    %196 = arith.addi %195, %c0_i32_94 : i32
    %197 = arith.index_cast %196 : i32 to index
    %198 = memref.load %arg1[%197] : memref<24xf32, #tpu.memory_space<smem>>
    %199 = vector.broadcast %198 : f32 to vector<9x32xf32>
    %200 = arith.mulf %199, %193 : vector<9x32xf32>
    %c1_95 = arith.constant 1 : index
    %c0_96 = arith.constant 0 : index
    %c0_97 = arith.constant 0 : index
    %201 = vector.load %arg11[%c1_95, %c0_96, %c0_97] : memref<8x32x64xf32, #tpu.memory_space<vmem>>, vector<1x32x64xf32>
    %202 = vector.shape_cast %201 : vector<1x32x64xf32> to vector<32x64xf32>
    %cst_98 = arith.constant dense<0.000000e+00> : vector<9x64xf32>
    %203 = tpu.matmul %177, %202, %cst_98 {dimension_numbers = #tpu.dot_dimension_numbers<[1], [0], [0], [1], [0, 0, 1, 1], [], []>} : vector<9x32xf32>, vector<32x64xf32>, vector<9x64xf32> -> vector<9x64xf32>
    %c1_99 = arith.constant 1 : index
    %c0_100 = arith.constant 0 : index
    %c0_101 = arith.constant 0 : index
    %204 = vector.load %arg12[%c1_99, %c0_100, %c0_101] : memref<8x1x64xf32, #tpu.memory_space<vmem>>, vector<1x1x64xf32>
    %205 = vector.shape_cast %204 : vector<1x1x64xf32> to vector<1x64xf32>
    %206 = vector.broadcast %205 : vector<1x64xf32> to vector<9x64xf32>
    %207 = arith.addf %203, %206 : vector<9x64xf32>
    %cst_102 = arith.constant 0.000000e+00 : f32
    %208 = vector.broadcast %cst_102 : f32 to vector<9x64xf32>
    %209 = arith.maximumf %207, %208 : vector<9x64xf32>
    %c1_103 = arith.constant 1 : index
    %c0_104 = arith.constant 0 : index
    %c0_105 = arith.constant 0 : index
    %210 = vector.load %arg13[%c1_103, %c0_104, %c0_105] : memref<8x64x32xf32, #tpu.memory_space<vmem>>, vector<1x64x32xf32>
    %211 = vector.shape_cast %210 : vector<1x64x32xf32> to vector<64x32xf32>
    %cst_106 = arith.constant dense<0.000000e+00> : vector<9x32xf32>
    %212 = tpu.matmul %209, %211, %cst_106 {dimension_numbers = #tpu.dot_dimension_numbers<[1], [0], [0], [1], [0, 0, 1, 1], [], []>} : vector<9x64xf32>, vector<64x32xf32>, vector<9x32xf32> -> vector<9x32xf32>
    %c1_107 = arith.constant 1 : index
    %c0_108 = arith.constant 0 : index
    %c0_109 = arith.constant 0 : index
    %213 = vector.load %arg14[%c1_107, %c0_108, %c0_109] : memref<8x1x32xf32, #tpu.memory_space<vmem>>, vector<1x1x32xf32>
    %214 = vector.shape_cast %213 : vector<1x1x32xf32> to vector<1x32xf32>
    %215 = vector.broadcast %214 : vector<1x32xf32> to vector<9x32xf32>
    %216 = arith.addf %212, %215 : vector<9x32xf32>
    %c4_i32_110 = arith.constant 4 : i32
    %217 = arith.muli %arg0, %c4_i32_110 : i32
    %c8_i32_111 = arith.constant 8 : i32
    %218 = arith.addi %c8_i32_111, %217 : i32
    %c1_i32_112 = arith.constant 1 : i32
    %219 = arith.addi %218, %c1_i32_112 : i32
    %220 = arith.index_cast %219 : i32 to index
    %221 = memref.load %arg1[%220] : memref<24xf32, #tpu.memory_space<smem>>
    %222 = vector.broadcast %221 : f32 to vector<9x32xf32>
    %223 = arith.mulf %222, %216 : vector<9x32xf32>
    %224 = arith.addf %200, %223 : vector<9x32xf32>
    %c2_113 = arith.constant 2 : index
    %c0_114 = arith.constant 0 : index
    %c0_115 = arith.constant 0 : index
    %225 = vector.load %arg11[%c2_113, %c0_114, %c0_115] : memref<8x32x64xf32, #tpu.memory_space<vmem>>, vector<1x32x64xf32>
    %226 = vector.shape_cast %225 : vector<1x32x64xf32> to vector<32x64xf32>
    %cst_116 = arith.constant dense<0.000000e+00> : vector<9x64xf32>
    %227 = tpu.matmul %177, %226, %cst_116 {dimension_numbers = #tpu.dot_dimension_numbers<[1], [0], [0], [1], [0, 0, 1, 1], [], []>} : vector<9x32xf32>, vector<32x64xf32>, vector<9x64xf32> -> vector<9x64xf32>
    %c2_117 = arith.constant 2 : index
    %c0_118 = arith.constant 0 : index
    %c0_119 = arith.constant 0 : index
    %228 = vector.load %arg12[%c2_117, %c0_118, %c0_119] : memref<8x1x64xf32, #tpu.memory_space<vmem>>, vector<1x1x64xf32>
    %229 = vector.shape_cast %228 : vector<1x1x64xf32> to vector<1x64xf32>
    %230 = vector.broadcast %229 : vector<1x64xf32> to vector<9x64xf32>
    %231 = arith.addf %227, %230 : vector<9x64xf32>
    %cst_120 = arith.constant 0.000000e+00 : f32
    %232 = vector.broadcast %cst_120 : f32 to vector<9x64xf32>
    %233 = arith.maximumf %231, %232 : vector<9x64xf32>
    %c2_121 = arith.constant 2 : index
    %c0_122 = arith.constant 0 : index
    %c0_123 = arith.constant 0 : index
    %234 = vector.load %arg13[%c2_121, %c0_122, %c0_123] : memref<8x64x32xf32, #tpu.memory_space<vmem>>, vector<1x64x32xf32>
    %235 = vector.shape_cast %234 : vector<1x64x32xf32> to vector<64x32xf32>
    %cst_124 = arith.constant dense<0.000000e+00> : vector<9x32xf32>
    %236 = tpu.matmul %233, %235, %cst_124 {dimension_numbers = #tpu.dot_dimension_numbers<[1], [0], [0], [1], [0, 0, 1, 1], [], []>} : vector<9x64xf32>, vector<64x32xf32>, vector<9x32xf32> -> vector<9x32xf32>
    %c2_125 = arith.constant 2 : index
    %c0_126 = arith.constant 0 : index
    %c0_127 = arith.constant 0 : index
    %237 = vector.load %arg14[%c2_125, %c0_126, %c0_127] : memref<8x1x32xf32, #tpu.memory_space<vmem>>, vector<1x1x32xf32>
    %238 = vector.shape_cast %237 : vector<1x1x32xf32> to vector<1x32xf32>
    %239 = vector.broadcast %238 : vector<1x32xf32> to vector<9x32xf32>
    %240 = arith.addf %236, %239 : vector<9x32xf32>
    %c4_i32_128 = arith.constant 4 : i32
    %241 = arith.muli %arg0, %c4_i32_128 : i32
    %c8_i32_129 = arith.constant 8 : i32
    %242 = arith.addi %c8_i32_129, %241 : i32
    %c2_i32_130 = arith.constant 2 : i32
    %243 = arith.addi %242, %c2_i32_130 : i32
    %244 = arith.index_cast %243 : i32 to index
    %245 = memref.load %arg1[%244] : memref<24xf32, #tpu.memory_space<smem>>
    %246 = vector.broadcast %245 : f32 to vector<9x32xf32>
    %247 = arith.mulf %246, %240 : vector<9x32xf32>
    %248 = arith.addf %224, %247 : vector<9x32xf32>
    %c3_131 = arith.constant 3 : index
    %c0_132 = arith.constant 0 : index
    %c0_133 = arith.constant 0 : index
    %249 = vector.load %arg11[%c3_131, %c0_132, %c0_133] : memref<8x32x64xf32, #tpu.memory_space<vmem>>, vector<1x32x64xf32>
    %250 = vector.shape_cast %249 : vector<1x32x64xf32> to vector<32x64xf32>
    %cst_134 = arith.constant dense<0.000000e+00> : vector<9x64xf32>
    %251 = tpu.matmul %177, %250, %cst_134 {dimension_numbers = #tpu.dot_dimension_numbers<[1], [0], [0], [1], [0, 0, 1, 1], [], []>} : vector<9x32xf32>, vector<32x64xf32>, vector<9x64xf32> -> vector<9x64xf32>
    %c3_135 = arith.constant 3 : index
    %c0_136 = arith.constant 0 : index
    %c0_137 = arith.constant 0 : index
    %252 = vector.load %arg12[%c3_135, %c0_136, %c0_137] : memref<8x1x64xf32, #tpu.memory_space<vmem>>, vector<1x1x64xf32>
    %253 = vector.shape_cast %252 : vector<1x1x64xf32> to vector<1x64xf32>
    %254 = vector.broadcast %253 : vector<1x64xf32> to vector<9x64xf32>
    %255 = arith.addf %251, %254 : vector<9x64xf32>
    %cst_138 = arith.constant 0.000000e+00 : f32
    %256 = vector.broadcast %cst_138 : f32 to vector<9x64xf32>
    %257 = arith.maximumf %255, %256 : vector<9x64xf32>
    %c3_139 = arith.constant 3 : index
    %c0_140 = arith.constant 0 : index
    %c0_141 = arith.constant 0 : index
    %258 = vector.load %arg13[%c3_139, %c0_140, %c0_141] : memref<8x64x32xf32, #tpu.memory_space<vmem>>, vector<1x64x32xf32>
    %259 = vector.shape_cast %258 : vector<1x64x32xf32> to vector<64x32xf32>
    %cst_142 = arith.constant dense<0.000000e+00> : vector<9x32xf32>
    %260 = tpu.matmul %257, %259, %cst_142 {dimension_numbers = #tpu.dot_dimension_numbers<[1], [0], [0], [1], [0, 0, 1, 1], [], []>} : vector<9x64xf32>, vector<64x32xf32>, vector<9x32xf32> -> vector<9x32xf32>
    %c3_143 = arith.constant 3 : index
    %c0_144 = arith.constant 0 : index
    %c0_145 = arith.constant 0 : index
    %261 = vector.load %arg14[%c3_143, %c0_144, %c0_145] : memref<8x1x32xf32, #tpu.memory_space<vmem>>, vector<1x1x32xf32>
    %262 = vector.shape_cast %261 : vector<1x1x32xf32> to vector<1x32xf32>
    %263 = vector.broadcast %262 : vector<1x32xf32> to vector<9x32xf32>
    %264 = arith.addf %260, %263 : vector<9x32xf32>
    %c4_i32_146 = arith.constant 4 : i32
    %265 = arith.muli %arg0, %c4_i32_146 : i32
    %c8_i32_147 = arith.constant 8 : i32
    %266 = arith.addi %c8_i32_147, %265 : i32
    %c3_i32_148 = arith.constant 3 : i32
    %267 = arith.addi %266, %c3_i32_148 : i32
    %268 = arith.index_cast %267 : i32 to index
    %269 = memref.load %arg1[%268] : memref<24xf32, #tpu.memory_space<smem>>
    %270 = vector.broadcast %269 : f32 to vector<9x32xf32>
    %271 = arith.mulf %270, %264 : vector<9x32xf32>
    %272 = arith.addf %248, %271 : vector<9x32xf32>
    %273 = arith.addf %177, %272 : vector<9x32xf32>
    %cst_149 = arith.constant dense<0.000000e+00> : vector<32xf32>
    %274 = vector.multi_reduction <add>, %273, %cst_149 [0] : vector<9x32xf32> to vector<32xf32>
    %275 = vector.shape_cast %274 : vector<32xf32> to vector<1x32xf32>
    %cst_150 = arith.constant 9.000000e+00 : f32
    %276 = vector.broadcast %cst_150 : f32 to vector<1x32xf32>
    %277 = arith.divf %275, %276 : vector<1x32xf32>
    %278 = vector.broadcast %277 : vector<1x32xf32> to vector<9x32xf32>
    %279 = arith.subf %273, %278 : vector<9x32xf32>
    %280 = arith.mulf %279, %279 : vector<9x32xf32>
    %cst_151 = arith.constant dense<0.000000e+00> : vector<32xf32>
    %281 = vector.multi_reduction <add>, %280, %cst_151 [0] : vector<9x32xf32> to vector<32xf32>
    %282 = vector.shape_cast %281 : vector<32xf32> to vector<1x32xf32>
    %cst_152 = arith.constant 9.000000e+00 : f32
    %283 = vector.broadcast %cst_152 : f32 to vector<1x32xf32>
    %284 = arith.divf %282, %283 : vector<1x32xf32>
    %285 = vector.broadcast %277 : vector<1x32xf32> to vector<9x32xf32>
    %286 = arith.subf %273, %285 : vector<9x32xf32>
    %cst_153 = arith.constant 9.99999974E-6 : f32
    %287 = vector.broadcast %cst_153 : f32 to vector<1x32xf32>
    %288 = arith.addf %284, %287 : vector<1x32xf32>
    %289 = math.rsqrt %288 : vector<1x32xf32>
    %290 = vector.broadcast %289 : vector<1x32xf32> to vector<9x32xf32>
    %291 = arith.mulf %286, %290 : vector<9x32xf32>
    %c0_154 = arith.constant 0 : index
    %c0_155 = arith.constant 0 : index
    %c0_156 = arith.constant 0 : index
    %292 = vector.load %arg15[%c0_154, %c0_155, %c0_156] : memref<2x1x32xf32, #tpu.memory_space<vmem>>, vector<1x1x32xf32>
    %293 = vector.shape_cast %292 : vector<1x1x32xf32> to vector<1x32xf32>
    %294 = vector.broadcast %293 : vector<1x32xf32> to vector<9x32xf32>
    %295 = arith.mulf %291, %294 : vector<9x32xf32>
    %c0_157 = arith.constant 0 : index
    %c0_158 = arith.constant 0 : index
    %c0_159 = arith.constant 0 : index
    %296 = vector.load %arg16[%c0_157, %c0_158, %c0_159] : memref<2x1x32xf32, #tpu.memory_space<vmem>>, vector<1x1x32xf32>
    %297 = vector.shape_cast %296 : vector<1x1x32xf32> to vector<1x32xf32>
    %298 = vector.broadcast %297 : vector<1x32xf32> to vector<9x32xf32>
    %299 = arith.addf %295, %298 : vector<9x32xf32>
    %c1_160 = arith.constant 1 : index
    %c0_161 = arith.constant 0 : index
    %c0_162 = arith.constant 0 : index
    %300 = vector.load %arg6[%c1_160, %c0_161, %c0_162] : memref<2x32x128xf32, #tpu.memory_space<vmem>>, vector<1x32x128xf32>
    %301 = vector.shape_cast %300 : vector<1x32x128xf32> to vector<32x128xf32>
    %cst_163 = arith.constant dense<0.000000e+00> : vector<9x128xf32>
    %302 = tpu.matmul %299, %301, %cst_163 {dimension_numbers = #tpu.dot_dimension_numbers<[1], [0], [0], [1], [0, 0, 1, 1], [], []>} : vector<9x32xf32>, vector<32x128xf32>, vector<9x128xf32> -> vector<9x128xf32>
    %303 = vector.extract_strided_slice %302 {offsets = [0, 0], sizes = [9, 8], strides = [1, 1]} : vector<9x128xf32> to vector<9x8xf32>
    %304 = vector.extract_strided_slice %302 {offsets = [0, 32], sizes = [9, 8], strides = [1, 1]} : vector<9x128xf32> to vector<9x8xf32>
    %305 = vector.extract_strided_slice %302 {offsets = [0, 64], sizes = [9, 8], strides = [1, 1]} : vector<9x128xf32> to vector<9x8xf32>
    %cst_164 = arith.constant dense<0.000000e+00> : vector<9x9xf32>
    %306 = tpu.matmul %303, %304, %cst_164 {dimension_numbers = #tpu.dot_dimension_numbers<[1], [1], [0], [0], [0, 0, 1, 0], [], []>} : vector<9x8xf32>, vector<9x8xf32>, vector<9x9xf32> -> vector<9x9xf32>
    %cst_165 = arith.constant 0.353553385 : f32
    %307 = vector.broadcast %cst_165 : f32 to vector<9x9xf32>
    %308 = arith.mulf %306, %307 : vector<9x9xf32>
    %cst_166 = arith.constant dense<0xFF800000> : vector<9xf32>
    %309 = vector.multi_reduction <maximumf>, %308, %cst_166 [1] : vector<9x9xf32> to vector<9xf32>
    %310 = vector.shape_cast %309 : vector<9xf32> to vector<9x1xf32>
    %311 = vector.broadcast %310 : vector<9x1xf32> to vector<9x9xf32>
    %312 = arith.subf %308, %311 : vector<9x9xf32>
    %313 = math.exp %312 : vector<9x9xf32>
    %cst_167 = arith.constant dense<0.000000e+00> : vector<9xf32>
    %314 = vector.multi_reduction <add>, %313, %cst_167 [1] : vector<9x9xf32> to vector<9xf32>
    %315 = vector.shape_cast %314 : vector<9xf32> to vector<9x1xf32>
    %316 = tpu.reciprocal %315 {approx = true} : vector<9x1xf32> -> vector<9x1xf32>
    %317 = vector.broadcast %316 : vector<9x1xf32> to vector<9x9xf32>
    %318 = arith.mulf %313, %317 : vector<9x9xf32>
    %cst_168 = arith.constant dense<0.000000e+00> : vector<9x8xf32>
    %319 = tpu.matmul %318, %305, %cst_168 {dimension_numbers = #tpu.dot_dimension_numbers<[1], [0], [0], [1], [0, 0, 1, 1], [], []>} : vector<9x9xf32>, vector<9x8xf32>, vector<9x8xf32> -> vector<9x8xf32>
    %320 = vector.extract_strided_slice %302 {offsets = [0, 8], sizes = [9, 8], strides = [1, 1]} : vector<9x128xf32> to vector<9x8xf32>
    %321 = vector.extract_strided_slice %302 {offsets = [0, 40], sizes = [9, 8], strides = [1, 1]} : vector<9x128xf32> to vector<9x8xf32>
    %322 = vector.extract_strided_slice %302 {offsets = [0, 72], sizes = [9, 8], strides = [1, 1]} : vector<9x128xf32> to vector<9x8xf32>
    %cst_169 = arith.constant dense<0.000000e+00> : vector<9x9xf32>
    %323 = tpu.matmul %320, %321, %cst_169 {dimension_numbers = #tpu.dot_dimension_numbers<[1], [1], [0], [0], [0, 0, 1, 0], [], []>} : vector<9x8xf32>, vector<9x8xf32>, vector<9x9xf32> -> vector<9x9xf32>
    %cst_170 = arith.constant 0.353553385 : f32
    %324 = vector.broadcast %cst_170 : f32 to vector<9x9xf32>
    %325 = arith.mulf %323, %324 : vector<9x9xf32>
    %cst_171 = arith.constant dense<0xFF800000> : vector<9xf32>
    %326 = vector.multi_reduction <maximumf>, %325, %cst_171 [1] : vector<9x9xf32> to vector<9xf32>
    %327 = vector.shape_cast %326 : vector<9xf32> to vector<9x1xf32>
    %328 = vector.broadcast %327 : vector<9x1xf32> to vector<9x9xf32>
    %329 = arith.subf %325, %328 : vector<9x9xf32>
    %330 = math.exp %329 : vector<9x9xf32>
    %cst_172 = arith.constant dense<0.000000e+00> : vector<9xf32>
    %331 = vector.multi_reduction <add>, %330, %cst_172 [1] : vector<9x9xf32> to vector<9xf32>
    %332 = vector.shape_cast %331 : vector<9xf32> to vector<9x1xf32>
    %333 = tpu.reciprocal %332 {approx = true} : vector<9x1xf32> -> vector<9x1xf32>
    %334 = vector.broadcast %333 : vector<9x1xf32> to vector<9x9xf32>
    %335 = arith.mulf %330, %334 : vector<9x9xf32>
    %cst_173 = arith.constant dense<0.000000e+00> : vector<9x8xf32>
    %336 = tpu.matmul %335, %322, %cst_173 {dimension_numbers = #tpu.dot_dimension_numbers<[1], [0], [0], [1], [0, 0, 1, 1], [], []>} : vector<9x9xf32>, vector<9x8xf32>, vector<9x8xf32> -> vector<9x8xf32>
    %337 = vector.extract_strided_slice %302 {offsets = [0, 16], sizes = [9, 8], strides = [1, 1]} : vector<9x128xf32> to vector<9x8xf32>
    %338 = vector.extract_strided_slice %302 {offsets = [0, 48], sizes = [9, 8], strides = [1, 1]} : vector<9x128xf32> to vector<9x8xf32>
    %339 = vector.extract_strided_slice %302 {offsets = [0, 80], sizes = [9, 8], strides = [1, 1]} : vector<9x128xf32> to vector<9x8xf32>
    %cst_174 = arith.constant dense<0.000000e+00> : vector<9x9xf32>
    %340 = tpu.matmul %337, %338, %cst_174 {dimension_numbers = #tpu.dot_dimension_numbers<[1], [1], [0], [0], [0, 0, 1, 0], [], []>} : vector<9x8xf32>, vector<9x8xf32>, vector<9x9xf32> -> vector<9x9xf32>
    %cst_175 = arith.constant 0.353553385 : f32
    %341 = vector.broadcast %cst_175 : f32 to vector<9x9xf32>
    %342 = arith.mulf %340, %341 : vector<9x9xf32>
    %cst_176 = arith.constant dense<0xFF800000> : vector<9xf32>
    %343 = vector.multi_reduction <maximumf>, %342, %cst_176 [1] : vector<9x9xf32> to vector<9xf32>
    %344 = vector.shape_cast %343 : vector<9xf32> to vector<9x1xf32>
    %345 = vector.broadcast %344 : vector<9x1xf32> to vector<9x9xf32>
    %346 = arith.subf %342, %345 : vector<9x9xf32>
    %347 = math.exp %346 : vector<9x9xf32>
    %cst_177 = arith.constant dense<0.000000e+00> : vector<9xf32>
    %348 = vector.multi_reduction <add>, %347, %cst_177 [1] : vector<9x9xf32> to vector<9xf32>
    %349 = vector.shape_cast %348 : vector<9xf32> to vector<9x1xf32>
    %350 = tpu.reciprocal %349 {approx = true} : vector<9x1xf32> -> vector<9x1xf32>
    %351 = vector.broadcast %350 : vector<9x1xf32> to vector<9x9xf32>
    %352 = arith.mulf %347, %351 : vector<9x9xf32>
    %cst_178 = arith.constant dense<0.000000e+00> : vector<9x8xf32>
    %353 = tpu.matmul %352, %339, %cst_178 {dimension_numbers = #tpu.dot_dimension_numbers<[1], [0], [0], [1], [0, 0, 1, 1], [], []>} : vector<9x9xf32>, vector<9x8xf32>, vector<9x8xf32> -> vector<9x8xf32>
    %354 = vector.extract_strided_slice %302 {offsets = [0, 24], sizes = [9, 8], strides = [1, 1]} : vector<9x128xf32> to vector<9x8xf32>
    %355 = vector.extract_strided_slice %302 {offsets = [0, 56], sizes = [9, 8], strides = [1, 1]} : vector<9x128xf32> to vector<9x8xf32>
    %356 = vector.extract_strided_slice %302 {offsets = [0, 88], sizes = [9, 8], strides = [1, 1]} : vector<9x128xf32> to vector<9x8xf32>
    %cst_179 = arith.constant dense<0.000000e+00> : vector<9x9xf32>
    %357 = tpu.matmul %354, %355, %cst_179 {dimension_numbers = #tpu.dot_dimension_numbers<[1], [1], [0], [0], [0, 0, 1, 0], [], []>} : vector<9x8xf32>, vector<9x8xf32>, vector<9x9xf32> -> vector<9x9xf32>
    %cst_180 = arith.constant 0.353553385 : f32
    %358 = vector.broadcast %cst_180 : f32 to vector<9x9xf32>
    %359 = arith.mulf %357, %358 : vector<9x9xf32>
    %cst_181 = arith.constant dense<0xFF800000> : vector<9xf32>
    %360 = vector.multi_reduction <maximumf>, %359, %cst_181 [1] : vector<9x9xf32> to vector<9xf32>
    %361 = vector.shape_cast %360 : vector<9xf32> to vector<9x1xf32>
    %362 = vector.broadcast %361 : vector<9x1xf32> to vector<9x9xf32>
    %363 = arith.subf %359, %362 : vector<9x9xf32>
    %364 = math.exp %363 : vector<9x9xf32>
    %cst_182 = arith.constant dense<0.000000e+00> : vector<9xf32>
    %365 = vector.multi_reduction <add>, %364, %cst_182 [1] : vector<9x9xf32> to vector<9xf32>
    %366 = vector.shape_cast %365 : vector<9xf32> to vector<9x1xf32>
    %367 = tpu.reciprocal %366 {approx = true} : vector<9x1xf32> -> vector<9x1xf32>
    %368 = vector.broadcast %367 : vector<9x1xf32> to vector<9x9xf32>
    %369 = arith.mulf %364, %368 : vector<9x9xf32>
    %cst_183 = arith.constant dense<0.000000e+00> : vector<9x8xf32>
    %370 = tpu.matmul %369, %356, %cst_183 {dimension_numbers = #tpu.dot_dimension_numbers<[1], [0], [0], [1], [0, 0, 1, 1], [], []>} : vector<9x9xf32>, vector<9x8xf32>, vector<9x8xf32> -> vector<9x8xf32>
    %371 = tpu.concatenate %319, %336, %353, %370 in 1 : vector<9x8xf32>, vector<9x8xf32>, vector<9x8xf32>, vector<9x8xf32> -> vector<9x32xf32>
    %372 = vector.extract_strided_slice %302 {offsets = [8, 96], sizes = [1, 32], strides = [1, 1]} : vector<9x128xf32> to vector<1x32xf32>
    %373 = tpu.iota {dimensions = array<i32: 0>} : vector<9x1xi32>
    %c8_i32_184 = arith.constant 8 : i32
    %374 = vector.broadcast %c8_i32_184 : i32 to vector<9x1xi32>
    %375 = arith.cmpi slt, %373, %374 : vector<9x1xi32>
    %376 = arith.extui %375 : vector<9x1xi1> to vector<9x1xi32>
    %377 = arith.sitofp %376 : vector<9x1xi32> to vector<9x1xf32>
    %378 = vector.broadcast %377 : vector<9x1xf32> to vector<9x32xf32>
    %379 = vector.broadcast %372 : vector<1x32xf32> to vector<9x32xf32>
    %380 = arith.mulf %378, %379 : vector<9x32xf32>
    %381 = arith.addf %371, %380 : vector<9x32xf32>
    %c1_185 = arith.constant 1 : index
    %c0_186 = arith.constant 0 : index
    %c0_187 = arith.constant 0 : index
    %382 = vector.load %arg7[%c1_185, %c0_186, %c0_187] : memref<2x32x32xf32, #tpu.memory_space<vmem>>, vector<1x32x32xf32>
    %383 = vector.shape_cast %382 : vector<1x32x32xf32> to vector<32x32xf32>
    %cst_188 = arith.constant dense<0.000000e+00> : vector<9x32xf32>
    %384 = tpu.matmul %381, %383, %cst_188 {dimension_numbers = #tpu.dot_dimension_numbers<[1], [0], [0], [1], [0, 0, 1, 1], [], []>} : vector<9x32xf32>, vector<32x32xf32>, vector<9x32xf32> -> vector<9x32xf32>
    %c1_189 = arith.constant 1 : index
    %c0_190 = arith.constant 0 : index
    %c0_191 = arith.constant 0 : index
    %385 = vector.load %arg8[%c1_189, %c0_190, %c0_191] : memref<2x1x32xf32, #tpu.memory_space<vmem>>, vector<1x1x32xf32>
    %386 = vector.shape_cast %385 : vector<1x1x32xf32> to vector<1x32xf32>
    %387 = vector.broadcast %386 : vector<1x32xf32> to vector<9x32xf32>
    %388 = arith.addf %384, %387 : vector<9x32xf32>
    %389 = arith.addf %299, %388 : vector<9x32xf32>
    %cst_192 = arith.constant dense<0.000000e+00> : vector<32xf32>
    %390 = vector.multi_reduction <add>, %389, %cst_192 [0] : vector<9x32xf32> to vector<32xf32>
    %391 = vector.shape_cast %390 : vector<32xf32> to vector<1x32xf32>
    %cst_193 = arith.constant 9.000000e+00 : f32
    %392 = vector.broadcast %cst_193 : f32 to vector<1x32xf32>
    %393 = arith.divf %391, %392 : vector<1x32xf32>
    %394 = vector.broadcast %393 : vector<1x32xf32> to vector<9x32xf32>
    %395 = arith.subf %389, %394 : vector<9x32xf32>
    %396 = arith.mulf %395, %395 : vector<9x32xf32>
    %cst_194 = arith.constant dense<0.000000e+00> : vector<32xf32>
    %397 = vector.multi_reduction <add>, %396, %cst_194 [0] : vector<9x32xf32> to vector<32xf32>
    %398 = vector.shape_cast %397 : vector<32xf32> to vector<1x32xf32>
    %cst_195 = arith.constant 9.000000e+00 : f32
    %399 = vector.broadcast %cst_195 : f32 to vector<1x32xf32>
    %400 = arith.divf %398, %399 : vector<1x32xf32>
    %401 = vector.broadcast %393 : vector<1x32xf32> to vector<9x32xf32>
    %402 = arith.subf %389, %401 : vector<9x32xf32>
    %cst_196 = arith.constant 9.99999974E-6 : f32
    %403 = vector.broadcast %cst_196 : f32 to vector<1x32xf32>
    %404 = arith.addf %400, %403 : vector<1x32xf32>
    %405 = math.rsqrt %404 : vector<1x32xf32>
    %406 = vector.broadcast %405 : vector<1x32xf32> to vector<9x32xf32>
    %407 = arith.mulf %402, %406 : vector<9x32xf32>
    %c1_197 = arith.constant 1 : index
    %c0_198 = arith.constant 0 : index
    %c0_199 = arith.constant 0 : index
    %408 = vector.load %arg9[%c1_197, %c0_198, %c0_199] : memref<2x1x32xf32, #tpu.memory_space<vmem>>, vector<1x1x32xf32>
    %409 = vector.shape_cast %408 : vector<1x1x32xf32> to vector<1x32xf32>
    %410 = vector.broadcast %409 : vector<1x32xf32> to vector<9x32xf32>
    %411 = arith.mulf %407, %410 : vector<9x32xf32>
    %c1_200 = arith.constant 1 : index
    %c0_201 = arith.constant 0 : index
    %c0_202 = arith.constant 0 : index
    %412 = vector.load %arg10[%c1_200, %c0_201, %c0_202] : memref<2x1x32xf32, #tpu.memory_space<vmem>>, vector<1x1x32xf32>
    %413 = vector.shape_cast %412 : vector<1x1x32xf32> to vector<1x32xf32>
    %414 = vector.broadcast %413 : vector<1x32xf32> to vector<9x32xf32>
    %415 = arith.addf %411, %414 : vector<9x32xf32>
    %c4 = arith.constant 4 : index
    %c0_203 = arith.constant 0 : index
    %c0_204 = arith.constant 0 : index
    %416 = vector.load %arg11[%c4, %c0_203, %c0_204] : memref<8x32x64xf32, #tpu.memory_space<vmem>>, vector<1x32x64xf32>
    %417 = vector.shape_cast %416 : vector<1x32x64xf32> to vector<32x64xf32>
    %cst_205 = arith.constant dense<0.000000e+00> : vector<9x64xf32>
    %418 = tpu.matmul %415, %417, %cst_205 {dimension_numbers = #tpu.dot_dimension_numbers<[1], [0], [0], [1], [0, 0, 1, 1], [], []>} : vector<9x32xf32>, vector<32x64xf32>, vector<9x64xf32> -> vector<9x64xf32>
    %c4_206 = arith.constant 4 : index
    %c0_207 = arith.constant 0 : index
    %c0_208 = arith.constant 0 : index
    %419 = vector.load %arg12[%c4_206, %c0_207, %c0_208] : memref<8x1x64xf32, #tpu.memory_space<vmem>>, vector<1x1x64xf32>
    %420 = vector.shape_cast %419 : vector<1x1x64xf32> to vector<1x64xf32>
    %421 = vector.broadcast %420 : vector<1x64xf32> to vector<9x64xf32>
    %422 = arith.addf %418, %421 : vector<9x64xf32>
    %cst_209 = arith.constant 0.000000e+00 : f32
    %423 = vector.broadcast %cst_209 : f32 to vector<9x64xf32>
    %424 = arith.maximumf %422, %423 : vector<9x64xf32>
    %c4_210 = arith.constant 4 : index
    %c0_211 = arith.constant 0 : index
    %c0_212 = arith.constant 0 : index
    %425 = vector.load %arg13[%c4_210, %c0_211, %c0_212] : memref<8x64x32xf32, #tpu.memory_space<vmem>>, vector<1x64x32xf32>
    %426 = vector.shape_cast %425 : vector<1x64x32xf32> to vector<64x32xf32>
    %cst_213 = arith.constant dense<0.000000e+00> : vector<9x32xf32>
    %427 = tpu.matmul %424, %426, %cst_213 {dimension_numbers = #tpu.dot_dimension_numbers<[1], [0], [0], [1], [0, 0, 1, 1], [], []>} : vector<9x64xf32>, vector<64x32xf32>, vector<9x32xf32> -> vector<9x32xf32>
    %c4_214 = arith.constant 4 : index
    %c0_215 = arith.constant 0 : index
    %c0_216 = arith.constant 0 : index
    %428 = vector.load %arg14[%c4_214, %c0_215, %c0_216] : memref<8x1x32xf32, #tpu.memory_space<vmem>>, vector<1x1x32xf32>
    %429 = vector.shape_cast %428 : vector<1x1x32xf32> to vector<1x32xf32>
    %430 = vector.broadcast %429 : vector<1x32xf32> to vector<9x32xf32>
    %431 = arith.addf %427, %430 : vector<9x32xf32>
    %c4_i32_217 = arith.constant 4 : i32
    %432 = arith.muli %arg0, %c4_i32_217 : i32
    %c16_i32 = arith.constant 16 : i32
    %433 = arith.addi %c16_i32, %432 : i32
    %c0_i32_218 = arith.constant 0 : i32
    %434 = arith.addi %433, %c0_i32_218 : i32
    %435 = arith.index_cast %434 : i32 to index
    %436 = memref.load %arg1[%435] : memref<24xf32, #tpu.memory_space<smem>>
    %437 = vector.broadcast %436 : f32 to vector<9x32xf32>
    %438 = arith.mulf %437, %431 : vector<9x32xf32>
    %c5 = arith.constant 5 : index
    %c0_219 = arith.constant 0 : index
    %c0_220 = arith.constant 0 : index
    %439 = vector.load %arg11[%c5, %c0_219, %c0_220] : memref<8x32x64xf32, #tpu.memory_space<vmem>>, vector<1x32x64xf32>
    %440 = vector.shape_cast %439 : vector<1x32x64xf32> to vector<32x64xf32>
    %cst_221 = arith.constant dense<0.000000e+00> : vector<9x64xf32>
    %441 = tpu.matmul %415, %440, %cst_221 {dimension_numbers = #tpu.dot_dimension_numbers<[1], [0], [0], [1], [0, 0, 1, 1], [], []>} : vector<9x32xf32>, vector<32x64xf32>, vector<9x64xf32> -> vector<9x64xf32>
    %c5_222 = arith.constant 5 : index
    %c0_223 = arith.constant 0 : index
    %c0_224 = arith.constant 0 : index
    %442 = vector.load %arg12[%c5_222, %c0_223, %c0_224] : memref<8x1x64xf32, #tpu.memory_space<vmem>>, vector<1x1x64xf32>
    %443 = vector.shape_cast %442 : vector<1x1x64xf32> to vector<1x64xf32>
    %444 = vector.broadcast %443 : vector<1x64xf32> to vector<9x64xf32>
    %445 = arith.addf %441, %444 : vector<9x64xf32>
    %cst_225 = arith.constant 0.000000e+00 : f32
    %446 = vector.broadcast %cst_225 : f32 to vector<9x64xf32>
    %447 = arith.maximumf %445, %446 : vector<9x64xf32>
    %c5_226 = arith.constant 5 : index
    %c0_227 = arith.constant 0 : index
    %c0_228 = arith.constant 0 : index
    %448 = vector.load %arg13[%c5_226, %c0_227, %c0_228] : memref<8x64x32xf32, #tpu.memory_space<vmem>>, vector<1x64x32xf32>
    %449 = vector.shape_cast %448 : vector<1x64x32xf32> to vector<64x32xf32>
    %cst_229 = arith.constant dense<0.000000e+00> : vector<9x32xf32>
    %450 = tpu.matmul %447, %449, %cst_229 {dimension_numbers = #tpu.dot_dimension_numbers<[1], [0], [0], [1], [0, 0, 1, 1], [], []>} : vector<9x64xf32>, vector<64x32xf32>, vector<9x32xf32> -> vector<9x32xf32>
    %c5_230 = arith.constant 5 : index
    %c0_231 = arith.constant 0 : index
    %c0_232 = arith.constant 0 : index
    %451 = vector.load %arg14[%c5_230, %c0_231, %c0_232] : memref<8x1x32xf32, #tpu.memory_space<vmem>>, vector<1x1x32xf32>
    %452 = vector.shape_cast %451 : vector<1x1x32xf32> to vector<1x32xf32>
    %453 = vector.broadcast %452 : vector<1x32xf32> to vector<9x32xf32>
    %454 = arith.addf %450, %453 : vector<9x32xf32>
    %c4_i32_233 = arith.constant 4 : i32
    %455 = arith.muli %arg0, %c4_i32_233 : i32
    %c16_i32_234 = arith.constant 16 : i32
    %456 = arith.addi %c16_i32_234, %455 : i32
    %c1_i32_235 = arith.constant 1 : i32
    %457 = arith.addi %456, %c1_i32_235 : i32
    %458 = arith.index_cast %457 : i32 to index
    %459 = memref.load %arg1[%458] : memref<24xf32, #tpu.memory_space<smem>>
    %460 = vector.broadcast %459 : f32 to vector<9x32xf32>
    %461 = arith.mulf %460, %454 : vector<9x32xf32>
    %462 = arith.addf %438, %461 : vector<9x32xf32>
    %c6 = arith.constant 6 : index
    %c0_236 = arith.constant 0 : index
    %c0_237 = arith.constant 0 : index
    %463 = vector.load %arg11[%c6, %c0_236, %c0_237] : memref<8x32x64xf32, #tpu.memory_space<vmem>>, vector<1x32x64xf32>
    %464 = vector.shape_cast %463 : vector<1x32x64xf32> to vector<32x64xf32>
    %cst_238 = arith.constant dense<0.000000e+00> : vector<9x64xf32>
    %465 = tpu.matmul %415, %464, %cst_238 {dimension_numbers = #tpu.dot_dimension_numbers<[1], [0], [0], [1], [0, 0, 1, 1], [], []>} : vector<9x32xf32>, vector<32x64xf32>, vector<9x64xf32> -> vector<9x64xf32>
    %c6_239 = arith.constant 6 : index
    %c0_240 = arith.constant 0 : index
    %c0_241 = arith.constant 0 : index
    %466 = vector.load %arg12[%c6_239, %c0_240, %c0_241] : memref<8x1x64xf32, #tpu.memory_space<vmem>>, vector<1x1x64xf32>
    %467 = vector.shape_cast %466 : vector<1x1x64xf32> to vector<1x64xf32>
    %468 = vector.broadcast %467 : vector<1x64xf32> to vector<9x64xf32>
    %469 = arith.addf %465, %468 : vector<9x64xf32>
    %cst_242 = arith.constant 0.000000e+00 : f32
    %470 = vector.broadcast %cst_242 : f32 to vector<9x64xf32>
    %471 = arith.maximumf %469, %470 : vector<9x64xf32>
    %c6_243 = arith.constant 6 : index
    %c0_244 = arith.constant 0 : index
    %c0_245 = arith.constant 0 : index
    %472 = vector.load %arg13[%c6_243, %c0_244, %c0_245] : memref<8x64x32xf32, #tpu.memory_space<vmem>>, vector<1x64x32xf32>
    %473 = vector.shape_cast %472 : vector<1x64x32xf32> to vector<64x32xf32>
    %cst_246 = arith.constant dense<0.000000e+00> : vector<9x32xf32>
    %474 = tpu.matmul %471, %473, %cst_246 {dimension_numbers = #tpu.dot_dimension_numbers<[1], [0], [0], [1], [0, 0, 1, 1], [], []>} : vector<9x64xf32>, vector<64x32xf32>, vector<9x32xf32> -> vector<9x32xf32>
    %c6_247 = arith.constant 6 : index
    %c0_248 = arith.constant 0 : index
    %c0_249 = arith.constant 0 : index
    %475 = vector.load %arg14[%c6_247, %c0_248, %c0_249] : memref<8x1x32xf32, #tpu.memory_space<vmem>>, vector<1x1x32xf32>
    %476 = vector.shape_cast %475 : vector<1x1x32xf32> to vector<1x32xf32>
    %477 = vector.broadcast %476 : vector<1x32xf32> to vector<9x32xf32>
    %478 = arith.addf %474, %477 : vector<9x32xf32>
    %c4_i32_250 = arith.constant 4 : i32
    %479 = arith.muli %arg0, %c4_i32_250 : i32
    %c16_i32_251 = arith.constant 16 : i32
    %480 = arith.addi %c16_i32_251, %479 : i32
    %c2_i32_252 = arith.constant 2 : i32
    %481 = arith.addi %480, %c2_i32_252 : i32
    %482 = arith.index_cast %481 : i32 to index
    %483 = memref.load %arg1[%482] : memref<24xf32, #tpu.memory_space<smem>>
    %484 = vector.broadcast %483 : f32 to vector<9x32xf32>
    %485 = arith.mulf %484, %478 : vector<9x32xf32>
    %486 = arith.addf %462, %485 : vector<9x32xf32>
    %c7 = arith.constant 7 : index
    %c0_253 = arith.constant 0 : index
    %c0_254 = arith.constant 0 : index
    %487 = vector.load %arg11[%c7, %c0_253, %c0_254] : memref<8x32x64xf32, #tpu.memory_space<vmem>>, vector<1x32x64xf32>
    %488 = vector.shape_cast %487 : vector<1x32x64xf32> to vector<32x64xf32>
    %cst_255 = arith.constant dense<0.000000e+00> : vector<9x64xf32>
    %489 = tpu.matmul %415, %488, %cst_255 {dimension_numbers = #tpu.dot_dimension_numbers<[1], [0], [0], [1], [0, 0, 1, 1], [], []>} : vector<9x32xf32>, vector<32x64xf32>, vector<9x64xf32> -> vector<9x64xf32>
    %c7_256 = arith.constant 7 : index
    %c0_257 = arith.constant 0 : index
    %c0_258 = arith.constant 0 : index
    %490 = vector.load %arg12[%c7_256, %c0_257, %c0_258] : memref<8x1x64xf32, #tpu.memory_space<vmem>>, vector<1x1x64xf32>
    %491 = vector.shape_cast %490 : vector<1x1x64xf32> to vector<1x64xf32>
    %492 = vector.broadcast %491 : vector<1x64xf32> to vector<9x64xf32>
    %493 = arith.addf %489, %492 : vector<9x64xf32>
    %cst_259 = arith.constant 0.000000e+00 : f32
    %494 = vector.broadcast %cst_259 : f32 to vector<9x64xf32>
    %495 = arith.maximumf %493, %494 : vector<9x64xf32>
    %c7_260 = arith.constant 7 : index
    %c0_261 = arith.constant 0 : index
    %c0_262 = arith.constant 0 : index
    %496 = vector.load %arg13[%c7_260, %c0_261, %c0_262] : memref<8x64x32xf32, #tpu.memory_space<vmem>>, vector<1x64x32xf32>
    %497 = vector.shape_cast %496 : vector<1x64x32xf32> to vector<64x32xf32>
    %cst_263 = arith.constant dense<0.000000e+00> : vector<9x32xf32>
    %498 = tpu.matmul %495, %497, %cst_263 {dimension_numbers = #tpu.dot_dimension_numbers<[1], [0], [0], [1], [0, 0, 1, 1], [], []>} : vector<9x64xf32>, vector<64x32xf32>, vector<9x32xf32> -> vector<9x32xf32>
    %c7_264 = arith.constant 7 : index
    %c0_265 = arith.constant 0 : index
    %c0_266 = arith.constant 0 : index
    %499 = vector.load %arg14[%c7_264, %c0_265, %c0_266] : memref<8x1x32xf32, #tpu.memory_space<vmem>>, vector<1x1x32xf32>
    %500 = vector.shape_cast %499 : vector<1x1x32xf32> to vector<1x32xf32>
    %501 = vector.broadcast %500 : vector<1x32xf32> to vector<9x32xf32>
    %502 = arith.addf %498, %501 : vector<9x32xf32>
    %c4_i32_267 = arith.constant 4 : i32
    %503 = arith.muli %arg0, %c4_i32_267 : i32
    %c16_i32_268 = arith.constant 16 : i32
    %504 = arith.addi %c16_i32_268, %503 : i32
    %c3_i32_269 = arith.constant 3 : i32
    %505 = arith.addi %504, %c3_i32_269 : i32
    %506 = arith.index_cast %505 : i32 to index
    %507 = memref.load %arg1[%506] : memref<24xf32, #tpu.memory_space<smem>>
    %508 = vector.broadcast %507 : f32 to vector<9x32xf32>
    %509 = arith.mulf %508, %502 : vector<9x32xf32>
    %510 = arith.addf %486, %509 : vector<9x32xf32>
    %511 = arith.addf %415, %510 : vector<9x32xf32>
    %cst_270 = arith.constant dense<0.000000e+00> : vector<32xf32>
    %512 = vector.multi_reduction <add>, %511, %cst_270 [0] : vector<9x32xf32> to vector<32xf32>
    %513 = vector.shape_cast %512 : vector<32xf32> to vector<1x32xf32>
    %cst_271 = arith.constant 9.000000e+00 : f32
    %514 = vector.broadcast %cst_271 : f32 to vector<1x32xf32>
    %515 = arith.divf %513, %514 : vector<1x32xf32>
    %516 = vector.broadcast %515 : vector<1x32xf32> to vector<9x32xf32>
    %517 = arith.subf %511, %516 : vector<9x32xf32>
    %518 = arith.mulf %517, %517 : vector<9x32xf32>
    %cst_272 = arith.constant dense<0.000000e+00> : vector<32xf32>
    %519 = vector.multi_reduction <add>, %518, %cst_272 [0] : vector<9x32xf32> to vector<32xf32>
    %520 = vector.shape_cast %519 : vector<32xf32> to vector<1x32xf32>
    %cst_273 = arith.constant 9.000000e+00 : f32
    %521 = vector.broadcast %cst_273 : f32 to vector<1x32xf32>
    %522 = arith.divf %520, %521 : vector<1x32xf32>
    %523 = vector.broadcast %515 : vector<1x32xf32> to vector<9x32xf32>
    %524 = arith.subf %511, %523 : vector<9x32xf32>
    %cst_274 = arith.constant 9.99999974E-6 : f32
    %525 = vector.broadcast %cst_274 : f32 to vector<1x32xf32>
    %526 = arith.addf %522, %525 : vector<1x32xf32>
    %527 = math.rsqrt %526 : vector<1x32xf32>
    %528 = vector.broadcast %527 : vector<1x32xf32> to vector<9x32xf32>
    %529 = arith.mulf %524, %528 : vector<9x32xf32>
    %c1_275 = arith.constant 1 : index
    %c0_276 = arith.constant 0 : index
    %c0_277 = arith.constant 0 : index
    %530 = vector.load %arg15[%c1_275, %c0_276, %c0_277] : memref<2x1x32xf32, #tpu.memory_space<vmem>>, vector<1x1x32xf32>
    %531 = vector.shape_cast %530 : vector<1x1x32xf32> to vector<1x32xf32>
    %532 = vector.broadcast %531 : vector<1x32xf32> to vector<9x32xf32>
    %533 = arith.mulf %529, %532 : vector<9x32xf32>
    %c1_278 = arith.constant 1 : index
    %c0_279 = arith.constant 0 : index
    %c0_280 = arith.constant 0 : index
    %534 = vector.load %arg16[%c1_278, %c0_279, %c0_280] : memref<2x1x32xf32, #tpu.memory_space<vmem>>, vector<1x1x32xf32>
    %535 = vector.shape_cast %534 : vector<1x1x32xf32> to vector<1x32xf32>
    %536 = vector.broadcast %535 : vector<1x32xf32> to vector<9x32xf32>
    %537 = arith.addf %533, %536 : vector<9x32xf32>
    %538 = vector.extract_strided_slice %537 {offsets = [0, 0], sizes = [8, 32], strides = [1, 1]} : vector<9x32xf32> to vector<8x32xf32>
    %c0_281 = arith.constant 0 : index
    %c0_282 = arith.constant 0 : index
    %c0_283 = arith.constant 0 : index
    %539 = vector.load %arg17[%c0_281, %c0_282, %c0_283] : memref<1x8x32xf32, #tpu.memory_space<vmem>>, vector<1x8x32xf32>
    %540 = vector.shape_cast %539 : vector<1x8x32xf32> to vector<8x32xf32>
    %541 = vector.shape_cast %538 : vector<8x32xf32> to vector<1x8x32xf32>
    tpu.vector_store %arg17[%c0_281, %c0_282, %c0_283], %541 {strides = array<i32>} : memref<1x8x32xf32, #tpu.memory_space<vmem>>, vector<1x8x32xf32>,
    return
  }
  func.func @transform_0(%arg0: i32) -> i32 {
    %c0_i32 = arith.constant 0 : i32
    %c0_i32_0 = arith.constant 0 : i32
    return %c0_i32 : i32
  }
  func.func @transform_1(%arg0: i32) -> (i32, i32, i32) {
    %c0_i32 = arith.constant 0 : i32
    %c0_i32_0 = arith.constant 0 : i32
    %c0_i32_1 = arith.constant 0 : i32
    return %arg0, %c0_i32, %c0_i32_0 : i32, i32, i32
  }
  func.func @transform_2(%arg0: i32) -> (i32, i32) {
    %c0_i32 = arith.constant 0 : i32
    %c0_i32_0 = arith.constant 0 : i32
    %c0_i32_1 = arith.constant 0 : i32
    return %c0_i32, %c0_i32_0 : i32, i32
  }
  func.func @transform_3(%arg0: i32) -> (i32, i32, i32) {
    %c0_i32 = arith.constant 0 : i32
    %c0_i32_0 = arith.constant 0 : i32
    %c0_i32_1 = arith.constant 0 : i32
    %c0_i32_2 = arith.constant 0 : i32
    return %c0_i32, %c0_i32_0, %c0_i32_1 : i32, i32, i32
  }
  func.func @transform_4(%arg0: i32) -> (i32, i32, i32) {
    %c0_i32 = arith.constant 0 : i32
    %c0_i32_0 = arith.constant 0 : i32
    %c0_i32_1 = arith.constant 0 : i32
    %c0_i32_2 = arith.constant 0 : i32
    return %c0_i32, %c0_i32_0, %c0_i32_1 : i32, i32, i32
  }
  func.func @transform_5(%arg0: i32) -> (i32, i32, i32) {
    %c0_i32 = arith.constant 0 : i32
    %c0_i32_0 = arith.constant 0 : i32
    %c0_i32_1 = arith.constant 0 : i32
    %c0_i32_2 = arith.constant 0 : i32
    return %c0_i32, %c0_i32_0, %c0_i32_1 : i32, i32, i32
  }
  func.func @transform_6(%arg0: i32) -> (i32, i32, i32) {
    %c0_i32 = arith.constant 0 : i32
    %c0_i32_0 = arith.constant 0 : i32
    %c0_i32_1 = arith.constant 0 : i32
    %c0_i32_2 = arith.constant 0 : i32
    return %c0_i32, %c0_i32_0, %c0_i32_1 : i32, i32, i32
  }
  func.func @transform_7(%arg0: i32) -> (i32, i32, i32) {
    %c0_i32 = arith.constant 0 : i32
    %c0_i32_0 = arith.constant 0 : i32
    %c0_i32_1 = arith.constant 0 : i32
    %c0_i32_2 = arith.constant 0 : i32
    return %c0_i32, %c0_i32_0, %c0_i32_1 : i32, i32, i32
  }
  func.func @transform_8(%arg0: i32) -> (i32, i32, i32) {
    %c0_i32 = arith.constant 0 : i32
    %c0_i32_0 = arith.constant 0 : i32
    %c0_i32_1 = arith.constant 0 : i32
    %c0_i32_2 = arith.constant 0 : i32
    return %c0_i32, %c0_i32_0, %c0_i32_1 : i32, i32, i32
  }
  func.func @transform_9(%arg0: i32) -> (i32, i32, i32) {
    %c0_i32 = arith.constant 0 : i32
    %c0_i32_0 = arith.constant 0 : i32
    %c0_i32_1 = arith.constant 0 : i32
    %c0_i32_2 = arith.constant 0 : i32
    return %c0_i32, %c0_i32_0, %c0_i32_1 : i32, i32, i32
  }
  func.func @transform_10(%arg0: i32) -> (i32, i32, i32) {
    %c0_i32 = arith.constant 0 : i32
    %c0_i32_0 = arith.constant 0 : i32
    %c0_i32_1 = arith.constant 0 : i32
    %c0_i32_2 = arith.constant 0 : i32
    return %c0_i32, %c0_i32_0, %c0_i32_1 : i32, i32, i32
  }
  func.func @transform_11(%arg0: i32) -> (i32, i32, i32) {
    %c0_i32 = arith.constant 0 : i32
    %c0_i32_0 = arith.constant 0 : i32
    %c0_i32_1 = arith.constant 0 : i32
    %c0_i32_2 = arith.constant 0 : i32
    return %c0_i32, %c0_i32_0, %c0_i32_1 : i32, i32, i32
  }
  func.func @transform_12(%arg0: i32) -> (i32, i32, i32) {
    %c0_i32 = arith.constant 0 : i32
    %c0_i32_0 = arith.constant 0 : i32
    %c0_i32_1 = arith.constant 0 : i32
    %c0_i32_2 = arith.constant 0 : i32
    return %c0_i32, %c0_i32_0, %c0_i32_1 : i32, i32, i32
  }
  func.func @transform_13(%arg0: i32) -> (i32, i32, i32) {
    %c0_i32 = arith.constant 0 : i32
    %c0_i32_0 = arith.constant 0 : i32
    %c0_i32_1 = arith.constant 0 : i32
    %c0_i32_2 = arith.constant 0 : i32
    return %c0_i32, %c0_i32_0, %c0_i32_1 : i32, i32, i32
  }
  func.func @transform_14(%arg0: i32) -> (i32, i32, i32) {
    %c0_i32 = arith.constant 0 : i32
    %c0_i32_0 = arith.constant 0 : i32
    %c0_i32_1 = arith.constant 0 : i32
    %c0_i32_2 = arith.constant 0 : i32
    return %c0_i32, %c0_i32_0, %c0_i32_1 : i32, i32, i32
  }
  func.func @transform_15(%arg0: i32) -> (i32, i32, i32) {
    %c0_i32 = arith.constant 0 : i32
    %c0_i32_0 = arith.constant 0 : i32
    %c0_i32_1 = arith.constant 0 : i32
    %c0_i32_2 = arith.constant 0 : i32
    return %c0_i32, %c0_i32_0, %c0_i32_1 : i32, i32, i32
  }
  func.func @transform_16(%arg0: i32) -> (i32, i32, i32) {
    %c0_i32 = arith.constant 0 : i32
    %c0_i32_0 = arith.constant 0 : i32
    %c0_i32_1 = arith.constant 0 : i32
    return %arg0, %c0_i32, %c0_i32_0 : i32, i32, i32
  }
}

</mosaic_0001>

<llo_original>
// kernel: _lambda_.2
$region0: #{_lambda_.2}
  #allocation0 [shape = 'u32[]', space=smem, size = 0x4, offset = 0x4, fixed_abs, tag = 'smem constant byte address 0x4 - core index']
  #allocation1 [shape = 'u32[72,128]{1,0:T(1,128)}', space=vmem, size = 0x9000, scoped, tag = 'internal scratch']
  %s0 = inlined_call_operand.vmem [shape: f32[2,2], index: 0, kind: input, shape index: {}]
  %s1 = inlined_call_operand.vmem [shape: f32[2,32], index: 1, kind: input, shape index: {}]
  %s2 = inlined_call_operand.vmem [shape: f32[1,32], index: 2, kind: input, shape index: {}]
  %s3 = inlined_call_operand.vmem [shape: f32[2,32], index: 3, kind: output, shape index: {}]
  %s4 = sld [smem:[#allocation0]]
  $region22: #{_lambda_.2} parent=0
    _
  %s6 = ssub.s32 1, %s4
  %s7 = scalar_select 0, %s6, %s4
  // Predicated region
  $region2: #{_lambda_.2} parent=0 // pred_check
    _
  $region3: #{_lambda_.2} parent=0 // pred_check_branch
    %9 = sbr.rel (0) target = $region5
  $region4: #{_lambda_.2} parent=0 // pred_region
    _
  $region5: #{_lambda_.2} parent=0 // pred_fallthru
    _
  // Predicated region
  $region6: #{_lambda_.2} parent=0 // pred_check
    _
  $region7: #{_lambda_.2} parent=0 // pred_check_branch
    %11 = sbr.rel (0) target = $region9
  $region8: #{_lambda_.2} parent=0 // pred_region
    _
  $region9: #{_lambda_.2} parent=0 // pred_fallthru
    _
  // Predicated region
  $region10: #{_lambda_.2} parent=0 // pred_check
    _
  $region11: #{_lambda_.2} parent=0 // pred_check_branch
    %13 = sbr.rel (0) target = $region13
  $region12: #{_lambda_.2} parent=0 // pred_region
    _
  $region13: #{_lambda_.2} parent=0 // pred_fallthru
    _
  %v14 = vld [vmem:[%s0] sm:$0x3]
  %v15 = vld [vmem:[%s1] sm:$0x3]
  %v16 = vld [vmem:[%s2] sm:$0x1]
  %v18 = vperm.slane %v16, 0
  %vm20 = vcmask 15360
  %v22 = vsel %vm20, %v14, 0
  %vm24 = vcmask 1041408
  %v26 = vsel %vm24, %v15, 0
  %28 = vmatpush.msra.mxu0 0.0
  %29 = vmatpush.msra.mxu0 0.0
  %30 = vmatpush.msra.mxu0 0.0
  %31 = vmatpush.msra.mxu0 0.0
  %32 = vmatpush.msra.mxu0 0.0
  %33 = vmatpush.msra.mxu0 0.0
  %34 = vmatpush.msra.mxu0 0.0
  %35 = vmatpush.msra.mxu0 0.0
  %36 = vmatpush.msra.mxu0 0.0
  %37 = vmatpush.msra.mxu0 0.0
  %38 = vmatpush.msra.mxu0 0.0
  %39 = vmatpush.msra.mxu0 0.0
  %40 = vmatpush.msra.mxu0 0.0
  %41 = vmatpush.msra.mxu0 0.0
  %42 = vmatpush.msra.mxu0 0.0
  %43 = vmatpush.msra.mxu0 %v26
  %44 = vmatmul.f32.gmra.mxu0 %v22
  %v45 = vpop.f32.mrf.mxu0
  %v46 = vadd.f32 %v18, %v45
  %47 = vdwg.mxu0
  %vm48 = vcmask 254976
  %49 = vst.msk [vmem:[%s3] sm:$0x3] %vm48, %v46
  // Predicated region
  $region14: #{_lambda_.2} parent=0 // pred_check
    _
  $region15: #{_lambda_.2} parent=0 // pred_check_branch
    %51 = sbr.rel (0) target = $region17
  $region16: #{_lambda_.2} parent=0 // pred_region
    _
  $region17: #{_lambda_.2} parent=0 // pred_fallthru
    _
  // Predicated region
  $region18: #{_lambda_.2} parent=0 // pred_check
    _
  $region19: #{_lambda_.2} parent=0 // pred_check_branch
    %53 = sbr.rel (0) target = $region21
  $region20: #{_lambda_.2} parent=0 // pred_region
    _
  $region21: #{_lambda_.2} parent=0 // pred_fallthru
    _

// kernel: _lambda_.3
$region0: #{_lambda_.3}
  #allocation0 [shape = 'u32[]', space=smem, size = 0x4, offset = 0x4, fixed_abs, tag = 'smem constant byte address 0x4 - core index']
  #allocation1 [shape = 'u32[72,128]{1,0:T(1,128)}', space=vmem, size = 0x9000, scoped, tag = 'internal scratch']
  #allocation2 [shape = 'f32[9,32]{1,0:T(8,128)}', space=vmem, size = 0x2000, scoped, tag = 'scratch operand']
  %s0 = inlined_call_operand.vmem [shape: f32[24], index: 0, kind: input, shape index: {}]
  %s1 = inlined_call_operand.vmem [shape: f32[2,8,4], index: 1, kind: input, shape index: {}]
  %s2 = inlined_call_operand.vmem [shape: f32[2,32], index: 2, kind: input, shape index: {}]
  %s3 = inlined_call_operand.vmem [shape: f32[4,4,32], index: 3, kind: input, shape index: {}]
  %s4 = inlined_call_operand.vmem [shape: f32[4,1,32], index: 4, kind: input, shape index: {}]
  %s5 = inlined_call_operand.vmem [shape: f32[2,32,128], index: 5, kind: input, shape index: {}]
  %s6 = inlined_call_operand.vmem [shape: f32[2,32,32], index: 6, kind: input, shape index: {}]
  %s7 = inlined_call_operand.vmem [shape: f32[2,1,32], index: 7, kind: input, shape index: {}]
  %s8 = inlined_call_operand.vmem [shape: f32[2,1,32], index: 8, kind: input, shape index: {}]
  %s9 = inlined_call_operand.vmem [shape: f32[2,1,32], index: 9, kind: input, shape index: {}]
  %s10 = inlined_call_operand.vmem [shape: f32[8,32,64], index: 10, kind: input, shape index: {}]
  %s11 = inlined_call_operand.vmem [shape: f32[8,1,64], index: 11, kind: input, shape index: {}]
  %s12 = inlined_call_operand.vmem [shape: f32[8,64,32], index: 12, kind: input, shape index: {}]
  %s13 = inlined_call_operand.vmem [shape: f32[8,1,32], index: 13, kind: input, shape index: {}]
  %s14 = inlined_call_operand.vmem [shape: f32[2,1,32], index: 14, kind: input, shape index: {}]
  %s15 = inlined_call_operand.vmem [shape: f32[2,1,32], index: 15, kind: input, shape index: {}]
  %s16 = inlined_call_operand.hbm [shape: f32[2,8,32], index: 16, kind: output, shape index: {}]
  %s17 = sld [smem:[#allocation0]]
  $region101: #{_lambda_.3} parent=0
    _
  %s19 = ssub.s32 1, %s17
  %s20 = scalar_select 0, %s19, %s17
  $region1: #{_lambda_.3} parent=0
    #allocation3 [shape = 'u8[512]{0}', space=smem, size = 0x200, scoped, tag = 'input window, operand 0, single buffered']
    #allocation4 [shape = 's32[2]{0}', space=sflag, size = 0x8, scoped, tag = 'scoped memory for _lambda_.3']
    #allocation5 [shape = 's32[2]{0}', space=sflag, size = 0x8, scoped, tag = 'scoped memory for _lambda_.3']
    #allocation6 [shape = 'u8[8192]{0}', space=vmem, size = 0x2000, scoped, tag = 'output window, operand 0']
    %21 = vsyncpa [#allocation5], 0
    %22 = vsyncpa [#allocation4], 0
    %s23 = scalar_lea.sflag [#allocation4], 1
    %24 = vsyncpa %s23, 0
    loop: start=0, step=1, limit=4
    $region2: #{_lambda_.3} parent=1 // loop_pre_header
      _
    $region3: #{_lambda_.3} parent=1 // loop_header
      %s26 = sphi 0, %s30
      %p27 = scmp.ge.s32.totalorder %s26, 4
      %s34 = sphi 0, %s34
      %s36 = sphi 0, %s34
      %s37 = sphi 0, %s36
      %s51 = sphi 0, %s37
      %s57 = sphi 0, %s59
      %s60 = sphi 0, %s57
      %s61 = sphi 0, %s60
      %s77 = sphi 0, %s61
      %s81 = sphi 0, %s81
      %s83 = sphi 0, %s81
      %s84 = sphi 0, %s83
      %s98 = sphi 0, %s84
      %s102 = sphi 0, %s102
      %s104 = sphi 0, %s102
      %s105 = sphi 0, %s104
      %s119 = sphi 0, %s105
      %s123 = sphi 0, %s123
      %s125 = sphi 0, %s123
      %s126 = sphi 0, %s125
      %s140 = sphi 0, %s126
      %s144 = sphi 0, %s144
      %s146 = sphi 0, %s144
      %s147 = sphi 0, %s146
      %s161 = sphi 0, %s147
      %s165 = sphi 0, %s165
      %s167 = sphi 0, %s165
      %s168 = sphi 0, %s167
      %s182 = sphi 0, %s168
      %s186 = sphi 0, %s186
      %s188 = sphi 0, %s186
      %s189 = sphi 0, %s188
      %s203 = sphi 0, %s189
      %s207 = sphi 0, %s207
      %s209 = sphi 0, %s207
      %s210 = sphi 0, %s209
      %s224 = sphi 0, %s210
      %s228 = sphi 0, %s228
      %s230 = sphi 0, %s228
      %s231 = sphi 0, %s230
      %s245 = sphi 0, %s231
      %s249 = sphi 0, %s249
      %s251 = sphi 0, %s249
      %s252 = sphi 0, %s251
      %s266 = sphi 0, %s252
      %s270 = sphi 0, %s270
      %s272 = sphi 0, %s270
      %s273 = sphi 0, %s272
      %s287 = sphi 0, %s273
      %s291 = sphi 0, %s291
      %s293 = sphi 0, %s291
      %s294 = sphi 0, %s293
      %s308 = sphi 0, %s294
      %s312 = sphi 0, %s312
      %s314 = sphi 0, %s312
      %s315 = sphi 0, %s314
      %s329 = sphi 0, %s315
      %s333 = sphi 0, %s333
      %s335 = sphi 0, %s333
      %s336 = sphi 0, %s335
      %s350 = sphi 0, %s336
      %s354 = sphi 0, %s354
      %s356 = sphi 0, %s354
      %s357 = sphi 0, %s356
      %s371 = sphi 0, %s357
      %s377 = sphi 0, %s379
      %s380 = sphi 0, %s377
      %s381 = sphi 0, %s380
      %s397 = sphi 0, %s381
    $region4: #{_lambda_.3} parent=1 // loop_header_branch
      %29 = sbr.rel (%p27) target = $region8
    $region5: #{_lambda_.3} parent=1 // loop_body
      %s31 = ssub.s32 %s26, 1
      %s32 = ssub.s32 %s26, 2
      %s33 = sadd.s32 %s26, 1
      %s35 = sadd.s32 %s34, 1
      %p38 = scmp.eq.s32.totalorder %s26, 1
      %p39 = scmp.ne.s32.totalorder %s34, %s36
      %p40 = scmp.eq.s32.totalorder %s26, 0
      %p41 = por %p39, %p40
      %p42 = scmp.ne.s32.totalorder %s34, %s36
      %p43 = scmp.eq.s32.totalorder %s31, 1
      %p44 = por %p42, %p43
      %p45 = scmp.ne.s32.totalorder %s36, %s37
      %p46 = scmp.eq.s32.totalorder %s31, 0
      %p47 = por %p45, %p46
      %p48 = scmp.ne.s32.totalorder %s36, %s37
      %p49 = scmp.eq.s32.totalorder %s32, 1
      %p50 = por %p48, %p49
      %p52 = scmp.ne.s32.totalorder %s37, %s51
      %p53 = scmp.eq.s32.totalorder %s32, 0
      %p54 = por %p52, %p53
      %s55 = ssub.s32 %s26, %s33
      %p56 = scmp.eq.s32.totalorder %s55, 0
      %s58 = sadd.s32 %s57, 1
      %s59 = scalar_select %p56, %s57, %s58
      %p62 = pneg %p56
      %p63 = scmp.eq.s32.totalorder %s26, 1
      %p64 = por %p62, %p63
      %p65 = scmp.ne.s32.totalorder %s57, %s60
      %p66 = scmp.eq.s32.totalorder %s26, 0
      %p67 = por %p65, %p66
      %p68 = scmp.ne.s32.totalorder %s57, %s60
      %p69 = scmp.eq.s32.totalorder %s31, 1
      %p70 = por %p68, %p69
      %p71 = scmp.ne.s32.totalorder %s60, %s61
      %p72 = scmp.eq.s32.totalorder %s31, 0
      %p73 = por %p71, %p72
      %p74 = scmp.ne.s32.totalorder %s60, %s61
      %p75 = scmp.eq.s32.totalorder %s32, 1
      %p76 = por %p74, %p75
      %p78 = scmp.ne.s32.totalorder %s61, %s77
      %p79 = scmp.eq.s32.totalorder %s32, 0
      %p80 = por %p78, %p79
      %s82 = sadd.s32 %s81, 1
      %p85 = scmp.eq.s32.totalorder %s26, 1
      %p86 = scmp.ne.s32.totalorder %s81, %s83
      %p87 = scmp.eq.s32.totalorder %s26, 0
      %p88 = por %p86, %p87
      %p89 = scmp.ne.s32.totalorder %s81, %s83
      %p90 = scmp.eq.s32.totalorder %s31, 1
      %p91 = por %p89, %p90
      %p92 = scmp.ne.s32.totalorder %s83, %s84
      %p93 = scmp.eq.s32.totalorder %s31, 0
      %p94 = por %p92, %p93
      %p95 = scmp.ne.s32.totalorder %s83, %s84
      %p96 = scmp.eq.s32.totalorder %s32, 1
      %p97 = por %p95, %p96
      %p99 = scmp.ne.s32.totalorder %s84, %s98
      %p100 = scmp.eq.s32.totalorder %s32, 0
      %p101 = por %p99, %p100
      %s103 = sadd.s32 %s102, 1
      %p106 = scmp.eq.s32.totalorder %s26, 1
      %p107 = scmp.ne.s32.totalorder %s102, %s104
      %p108 = scmp.eq.s32.totalorder %s26, 0
      %p109 = por %p107, %p108
      %p110 = scmp.ne.s32.totalorder %s102, %s104
      %p111 = scmp.eq.s32.totalorder %s31, 1
      %p112 = por %p110, %p111
      %p113 = scmp.ne.s32.totalorder %s104, %s105
      %p114 = scmp.eq.s32.totalorder %s31, 0
      %p115 = por %p113, %p114
      %p116 = scmp.ne.s32.totalorder %s104, %s105
      %p117 = scmp.eq.s32.totalorder %s32, 1
      %p118 = por %p116, %p117
      %p120 = scmp.ne.s32.totalorder %s105, %s119
      %p121 = scmp.eq.s32.totalorder %s32, 0
      %p122 = por %p120, %p121
      %s124 = sadd.s32 %s123, 1
      %p127 = scmp.eq.s32.totalorder %s26, 1
      %p128 = scmp.ne.s32.totalorder %s123, %s125
      %p129 = scmp.eq.s32.totalorder %s26, 0
      %p130 = por %p128, %p129
      %p131 = scmp.ne.s32.totalorder %s123, %s125
      %p132 = scmp.eq.s32.totalorder %s31, 1
      %p133 = por %p131, %p132
      %p134 = scmp.ne.s32.totalorder %s125, %s126
      %p135 = scmp.eq.s32.totalorder %s31, 0
      %p136 = por %p134, %p135
      %p137 = scmp.ne.s32.totalorder %s125, %s126
      %p138 = scmp.eq.s32.totalorder %s32, 1
      %p139 = por %p137, %p138
      %p141 = scmp.ne.s32.totalorder %s126, %s140
      %p142 = scmp.eq.s32.totalorder %s32, 0
      %p143 = por %p141, %p142
      %s145 = sadd.s32 %s144, 1
      %p148 = scmp.eq.s32.totalorder %s26, 1
      %p149 = scmp.ne.s32.totalorder %s144, %s146
      %p150 = scmp.eq.s32.totalorder %s26, 0
      %p151 = por %p149, %p150
      %p152 = scmp.ne.s32.totalorder %s144, %s146
      %p153 = scmp.eq.s32.totalorder %s31, 1
      %p154 = por %p152, %p153
      %p155 = scmp.ne.s32.totalorder %s146, %s147
      %p156 = scmp.eq.s32.totalorder %s31, 0
      %p157 = por %p155, %p156
      %p158 = scmp.ne.s32.totalorder %s146, %s147
      %p159 = scmp.eq.s32.totalorder %s32, 1
      %p160 = por %p158, %p159
      %p162 = scmp.ne.s32.totalorder %s147, %s161
      %p163 = scmp.eq.s32.totalorder %s32, 0
      %p164 = por %p162, %p163
      %s166 = sadd.s32 %s165, 1
      %p169 = scmp.eq.s32.totalorder %s26, 1
      %p170 = scmp.ne.s32.totalorder %s165, %s167
      %p171 = scmp.eq.s32.totalorder %s26, 0
      %p172 = por %p170, %p171
      %p173 = scmp.ne.s32.totalorder %s165, %s167
      %p174 = scmp.eq.s32.totalorder %s31, 1
      %p175 = por %p173, %p174
      %p176 = scmp.ne.s32.totalorder %s167, %s168
      %p177 = scmp.eq.s32.totalorder %s31, 0
      %p178 = por %p176, %p177
      %p179 = scmp.ne.s32.totalorder %s167, %s168
      %p180 = scmp.eq.s32.totalorder %s32, 1
      %p181 = por %p179, %p180
      %p183 = scmp.ne.s32.totalorder %s168, %s182
      %p184 = scmp.eq.s32.totalorder %s32, 0
      %p185 = por %p183, %p184
      %s187 = sadd.s32 %s186, 1
      %p190 = scmp.eq.s32.totalorder %s26, 1
      %p191 = scmp.ne.s32.totalorder %s186, %s188
      %p192 = scmp.eq.s32.totalorder %s26, 0
      %p193 = por %p191, %p192
      %p194 = scmp.ne.s32.totalorder %s186, %s188
      %p195 = scmp.eq.s32.totalorder %s31, 1
      %p196 = por %p194, %p195
      %p197 = scmp.ne.s32.totalorder %s188, %s189
      %p198 = scmp.eq.s32.totalorder %s31, 0
      %p199 = por %p197, %p198
      %p200 = scmp.ne.s32.totalorder %s188, %s189
      %p201 = scmp.eq.s32.totalorder %s32, 1
      %p202 = por %p200, %p201
      %p204 = scmp.ne.s32.totalorder %s189, %s203
      %p205 = scmp.eq.s32.totalorder %s32, 0
      %p206 = por %p204, %p205
      %s208 = sadd.s32 %s207, 1
      %p211 = scmp.eq.s32.totalorder %s26, 1
      %p212 = scmp.ne.s32.totalorder %s207, %s209
      %p213 = scmp.eq.s32.totalorder %s26, 0
      %p214 = por %p212, %p213
      %p215 = scmp.ne.s32.totalorder %s207, %s209
      %p216 = scmp.eq.s32.totalorder %s31, 1
      %p217 = por %p215, %p216
      %p218 = scmp.ne.s32.totalorder %s209, %s210
      %p219 = scmp.eq.s32.totalorder %s31, 0
      %p220 = por %p218, %p219
      %p221 = scmp.ne.s32.totalorder %s209, %s210
      %p222 = scmp.eq.s32.totalorder %s32, 1
      %p223 = por %p221, %p222
      %p225 = scmp.ne.s32.totalorder %s210, %s224
      %p226 = scmp.eq.s32.totalorder %s32, 0
      %p227 = por %p225, %p226
      %s229 = sadd.s32 %s228, 1
      %p232 = scmp.eq.s32.totalorder %s26, 1
      %p233 = scmp.ne.s32.totalorder %s228, %s230
      %p234 = scmp.eq.s32.totalorder %s26, 0
      %p235 = por %p233, %p234
      %p236 = scmp.ne.s32.totalorder %s228, %s230
      %p237 = scmp.eq.s32.totalorder %s31, 1
      %p238 = por %p236, %p237
      %p239 = scmp.ne.s32.totalorder %s230, %s231
      %p240 = scmp.eq.s32.totalorder %s31, 0
      %p241 = por %p239, %p240
      %p242 = scmp.ne.s32.totalorder %s230, %s231
      %p243 = scmp.eq.s32.totalorder %s32, 1
      %p244 = por %p242, %p243
      %p246 = scmp.ne.s32.totalorder %s231, %s245
      %p247 = scmp.eq.s32.totalorder %s32, 0
      %p248 = por %p246, %p247
      %s250 = sadd.s32 %s249, 1
      %p253 = scmp.eq.s32.totalorder %s26, 1
      %p254 = scmp.ne.s32.totalorder %s249, %s251
      %p255 = scmp.eq.s32.totalorder %s26, 0
      %p256 = por %p254, %p255
      %p257 = scmp.ne.s32.totalorder %s249, %s251
      %p258 = scmp.eq.s32.totalorder %s31, 1
      %p259 = por %p257, %p258
      %p260 = scmp.ne.s32.totalorder %s251, %s252
      %p261 = scmp.eq.s32.totalorder %s31, 0
      %p262 = por %p260, %p261
      %p263 = scmp.ne.s32.totalorder %s251, %s252
      %p264 = scmp.eq.s32.totalorder %s32, 1
      %p265 = por %p263, %p264
      %p267 = scmp.ne.s32.totalorder %s252, %s266
      %p268 = scmp.eq.s32.totalorder %s32, 0
      %p269 = por %p267, %p268
      %s271 = sadd.s32 %s270, 1
      %p274 = scmp.eq.s32.totalorder %s26, 1
      %p275 = scmp.ne.s32.totalorder %s270, %s272
      %p276 = scmp.eq.s32.totalorder %s26, 0
      %p277 = por %p275, %p276
      %p278 = scmp.ne.s32.totalorder %s270, %s272
      %p279 = scmp.eq.s32.totalorder %s31, 1
      %p280 = por %p278, %p279
      %p281 = scmp.ne.s32.totalorder %s272, %s273
      %p282 = scmp.eq.s32.totalorder %s31, 0
      %p283 = por %p281, %p282
      %p284 = scmp.ne.s32.totalorder %s272, %s273
      %p285 = scmp.eq.s32.totalorder %s32, 1
      %p286 = por %p284, %p285
      %p288 = scmp.ne.s32.totalorder %s273, %s287
      %p289 = scmp.eq.s32.totalorder %s32, 0
      %p290 = por %p288, %p289
      %s292 = sadd.s32 %s291, 1
      %p295 = scmp.eq.s32.totalorder %s26, 1
      %p296 = scmp.ne.s32.totalorder %s291, %s293
      %p297 = scmp.eq.s32.totalorder %s26, 0
      %p298 = por %p296, %p297
      %p299 = scmp.ne.s32.totalorder %s291, %s293
      %p300 = scmp.eq.s32.totalorder %s31, 1
      %p301 = por %p299, %p300
      %p302 = scmp.ne.s32.totalorder %s293, %s294
      %p303 = scmp.eq.s32.totalorder %s31, 0
      %p304 = por %p302, %p303
      %p305 = scmp.ne.s32.totalorder %s293, %s294
      %p306 = scmp.eq.s32.totalorder %s32, 1
      %p307 = por %p305, %p306
      %p309 = scmp.ne.s32.totalorder %s294, %s308
      %p310 = scmp.eq.s32.totalorder %s32, 0
      %p311 = por %p309, %p310
      %s313 = sadd.s32 %s312, 1
      %p316 = scmp.eq.s32.totalorder %s26, 1
      %p317 = scmp.ne.s32.totalorder %s312, %s314
      %p318 = scmp.eq.s32.totalorder %s26, 0
      %p319 = por %p317, %p318
      %p320 = scmp.ne.s32.totalorder %s312, %s314
      %p321 = scmp.eq.s32.totalorder %s31, 1
      %p322 = por %p320, %p321
      %p323 = scmp.ne.s32.totalorder %s314, %s315
      %p324 = scmp.eq.s32.totalorder %s31, 0
      %p325 = por %p323, %p324
      %p326 = scmp.ne.s32.totalorder %s314, %s315
      %p327 = scmp.eq.s32.totalorder %s32, 1
      %p328 = por %p326, %p327
      %p330 = scmp.ne.s32.totalorder %s315, %s329
      %p331 = scmp.eq.s32.totalorder %s32, 0
      %p332 = por %p330, %p331
      %s334 = sadd.s32 %s333, 1
      %p337 = scmp.eq.s32.totalorder %s26, 1
      %p338 = scmp.ne.s32.totalorder %s333, %s335
      %p339 = scmp.eq.s32.totalorder %s26, 0
      %p340 = por %p338, %p339
      %p341 = scmp.ne.s32.totalorder %s333, %s335
      %p342 = scmp.eq.s32.totalorder %s31, 1
      %p343 = por %p341, %p342
      %p344 = scmp.ne.s32.totalorder %s335, %s336
      %p345 = scmp.eq.s32.totalorder %s31, 0
      %p346 = por %p344, %p345
      %p347 = scmp.ne.s32.totalorder %s335, %s336
      %p348 = scmp.eq.s32.totalorder %s32, 1
      %p349 = por %p347, %p348
      %p351 = scmp.ne.s32.totalorder %s336, %s350
      %p352 = scmp.eq.s32.totalorder %s32, 0
      %p353 = por %p351, %p352
      %s355 = sadd.s32 %s354, 1
      %p358 = scmp.eq.s32.totalorder %s26, 1
      %p359 = scmp.ne.s32.totalorder %s354, %s356
      %p360 = scmp.eq.s32.totalorder %s26, 0
      %p361 = por %p359, %p360
      %p362 = scmp.ne.s32.totalorder %s354, %s356
      %p363 = scmp.eq.s32.totalorder %s31, 1
      %p364 = por %p362, %p363
      %p365 = scmp.ne.s32.totalorder %s356, %s357
      %p366 = scmp.eq.s32.totalorder %s31, 0
      %p367 = por %p365, %p366
      %p368 = scmp.ne.s32.totalorder %s356, %s357
      %p369 = scmp.eq.s32.totalorder %s32, 1
      %p370 = por %p368, %p369
      %p372 = scmp.ne.s32.totalorder %s357, %s371
      %p373 = scmp.eq.s32.totalorder %s32, 0
      %p374 = por %p372, %p373
      %s375 = ssub.s32 %s26, %s33
      %p376 = scmp.eq.s32.totalorder %s375, 0
      %s378 = sadd.s32 %s377, 1
      %s379 = scalar_select %p376, %s377, %s378
      %p382 = pneg %p376
      %p383 = scmp.eq.s32.totalorder %s26, 1
      %p384 = por %p382, %p383
      %p385 = scmp.ne.s32.totalorder %s377, %s380
      %p386 = scmp.eq.s32.totalorder %s26, 0
      %p387 = por %p385, %p386
      %p388 = scmp.ne.s32.totalorder %s377, %s380
      %p389 = scmp.eq.s32.totalorder %s31, 1
      %p390 = por %p388, %p389
      %p391 = scmp.ne.s32.totalorder %s380, %s381
      %p392 = scmp.eq.s32.totalorder %s31, 0
      %p393 = por %p391, %p392
      %p394 = scmp.ne.s32.totalorder %s380, %s381
      %p395 = scmp.eq.s32.totalorder %s32, 1
      %p396 = por %p394, %p395
      %p398 = scmp.ne.s32.totalorder %s381, %s397
      %p399 = scmp.eq.s32.totalorder %s32, 0
      %p400 = por %p398, %p399
      %p401 = scmp.le.s32.totalorder 1, %s26
      %p402 = scmp.lt.s32.totalorder %s26, 3
      %p403 = pnand %p401, %p402
      %p404 = pneg %p403
      // Predicated region
      $region9: #{_lambda_.3} parent=5 // pred_check
        _
      $region10: #{_lambda_.3} parent=5 // pred_check_branch
        %406 = sbr.rel (%p403) target = $region12
      $region11: #{_lambda_.3} parent=5 // pred_region
        %s407 = ssub.s32 %s26, 1
        // Predicated region
        $region13: #{_lambda_.3} parent=11 // pred_check
          %p408 = pneg %p47
        $region14: #{_lambda_.3} parent=11 // pred_check_branch
          %410 = sbr.rel (%p408) target = $region16
        $region15: #{_lambda_.3} parent=11 // pred_region
          %412 = vsyncadd [#allocation5], 0
          %s414 = sshll.u32 %s0, 4
          %s415 = int_to_ptr.vmem [resolvable:$true] %s414
          %417 = dma.vmem_to_smem %s415, 16, [#allocation3], [#allocation5]
        $region16: #{_lambda_.3} parent=11 // pred_fallthru
          _
        // Predicated region
        $region17: #{_lambda_.3} parent=11 // pred_check
          %p418 = pneg %p94
        $region18: #{_lambda_.3} parent=11 // pred_check_branch
          %420 = sbr.rel (%p418) target = $region20
        $region19: #{_lambda_.3} parent=11 // pred_region
          _
        $region20: #{_lambda_.3} parent=11 // pred_fallthru
          _
        // Predicated region
        $region21: #{_lambda_.3} parent=11 // pred_check
          %p421 = pneg %p115
        $region22: #{_lambda_.3} parent=11 // pred_check_branch
          %423 = sbr.rel (%p421) target = $region24
        $region23: #{_lambda_.3} parent=11 // pred_region
          _
        $region24: #{_lambda_.3} parent=11 // pred_fallthru
          _
        // Predicated region
        $region25: #{_lambda_.3} parent=11 // pred_check
          %p424 = pneg %p136
        $region26: #{_lambda_.3} parent=11 // pred_check_branch
          %426 = sbr.rel (%p424) target = $region28
        $region27: #{_lambda_.3} parent=11 // pred_region
          _
        $region28: #{_lambda_.3} parent=11 // pred_fallthru
          _
        // Predicated region
        $region29: #{_lambda_.3} parent=11 // pred_check
          %p427 = pneg %p157
        $region30: #{_lambda_.3} parent=11 // pred_check_branch
          %429 = sbr.rel (%p427) target = $region32
        $region31: #{_lambda_.3} parent=11 // pred_region
          _
        $region32: #{_lambda_.3} parent=11 // pred_fallthru
          _
        // Predicated region
        $region33: #{_lambda_.3} parent=11 // pred_check
          %p430 = pneg %p178
        $region34: #{_lambda_.3} parent=11 // pred_check_branch
          %432 = sbr.rel (%p430) target = $region36
        $region35: #{_lambda_.3} parent=11 // pred_region
          _
        $region36: #{_lambda_.3} parent=11 // pred_fallthru
          _
        // Predicated region
        $region37: #{_lambda_.3} parent=11 // pred_check
          %p433 = pneg %p199
        $region38: #{_lambda_.3} parent=11 // pred_check_branch
          %435 = sbr.rel (%p433) target = $region40
        $region39: #{_lambda_.3} parent=11 // pred_region
          _
        $region40: #{_lambda_.3} parent=11 // pred_fallthru
          _
        // Predicated region
        $region41: #{_lambda_.3} parent=11 // pred_check
          %p436 = pneg %p220
        $region42: #{_lambda_.3} parent=11 // pred_check_branch
          %438 = sbr.rel (%p436) target = $region44
        $region43: #{_lambda_.3} parent=11 // pred_region
          _
        $region44: #{_lambda_.3} parent=11 // pred_fallthru
          _
        // Predicated region
        $region45: #{_lambda_.3} parent=11 // pred_check
          %p439 = pneg %p241
        $region46: #{_lambda_.3} parent=11 // pred_check_branch
          %441 = sbr.rel (%p439) target = $region48
        $region47: #{_lambda_.3} parent=11 // pred_region
          _
        $region48: #{_lambda_.3} parent=11 // pred_fallthru
          _
        // Predicated region
        $region49: #{_lambda_.3} parent=11 // pred_check
          %p442 = pneg %p262
        $region50: #{_lambda_.3} parent=11 // pred_check_branch
          %444 = sbr.rel (%p442) target = $region52
        $region51: #{_lambda_.3} parent=11 // pred_region
          _
        $region52: #{_lambda_.3} parent=11 // pred_fallthru
          _
        // Predicated region
        $region53: #{_lambda_.3} parent=11 // pred_check
          %p445 = pneg %p283
        $region54: #{_lambda_.3} parent=11 // pred_check_branch
          %447 = sbr.rel (%p445) target = $region56
        $region55: #{_lambda_.3} parent=11 // pred_region
          _
        $region56: #{_lambda_.3} parent=11 // pred_fallthru
          _
        // Predicated region
        $region57: #{_lambda_.3} parent=11 // pred_check
          %p448 = pneg %p304
        $region58: #{_lambda_.3} parent=11 // pred_check_branch
          %450 = sbr.rel (%p448) target = $region60
        $region59: #{_lambda_.3} parent=11 // pred_region
          _
        $region60: #{_lambda_.3} parent=11 // pred_fallthru
          _
        // Predicated region
        $region61: #{_lambda_.3} parent=11 // pred_check
          %p451 = pneg %p325
        $region62: #{_lambda_.3} parent=11 // pred_check_branch
          %453 = sbr.rel (%p451) target = $region64
        $region63: #{_lambda_.3} parent=11 // pred_region
          _
        $region64: #{_lambda_.3} parent=11 // pred_fallthru
          _
        // Predicated region
        $region65: #{_lambda_.3} parent=11 // pred_check
          %p454 = pneg %p346
        $region66: #{_lambda_.3} parent=11 // pred_check_branch
          %456 = sbr.rel (%p454) target = $region68
        $region67: #{_lambda_.3} parent=11 // pred_region
          _
        $region68: #{_lambda_.3} parent=11 // pred_fallthru
          _
        // Predicated region
        $region69: #{_lambda_.3} parent=11 // pred_check
          %p457 = pneg %p367
        $region70: #{_lambda_.3} parent=11 // pred_check_branch
          %459 = sbr.rel (%p457) target = $region72
        $region71: #{_lambda_.3} parent=11 // pred_region
          _
        $region72: #{_lambda_.3} parent=11 // pred_fallthru
          _
      $region12: #{_lambda_.3} parent=5 // pred_fallthru
        _
      %p460 = scmp.lt.s32.totalorder %s26, 2
      // Predicated region
      $region73: #{_lambda_.3} parent=5 // pred_check
        %p461 = pneg %p460
      $region74: #{_lambda_.3} parent=5 // pred_check_branch
        %463 = sbr.rel (%p461) target = $region76
      $region75: #{_lambda_.3} parent=5 // pred_region
        // Predicated region
        $region77: #{_lambda_.3} parent=75 // pred_check
          %p464 = pneg %p67
        $region78: #{_lambda_.3} parent=75 // pred_check_branch
          %466 = sbr.rel (%p464) target = $region80
        $region79: #{_lambda_.3} parent=75 // pred_region
          %p467 = scmp.lt.s32.totalorder %s26, 1
          %s468 = scalar_select %p467, %s26, 1
          %s469 = smul.addr %s468, 8
          %s470 = scalar_lea.vmem %s1, %s469
        $region80: #{_lambda_.3} parent=75 // pred_fallthru
          _
      $region76: #{_lambda_.3} parent=5 // pred_fallthru
        _
      %p471 = scmp.le.s32.totalorder 1, %s26
      %p472 = scmp.lt.s32.totalorder %s26, 3
      %p473 = pnand %p471, %p472
      %p474 = pneg %p473
      // Predicated region
      $region81: #{_lambda_.3} parent=5 // pred_check
        _
      $region82: #{_lambda_.3} parent=5 // pred_check_branch
        %476 = sbr.rel (%p473) target = $region84
      $region83: #{_lambda_.3} parent=5 // pred_region
        %s477 = ssub.s32 %s26, 1
        // Predicated region
        $region85: #{_lambda_.3} parent=83 // pred_check
          %p478 = pneg %p47
        $region86: #{_lambda_.3} parent=83 // pred_check_branch
          %480 = sbr.rel (%p478) target = $region88
        $region87: #{_lambda_.3} parent=83 // pred_region
          %482 = dma.done [#allocation5], 16
        $region88: #{_lambda_.3} parent=83 // pred_fallthru
          _
        %483 = sfence
        %p484 = pneg %p47
        %p485 = pneg %p44
        %p486 = scmp.lt.s32.totalorder %s31, 1
        %s487 = scalar_select %p486, %s31, 1
        %s488 = smul.addr %s487, 8
        %s489 = scalar_lea.vmem %s1, %s488
        %p490 = pneg %p73
        %p491 = pneg %p70
        %p492 = pneg %p94
        %p493 = pneg %p91
        %p494 = pneg %p115
        %p495 = pneg %p112
        %p496 = pneg %p136
        %p497 = pneg %p133
        %p498 = pneg %p157
        %p499 = pneg %p154
        %p500 = pneg %p178
        %p501 = pneg %p175
        %p502 = pneg %p199
        %p503 = pneg %p196
        %p504 = pneg %p220
        %p505 = pneg %p217
        %p506 = pneg %p241
        %p507 = pneg %p238
        %p508 = pneg %p262
        %p509 = pneg %p259
        %p510 = pneg %p283
        %p511 = pneg %p280
        %p512 = pneg %p304
        %p513 = pneg %p301
        %p514 = pneg %p325
        %p515 = pneg %p322
        %p516 = pneg %p346
        %p517 = pneg %p343
        %p518 = pneg %p367
        %p519 = pneg %p364
        %p520 = pneg %p393
        %p521 = pneg %p390
        %s522 = sand.u32 %s380, 1
        %s523 = scalar_lea.sflag [#allocation4], %s522
        %s524 = sand.u32 %s380, 1
        %s525 = smul.addr %s524, 8
        %s526 = scalar_lea.vmem [#allocation6], %s525
        %p527 = scmp.lt.s32.totalorder %s31, 1
        %s528 = scalar_select %p527, %s31, 1
        %s529 = smul.addr %s528, 8
        %s530 = scalar_lea.vmem %s1, %s529
        %v531 = vld [vmem:[%s530] sm:$0xff]
        %v532 = vld [vmem:[%s3] sm:$0xf]
        %v533 = vld [vmem:[%s4] sm:$0x1]
        %v535 = vperm.slane %v533, 0
        %vm537 = vcmask 31744
        %v539 = vsel %vm537, %v531, 0
        %vm541 = vcmask 1043456
        %v543 = vsel %vm541, %v532, 0
        %545 = vmatpush.msra.mxu0 0.0
        %546 = vmatpush.msra.mxu0 0.0
        %547 = vmatpush.msra.mxu0 0.0
        %548 = vmatpush.msra.mxu0 0.0
        %549 = vmatpush.msra.mxu0 0.0
        %550 = vmatpush.msra.mxu0 0.0
        %551 = vmatpush.msra.mxu0 0.0
        %552 = vmatpush.msra.mxu0 0.0
        %553 = vmatpush.msra.mxu0 0.0
        %554 = vmatpush.msra.mxu0 0.0
        %555 = vmatpush.msra.mxu0 0.0
        %556 = vmatpush.msra.mxu0 0.0
        %557 = vmatpush.msra.mxu0 0.0
        %558 = vmatpush.msra.mxu0 0.0
        %559 = vmatpush.msra.mxu0 0.0
        %560 = vmatpush.msra.mxu0 %v543
        %561 = vmatmul.f32.gmra.mxu0 %v539
        %v562 = vpop.f32.mrf.mxu0
        %v563 = vadd.f32 %v535, %v562
        %564 = vdwg.mxu0
        %s565 = smul.u32 %s31, 4
        %s566 = sld [smem:[#allocation3 + %s565]]
        %v567 = vstv %s566
        %v568 = vmul.f32 %v567, %v563
        %s569 = scalar_lea.vmem %s3, 4
        %v570 = vld [vmem:[%s569] sm:$0xf]
        %s571 = scalar_lea.vmem %s4, 1
        %v572 = vld [vmem:[%s571] sm:$0x1]
        %v574 = vperm.slane %v572, 0
        %v577 = vsel %vm541, %v570, 0
        %579 = vmatpush.msra.mxu0 0.0
        %580 = vmatpush.msra.mxu0 0.0
        %581 = vmatpush.msra.mxu0 0.0
        %582 = vmatpush.msra.mxu0 0.0
        %583 = vmatpush.msra.mxu0 0.0
        %584 = vmatpush.msra.mxu0 0.0
        %585 = vmatpush.msra.mxu0 0.0
        %586 = vmatpush.msra.mxu0 0.0
        %587 = vmatpush.msra.mxu0 0.0
        %588 = vmatpush.msra.mxu0 0.0
        %589 = vmatpush.msra.mxu0 0.0
        %590 = vmatpush.msra.mxu0 0.0
        %591 = vmatpush.msra.mxu0 0.0
        %592 = vmatpush.msra.mxu0 0.0
        %593 = vmatpush.msra.mxu0 0.0
        %594 = vmatpush.msra.mxu0 %v577
        %595 = vmatmul.f32.gmra.mxu0 %v539
        %v596 = vpop.f32.mrf.mxu0
        %v597 = vadd.f32 %v574, %v596
        %598 = vdwg.mxu0
        %s599 = sadd.s32 %s565, 1
        %s600 = sld [smem:[#allocation3 + %s599]]
        %v601 = vstv %s600
        %v602 = vmul.f32 %v601, %v597
        %v603 = vadd.f32 %v568, %v602
        %s604 = scalar_lea.vmem %s3, 8
        %v605 = vld [vmem:[%s604] sm:$0xf]
        %s606 = scalar_lea.vmem %s4, 2
        %v607 = vld [vmem:[%s606] sm:$0x1]
        %v609 = vperm.slane %v607, 0
        %v612 = vsel %vm541, %v605, 0
        %614 = vmatpush.msra.mxu0 0.0
        %615 = vmatpush.msra.mxu0 0.0
        %616 = vmatpush.msra.mxu0 0.0
        %617 = vmatpush.msra.mxu0 0.0
        %618 = vmatpush.msra.mxu0 0.0
        %619 = vmatpush.msra.mxu0 0.0
        %620 = vmatpush.msra.mxu0 0.0
        %621 = vmatpush.msra.mxu0 0.0
        %622 = vmatpush.msra.mxu0 0.0
        %623 = vmatpush.msra.mxu0 0.0
        %624 = vmatpush.msra.mxu0 0.0
        %625 = vmatpush.msra.mxu0 0.0
        %626 = vmatpush.msra.mxu0 0.0
        %627 = vmatpush.msra.mxu0 0.0
        %628 = vmatpush.msra.mxu0 0.0
        %629 = vmatpush.msra.mxu0 %v612
        %630 = vmatmul.f32.gmra.mxu0 %v539
        %v631 = vpop.f32.mrf.mxu0
        %v632 = vadd.f32 %v609, %v631
        %633 = vdwg.mxu0
        %s634 = sadd.s32 %s565, 2
        %s635 = sld [smem:[#allocation3 + %s634]]
        %v636 = vstv %s635
        %v637 = vmul.f32 %v636, %v632
        %v638 = vadd.f32 %v603, %v637
        %s639 = scalar_lea.vmem %s3, 12
        %v640 = vld [vmem:[%s639] sm:$0xf]
        %s641 = scalar_lea.vmem %s4, 3
        %v642 = vld [vmem:[%s641] sm:$0x1]
        %v644 = vperm.slane %v642, 0
        %v647 = vsel %vm541, %v640, 0
        %649 = vmatpush.msra.mxu0 0.0
        %650 = vmatpush.msra.mxu0 0.0
        %651 = vmatpush.msra.mxu0 0.0
        %652 = vmatpush.msra.mxu0 0.0
        %653 = vmatpush.msra.mxu0 0.0
        %654 = vmatpush.msra.mxu0 0.0
        %655 = vmatpush.msra.mxu0 0.0
        %656 = vmatpush.msra.mxu0 0.0
        %657 = vmatpush.msra.mxu0 0.0
        %658 = vmatpush.msra.mxu0 0.0
        %659 = vmatpush.msra.mxu0 0.0
        %660 = vmatpush.msra.mxu0 0.0
        %661 = vmatpush.msra.mxu0 0.0
        %662 = vmatpush.msra.mxu0 0.0
        %663 = vmatpush.msra.mxu0 0.0
        %664 = vmatpush.msra.mxu0 %v647
        %665 = vmatmul.f32.gmra.mxu0 %v539
        %v666 = vpop.f32.mrf.mxu0
        %v667 = vadd.f32 %v644, %v666
        %668 = vdwg.mxu0
        %s669 = sadd.s32 %s565, 3
        %s670 = sld [smem:[#allocation3 + %s669]]
        %v671 = vstv %s670
        %v672 = vmul.f32 %v671, %v667
        %v673 = vadd.f32 %v638, %v672
        %vm674 = vcmask 261120
        %675 = vst.msk [vmem:[#allocation2] sm:$0xff] %vm674, %v673
        %s676 = scalar_lea.vmem %s2, %s31
        %v677 = vld [vmem:[%s676] sm:$0x1]
        %vm678 = vcmask 253952
        %679 = vst.msk [vmem:[#allocation2 + $0x8] sm:$0x1] %vm678, %v677
        %v680 = vld [vmem:[#allocation2] sm:$0xff]
        %v681 = vld [vmem:[#allocation2 + $0x8] sm:$0x1]
        %v682 = vld [vmem:[%s5] sm:$0xff]
        %v683 = vld [vmem:[%s5 + $0x8] sm:$0xff]
        %v684 = vld [vmem:[%s5 + $0x10] sm:$0xff]
        %v685 = vld [vmem:[%s5 + $0x18] sm:$0xff]
        %v687 = vsel %vm674, %v680, 0
        %v690 = vsel %vm674, %v681, 0
        %692 = vmatpush.msra.mxu0 0.0
        %693 = vmatpush.msra.mxu0 0.0
        %694 = vmatpush.msra.mxu0 0.0
        %695 = vmatpush.msra.mxu0 0.0
        %696 = vmatpush.msra.mxu0 0.0
        %697 = vmatpush.msra.mxu0 0.0
        %698 = vmatpush.msra.mxu0 0.0
        %699 = vmatpush.msra.mxu0 0.0
        %700 = vmatpush.msra.mxu0 0.0
        %701 = vmatpush.msra.mxu0 0.0
        %702 = vmatpush.msra.mxu0 0.0
        %703 = vmatpush.msra.mxu0 0.0
        %704 = vmatpush.msra.mxu0 %v685
        %705 = vmatpush.msra.mxu0 %v684
        %706 = vmatpush.msra.mxu0 %v683
        %707 = vmatpush.msra.mxu0 %v682
        %708 = vmatmul.f32.gmra.mxu0 %v687
        %v709 = vpop.f32.mrf.mxu0
        %v710 = vadd.f32 0.0, %v709
        %711 = vmatmul.f32.gmra.mxu0 %v690
        %v712 = vpop.f32.mrf.mxu0
        %v713 = vadd.f32 0.0, %v712
        %714 = vdwg.mxu0
        %717 = vrot.lane.b32.xlu0 %v710, 96
        %v718 = vpop.permute.xlu0 %717
        %719 = vrot.lane.b32.xlu0 %v713, 96
        %v720 = vpop.permute.xlu0 %719
        %vm721 = vcmask 64512
        %v722 = vsel %vm721, %v710, 0
        %v724 = vsel %vm721, %v713, 0
        %v726 = vsel %vm721, %v718, 0
        %v728 = vsel %vm721, %v720, 0
        %730 = vmatpush.xpose.msra.mxu0 0.0
        %731 = vmatpush.xpose.msra.mxu0 0.0
        %732 = vmatpush.xpose.msra.mxu0 0.0
        %733 = vmatpush.xpose.msra.mxu0 0.0
        %734 = vmatpush.xpose.msra.mxu0 0.0
        %735 = vmatpush.xpose.msra.mxu0 0.0
        %736 = vmatpush.xpose.msra.mxu0 0.0
        %737 = vmatpush.xpose.msra.mxu0 0.0
        %738 = vmatpush.xpose.msra.mxu0 0.0
        %739 = vmatpush.xpose.msra.mxu0 0.0
        %740 = vmatpush.xpose.msra.mxu0 0.0
        %741 = vmatpush.xpose.msra.mxu0 0.0
        %742 = vmatpush.xpose.msra.mxu0 0.0
        %743 = vmatpush.xpose.msra.mxu0 0.0
        %744 = vmatpush.xpose.msra.mxu0 %v728
        %745 = vmatpush.xpose.msra.mxu0 %v726
        %746 = vmatmul.f32.gmra.mxu0 %v722
        %v747 = vpop.f32.mrf.mxu0
        %v748 = vadd.f32 0.0, %v747
        %749 = vmatmul.f32.gmra.mxu0 %v724
        %v750 = vpop.f32.mrf.mxu0
        %v751 = vadd.f32 0.0, %v750
        %752 = vdwg.mxu0
        %v753 = vmul.f32 %v748, 0.35355338
        %v754 = vmul.f32 %v751, 0.35355338
        %vm755 = vcmask 72704
        %v756 = vsel %vm755, %v753, -inf
        %757 = vmax.xlane.f32.xlu0 %v756
        %v758 = vpop.xlane.xlu0 %757
        %vm759 = vcmask 65536
        %v760 = vsel %vm759, %v754, -inf
        %761 = vmax.xlane.f32.xlu0 %v760
        %v762 = vpop.xlane.xlu0 %761
        %v763 = vsub.f32 %v753, %v758
        %v764 = vsub.f32 %v754, %v762
        %v765 = vmul.f32 %v763, 1.442695
        %v766 = vpow.pop %v765
        %v767 = vmul.f32 %v764, 1.442695
        %v768 = vpow.pop %v767
        %v769 = vsel %vm755, %v766, 0.0
        %770 = vadd.xlane.f32.xlu0 %v769
        %v771 = vpop.xlane.xlu0 %770
        %v772 = vsel %vm759, %v768, 0.0
        %773 = vadd.xlane.f32.xlu0 %v772
        %v774 = vpop.xlane.xlu0 %773
        %v775 = vrcp.pop %v771
        %v776 = vrcp.pop %v774
        %v777 = vmul.f32 %v766, %v775
        %v778 = vmul.f32 %v768, %v776
        %779 = vrot.lane.b32.xlu0 %v710, 64
        %v780 = vpop.permute.xlu0 %779
        %781 = vrot.lane.b32.xlu0 %v713, 64
        %v782 = vpop.permute.xlu0 %781
        %v785 = vsel %vm755, %v777, 0
        %v788 = vsel %vm755, %v778, 0
        %vm790 = vcmask 1040384
        %v791 = vsel %vm790, %v782, 0
        %793 = vmatpush.msra.mxu0 0.0
        %794 = vmatpush.msra.mxu0 0.0
        %795 = vmatpush.msra.mxu0 0.0
        %796 = vmatpush.msra.mxu0 0.0
        %797 = vmatpush.msra.mxu0 0.0
        %798 = vmatpush.msra.mxu0 0.0
        %799 = vmatpush.msra.mxu0 0.0
        %800 = vmatpush.msra.mxu0 0.0
        %801 = vmatpush.msra.mxu0 0.0
        %802 = vmatpush.msra.mxu0 0.0
        %803 = vmatpush.msra.mxu0 0.0
        %804 = vmatpush.msra.mxu0 0.0
        %805 = vmatpush.msra.mxu0 0.0
        %806 = vmatpush.msra.mxu0 0.0
        %807 = vmatpush.msra.mxu0 %v791
        %808 = vmatpush.msra.mxu0 %v780
        %809 = vmatmul.f32.gmra.mxu0 %v785
        %v810 = vpop.f32.mrf.mxu0
        %v811 = vadd.f32 0.0, %v810
        %812 = vmatmul.f32.gmra.mxu0 %v788
        %v813 = vpop.f32.mrf.mxu0
        %v814 = vadd.f32 0.0, %v813
        %815 = vdwg.mxu0
        %816 = vrot.lane.b32.xlu0 %v710, 120
        %v817 = vpop.permute.xlu0 %816
        %818 = vrot.lane.b32.xlu0 %v713, 120
        %v819 = vpop.permute.xlu0 %818
        %820 = vrot.lane.b32.xlu0 %v710, 88
        %v821 = vpop.permute.xlu0 %820
        %822 = vrot.lane.b32.xlu0 %v713, 88
        %v823 = vpop.permute.xlu0 %822
        %v824 = vsel %vm721, %v817, 0
        %v826 = vsel %vm721, %v819, 0
        %v828 = vsel %vm721, %v821, 0
        %v830 = vsel %vm721, %v823, 0
        %832 = vmatpush.xpose.msra.mxu0 0.0
        %833 = vmatpush.xpose.msra.mxu0 0.0
        %834 = vmatpush.xpose.msra.mxu0 0.0
        %835 = vmatpush.xpose.msra.mxu0 0.0
        %836 = vmatpush.xpose.msra.mxu0 0.0
        %837 = vmatpush.xpose.msra.mxu0 0.0
        %838 = vmatpush.xpose.msra.mxu0 0.0
        %839 = vmatpush.xpose.msra.mxu0 0.0
        %840 = vmatpush.xpose.msra.mxu0 0.0
        %841 = vmatpush.xpose.msra.mxu0 0.0
        %842 = vmatpush.xpose.msra.mxu0 0.0
        %843 = vmatpush.xpose.msra.mxu0 0.0
        %844 = vmatpush.xpose.msra.mxu0 0.0
        %845 = vmatpush.xpose.msra.mxu0 0.0
        %846 = vmatpush.xpose.msra.mxu0 %v830
        %847 = vmatpush.xpose.msra.mxu0 %v828
        %848 = vmatmul.f32.gmra.mxu0 %v824
        %v849 = vpop.f32.mrf.mxu0
        %v850 = vadd.f32 0.0, %v849
        %851 = vmatmul.f32.gmra.mxu0 %v826
        %v852 = vpop.f32.mrf.mxu0
        %v853 = vadd.f32 0.0, %v852
        %854 = vdwg.mxu0
        %v855 = vmul.f32 %v850, 0.35355338
        %v856 = vmul.f32 %v853, 0.35355338
        %v857 = vsel %vm755, %v855, -inf
        %858 = vmax.xlane.f32.xlu0 %v857
        %v859 = vpop.xlane.xlu0 %858
        %v860 = vsel %vm759, %v856, -inf
        %861 = vmax.xlane.f32.xlu0 %v860
        %v862 = vpop.xlane.xlu0 %861
        %v863 = vsub.f32 %v855, %v859
        %v864 = vsub.f32 %v856, %v862
        %v865 = vmul.f32 %v863, 1.442695
        %v866 = vpow.pop %v865
        %v867 = vmul.f32 %v864, 1.442695
        %v868 = vpow.pop %v867
        %v869 = vsel %vm755, %v866, 0.0
        %870 = vadd.xlane.f32.xlu0 %v869
        %v871 = vpop.xlane.xlu0 %870
        %v872 = vsel %vm759, %v868, 0.0
        %873 = vadd.xlane.f32.xlu0 %v872
        %v874 = vpop.xlane.xlu0 %873
        %v875 = vrcp.pop %v871
        %v876 = vrcp.pop %v874
        %v877 = vmul.f32 %v866, %v875
        %v878 = vmul.f32 %v868, %v876
        %879 = vrot.lane.b32.xlu0 %v710, 56
        %v880 = vpop.permute.xlu0 %879
        %881 = vrot.lane.b32.xlu0 %v713, 56
        %v882 = vpop.permute.xlu0 %881
        %v885 = vsel %vm755, %v877, 0
        %v888 = vsel %vm755, %v878, 0
        %v890 = vsel %vm790, %v882, 0
        %892 = vmatpush.msra.mxu0 0.0
        %893 = vmatpush.msra.mxu0 0.0
        %894 = vmatpush.msra.mxu0 0.0
        %895 = vmatpush.msra.mxu0 0.0
        %896 = vmatpush.msra.mxu0 0.0
        %897 = vmatpush.msra.mxu0 0.0
        %898 = vmatpush.msra.mxu0 0.0
        %899 = vmatpush.msra.mxu0 0.0
        %900 = vmatpush.msra.mxu0 0.0
        %901 = vmatpush.msra.mxu0 0.0
        %902 = vmatpush.msra.mxu0 0.0
        %903 = vmatpush.msra.mxu0 0.0
        %904 = vmatpush.msra.mxu0 0.0
        %905 = vmatpush.msra.mxu0 0.0
        %906 = vmatpush.msra.mxu0 %v890
        %907 = vmatpush.msra.mxu0 %v880
        %908 = vmatmul.f32.gmra.mxu0 %v885
        %v909 = vpop.f32.mrf.mxu0
        %v910 = vadd.f32 0.0, %v909
        %911 = vmatmul.f32.gmra.mxu0 %v888
        %v912 = vpop.f32.mrf.mxu0
        %v913 = vadd.f32 0.0, %v912
        %914 = vdwg.mxu0
        %915 = vrot.lane.b32.xlu0 %v710, 112
        %v916 = vpop.permute.xlu0 %915
        %917 = vrot.lane.b32.xlu0 %v713, 112
        %v918 = vpop.permute.xlu0 %917
        %919 = vrot.lane.b32.xlu0 %v710, 80
        %v920 = vpop.permute.xlu0 %919
        %921 = vrot.lane.b32.xlu0 %v713, 80
        %v922 = vpop.permute.xlu0 %921
        %v923 = vsel %vm721, %v916, 0
        %v925 = vsel %vm721, %v918, 0
        %v927 = vsel %vm721, %v920, 0
        %v929 = vsel %vm721, %v922, 0
        %931 = vmatpush.xpose.msra.mxu0 0.0
        %932 = vmatpush.xpose.msra.mxu0 0.0
        %933 = vmatpush.xpose.msra.mxu0 0.0
        %934 = vmatpush.xpose.msra.mxu0 0.0
        %935 = vmatpush.xpose.msra.mxu0 0.0
        %936 = vmatpush.xpose.msra.mxu0 0.0
        %937 = vmatpush.xpose.msra.mxu0 0.0
        %938 = vmatpush.xpose.msra.mxu0 0.0
        %939 = vmatpush.xpose.msra.mxu0 0.0
        %940 = vmatpush.xpose.msra.mxu0 0.0
        %941 = vmatpush.xpose.msra.mxu0 0.0
        %942 = vmatpush.xpose.msra.mxu0 0.0
        %943 = vmatpush.xpose.msra.mxu0 0.0
        %944 = vmatpush.xpose.msra.mxu0 0.0
        %945 = vmatpush.xpose.msra.mxu0 %v929
        %946 = vmatpush.xpose.msra.mxu0 %v927
        %947 = vmatmul.f32.gmra.mxu0 %v923
        %v948 = vpop.f32.mrf.mxu0
        %v949 = vadd.f32 0.0, %v948
        %950 = vmatmul.f32.gmra.mxu0 %v925
        %v951 = vpop.f32.mrf.mxu0
        %v952 = vadd.f32 0.0, %v951
        %953 = vdwg.mxu0
        %v954 = vmul.f32 %v949, 0.35355338
        %v955 = vmul.f32 %v952, 0.35355338
        %v956 = vsel %vm755, %v954, -inf
        %957 = vmax.xlane.f32.xlu0 %v956
        %v958 = vpop.xlane.xlu0 %957
        %v959 = vsel %vm759, %v955, -inf
        %960 = vmax.xlane.f32.xlu0 %v959
        %v961 = vpop.xlane.xlu0 %960
        %v962 = vsub.f32 %v954, %v958
        %v963 = vsub.f32 %v955, %v961
        %v964 = vmul.f32 %v962, 1.442695
        %v965 = vpow.pop %v964
        %v966 = vmul.f32 %v963, 1.442695
        %v967 = vpow.pop %v966
        %v968 = vsel %vm755, %v965, 0.0
        %969 = vadd.xlane.f32.xlu0 %v968
        %v970 = vpop.xlane.xlu0 %969
        %v971 = vsel %vm759, %v967, 0.0
        %972 = vadd.xlane.f32.xlu0 %v971
        %v973 = vpop.xlane.xlu0 %972
        %v974 = vrcp.pop %v970
        %v975 = vrcp.pop %v973
        %v976 = vmul.f32 %v965, %v974
        %v977 = vmul.f32 %v967, %v975
        %978 = vrot.lane.b32.xlu0 %v710, 48
        %v979 = vpop.permute.xlu0 %978
        %980 = vrot.lane.b32.xlu0 %v713, 48
        %v981 = vpop.permute.xlu0 %980
        %v984 = vsel %vm755, %v976, 0
        %v987 = vsel %vm755, %v977, 0
        %v989 = vsel %vm790, %v981, 0
        %991 = vmatpush.msra.mxu0 0.0
        %992 = vmatpush.msra.mxu0 0.0
        %993 = vmatpush.msra.mxu0 0.0
        %994 = vmatpush.msra.mxu0 0.0
        %995 = vmatpush.msra.mxu0 0.0
        %996 = vmatpush.msra.mxu0 0.0
        %997 = vmatpush.msra.mxu0 0.0
        %998 = vmatpush.msra.mxu0 0.0
        %999 = vmatpush.msra.mxu0 0.0
        %1000 = vmatpush.msra.mxu0 0.0
        %1001 = vmatpush.msra.mxu0 0.0
        %1002 = vmatpush.msra.mxu0 0.0
        %1003 = vmatpush.msra.mxu0 0.0
        %1004 = vmatpush.msra.mxu0 0.0
        %1005 = vmatpush.msra.mxu0 %v989
        %1006 = vmatpush.msra.mxu0 %v979
        %1007 = vmatmul.f32.gmra.mxu0 %v984
        %v1008 = vpop.f32.mrf.mxu0
        %v1009 = vadd.f32 0.0, %v1008
        %1010 = vmatmul.f32.gmra.mxu0 %v987
        %v1011 = vpop.f32.mrf.mxu0
        %v1012 = vadd.f32 0.0, %v1011
        %1013 = vdwg.mxu0
        %1014 = vrot.lane.b32.xlu0 %v710, 104
        %v1015 = vpop.permute.xlu0 %1014
        %1016 = vrot.lane.b32.xlu0 %v713, 104
        %v1017 = vpop.permute.xlu0 %1016
        %1018 = vrot.lane.b32.xlu0 %v710, 72
        %v1019 = vpop.permute.xlu0 %1018
        %1020 = vrot.lane.b32.xlu0 %v713, 72
        %v1021 = vpop.permute.xlu0 %1020
        %v1022 = vsel %vm721, %v1015, 0
        %v1024 = vsel %vm721, %v1017, 0
        %v1026 = vsel %vm721, %v1019, 0
        %v1028 = vsel %vm721, %v1021, 0
        %1030 = vmatpush.xpose.msra.mxu0 0.0
        %1031 = vmatpush.xpose.msra.mxu0 0.0
        %1032 = vmatpush.xpose.msra.mxu0 0.0
        %1033 = vmatpush.xpose.msra.mxu0 0.0
        %1034 = vmatpush.xpose.msra.mxu0 0.0
        %1035 = vmatpush.xpose.msra.mxu0 0.0
        %1036 = vmatpush.xpose.msra.mxu0 0.0
        %1037 = vmatpush.xpose.msra.mxu0 0.0
        %1038 = vmatpush.xpose.msra.mxu0 0.0
        %1039 = vmatpush.xpose.msra.mxu0 0.0
        %1040 = vmatpush.xpose.msra.mxu0 0.0
        %1041 = vmatpush.xpose.msra.mxu0 0.0
        %1042 = vmatpush.xpose.msra.mxu0 0.0
        %1043 = vmatpush.xpose.msra.mxu0 0.0
        %1044 = vmatpush.xpose.msra.mxu0 %v1028
        %1045 = vmatpush.xpose.msra.mxu0 %v1026
        %1046 = vmatmul.f32.gmra.mxu0 %v1022
        %v1047 = vpop.f32.mrf.mxu0
        %v1048 = vadd.f32 0.0, %v1047
        %1049 = vmatmul.f32.gmra.mxu0 %v1024
        %v1050 = vpop.f32.mrf.mxu0
        %v1051 = vadd.f32 0.0, %v1050
        %1052 = vdwg.mxu0
        %v1053 = vmul.f32 %v1048, 0.35355338
        %v1054 = vmul.f32 %v1051, 0.35355338
        %v1055 = vsel %vm755, %v1053, -inf
        %1056 = vmax.xlane.f32.xlu0 %v1055
        %v1057 = vpop.xlane.xlu0 %1056
        %v1058 = vsel %vm759, %v1054, -inf
        %1059 = vmax.xlane.f32.xlu0 %v1058
        %v1060 = vpop.xlane.xlu0 %1059
        %v1061 = vsub.f32 %v1053, %v1057
        %v1062 = vsub.f32 %v1054, %v1060
        %v1063 = vmul.f32 %v1061, 1.442695
        %v1064 = vpow.pop %v1063
        %v1065 = vmul.f32 %v1062, 1.442695
        %v1066 = vpow.pop %v1065
        %v1067 = vsel %vm755, %v1064, 0.0
        %1068 = vadd.xlane.f32.xlu0 %v1067
        %v1069 = vpop.xlane.xlu0 %1068
        %v1070 = vsel %vm759, %v1066, 0.0
        %1071 = vadd.xlane.f32.xlu0 %v1070
        %v1072 = vpop.xlane.xlu0 %1071
        %v1073 = vrcp.pop %v1069
        %v1074 = vrcp.pop %v1072
        %v1075 = vmul.f32 %v1064, %v1073
        %v1076 = vmul.f32 %v1066, %v1074
        %1077 = vrot.lane.b32.xlu0 %v710, 40
        %v1078 = vpop.permute.xlu0 %1077
        %1079 = vrot.lane.b32.xlu0 %v713, 40
        %v1080 = vpop.permute.xlu0 %1079
        %v1083 = vsel %vm755, %v1075, 0
        %v1086 = vsel %vm755, %v1076, 0
        %v1088 = vsel %vm790, %v1080, 0
        %1090 = vmatpush.msra.mxu0 0.0
        %1091 = vmatpush.msra.mxu0 0.0
        %1092 = vmatpush.msra.mxu0 0.0
        %1093 = vmatpush.msra.mxu0 0.0
        %1094 = vmatpush.msra.mxu0 0.0
        %1095 = vmatpush.msra.mxu0 0.0
        %1096 = vmatpush.msra.mxu0 0.0
        %1097 = vmatpush.msra.mxu0 0.0
        %1098 = vmatpush.msra.mxu0 0.0
        %1099 = vmatpush.msra.mxu0 0.0
        %1100 = vmatpush.msra.mxu0 0.0
        %1101 = vmatpush.msra.mxu0 0.0
        %1102 = vmatpush.msra.mxu0 0.0
        %1103 = vmatpush.msra.mxu0 0.0
        %1104 = vmatpush.msra.mxu0 %v1088
        %1105 = vmatpush.msra.mxu0 %v1078
        %1106 = vmatmul.f32.gmra.mxu0 %v1083
        %v1107 = vpop.f32.mrf.mxu0
        %v1108 = vadd.f32 0.0, %v1107
        %1109 = vmatmul.f32.gmra.mxu0 %v1086
        %v1110 = vpop.f32.mrf.mxu0
        %v1111 = vadd.f32 0.0, %v1110
        %1112 = vdwg.mxu0
        %1115 = vrot.lane.b32.xlu0 %v910, 8
        %v1116 = vpop.permute.xlu0 %1115
        %1117 = vrot.lane.b32.xlu0 %v913, 8
        %v1118 = vpop.permute.xlu0 %1117
        %1123 = vrot.lane.b32.xlu0 %v1009, 16
        %v1124 = vpop.permute.xlu0 %1123
        %1125 = vrot.lane.b32.xlu0 %v1012, 16
        %v1126 = vpop.permute.xlu0 %1125
        %1131 = vrot.lane.b32.xlu0 %v1108, 24
        %v1132 = vpop.permute.xlu0 %1131
        %1133 = vrot.lane.b32.xlu0 %v1111, 24
        %v1134 = vpop.permute.xlu0 %1133
        %v1137 = vsel %vm721, %v811, %v1116
        %v1138 = vsel %vm721, %v814, %v1118
        %vm1139 = vcmask 130048
        %v1140 = vsel %vm1139, %v1137, %v1124
        %v1141 = vsel %vm1139, %v1138, %v1126
        %vm1142 = vcmask 195584
        %v1143 = vsel %vm1142, %v1140, %v1132
        %v1144 = vsel %vm1142, %v1141, %v1134
        %v1145 = vlaneseq
        %v1146 = vshrl.u32 %v1145, 7
        %v1147 = vadd.s32 %v1146, 8
        %vm1148 = vcmp.lt.s32.totalorder %v1146, 8
        %vm1149 = vcmp.lt.s32.totalorder %v1147, 8
        %v1150 = vsel %vm1148, 1, 0
        %v1151 = vsel %vm1149, 1, 0
        %v1152 = vcvt.s32.f32 %v1150
        %v1153 = vcvt.s32.f32 %v1151
        %v1154 = vperm.slane %v713, 0
        %v1155 = vmul.f32 %v1152, %v1154
        %v1156 = vmul.f32 %v1153, %v1154
        %1159 = vrot.lane.b32.xlu0 %v1155, 32
        %v1160 = vpop.permute.xlu0 %1159
        %1161 = vrot.lane.b32.xlu0 %v1156, 32
        %v1162 = vpop.permute.xlu0 %1161
        %v1165 = vadd.f32 %v1143, %v1160
        %v1166 = vadd.f32 %v1144, %v1162
        %v1167 = vld [vmem:[%s6] sm:$0xff]
        %v1168 = vld [vmem:[%s6 + $0x8] sm:$0xff]
        %v1169 = vld [vmem:[%s6 + $0x10] sm:$0xff]
        %v1170 = vld [vmem:[%s6 + $0x18] sm:$0xff]
        %v1171 = vld [vmem:[%s7] sm:$0x1]
        %v1173 = vperm.slane %v1171, 0
        %v1176 = vsel %vm674, %v1165, 0
        %v1179 = vsel %vm674, %v1166, 0
        %1181 = vmatpush.msra.mxu0 0.0
        %1182 = vmatpush.msra.mxu0 0.0
        %1183 = vmatpush.msra.mxu0 0.0
        %1184 = vmatpush.msra.mxu0 0.0
        %1185 = vmatpush.msra.mxu0 0.0
        %1186 = vmatpush.msra.mxu0 0.0
        %1187 = vmatpush.msra.mxu0 0.0
        %1188 = vmatpush.msra.mxu0 0.0
        %1189 = vmatpush.msra.mxu0 0.0
        %1190 = vmatpush.msra.mxu0 0.0
        %1191 = vmatpush.msra.mxu0 0.0
        %1192 = vmatpush.msra.mxu0 0.0
        %1193 = vmatpush.msra.mxu0 %v1170
        %1194 = vmatpush.msra.mxu0 %v1169
        %1195 = vmatpush.msra.mxu0 %v1168
        %1196 = vmatpush.msra.mxu0 %v1167
        %1197 = vmatmul.f32.gmra.mxu0 %v1176
        %v1198 = vpop.f32.mrf.mxu0
        %v1199 = vadd.f32 %v1173, %v1198
        %1200 = vmatmul.f32.gmra.mxu0 %v1179
        %v1201 = vpop.f32.mrf.mxu0
        %v1202 = vadd.f32 %v1173, %v1201
        %1203 = vdwg.mxu0
        %v1204 = vadd.f32 %v680, %v1199
        %v1205 = vadd.f32 %v681, %v1202
        %v1206 = vsel %vm674, %v1204, 0.0
        %v1207 = vsel %vm678, %v1205, 0.0
        %v1208 = vadd.f32 %v1206, %v1207
        %v1209 = vrot.slane %v1208, 4
        %v1210 = vadd.f32 %v1208, %v1209
        %v1211 = vrot.slane %v1210, 2
        %v1212 = vadd.f32 %v1210, %v1211
        %v1213 = vrot.slane %v1212, 1
        %v1214 = vadd.f32 %v1212, %v1213
        %v1215 = vrcp.pop 9.0
        %v1216 = vmul.f32 9.0, %v1215
        %v1217 = vsub.f32 1.0, %v1216
        %v1218 = vmul.f32 %v1215, %v1217
        %v1219 = vadd.f32 %v1215, %v1218
        %vm1220 = vweird.f32 %v1215
        %v1221 = vsel %vm1220, %v1215, %v1219
        %v1222 = vmul.f32 %v1214, %v1221
        %v1223 = vsub.f32 %v1204, %v1222
        %v1224 = vsub.f32 %v1205, %v1222
        %v1225 = vmul.f32 %v1223, %v1223
        %v1226 = vmul.f32 %v1224, %v1224
        %v1227 = vsel %vm674, %v1225, 0.0
        %v1228 = vsel %vm678, %v1226, 0.0
        %v1229 = vadd.f32 %v1227, %v1228
        %v1230 = vrot.slane %v1229, 4
        %v1231 = vadd.f32 %v1229, %v1230
        %v1232 = vrot.slane %v1231, 2
        %v1233 = vadd.f32 %v1231, %v1232
        %v1234 = vrot.slane %v1233, 1
        %v1235 = vadd.f32 %v1233, %v1234
        %v1236 = vmul.f32 %v1235, %v1221
        %v1237 = vadd.f32 %v1236, 1e-05
        %v1238 = vrsqrt.pop %v1237
        %v1239 = vmul.f32 %v1238, %v1237
        %v1240 = vmul.f32 %v1239, %v1238
        %v1241 = vmul.f32 0.5, %v1240
        %v1242 = vsub.f32 1.5, %v1241
        %v1243 = vmul.f32 %v1238, %v1242
        %vm1244 = vweird.f32 %v1237
        %vm1245 = vweird.f32 %v1238
        %vm1246 = vmor %vm1244, %vm1245
        %v1247 = vsel %vm1246, %v1238, %v1243
        %v1248 = vmul.f32 %v1223, %v1247
        %v1249 = vmul.f32 %v1224, %v1247
        %v1250 = vld [vmem:[%s8] sm:$0x1]
        %v1252 = vperm.slane %v1250, 0
        %v1254 = vmul.f32 %v1248, %v1252
        %v1255 = vmul.f32 %v1249, %v1252
        %v1256 = vld [vmem:[%s9] sm:$0x1]
        %v1258 = vperm.slane %v1256, 0
        %v1260 = vadd.f32 %v1254, %v1258
        %v1261 = vadd.f32 %v1255, %v1258
        %v1262 = vld [vmem:[%s10] sm:$0xff]
        %v1263 = vld [vmem:[%s10 + $0x8] sm:$0xff]
        %v1264 = vld [vmem:[%s10 + $0x10] sm:$0xff]
        %v1265 = vld [vmem:[%s10 + $0x18] sm:$0xff]
        %v1266 = vld [vmem:[%s11] sm:$0x1]
        %v1268 = vperm.slane %v1266, 0
        %v1271 = vsel %vm674, %v1260, 0
        %v1274 = vsel %vm674, %v1261, 0
        %1276 = vmatpush.msra.mxu0 0.0
        %1277 = vmatpush.msra.mxu0 0.0
        %1278 = vmatpush.msra.mxu0 0.0
        %1279 = vmatpush.msra.mxu0 0.0
        %1280 = vmatpush.msra.mxu0 0.0
        %1281 = vmatpush.msra.mxu0 0.0
        %1282 = vmatpush.msra.mxu0 0.0
        %1283 = vmatpush.msra.mxu0 0.0
        %1284 = vmatpush.msra.mxu0 0.0
        %1285 = vmatpush.msra.mxu0 0.0
        %1286 = vmatpush.msra.mxu0 0.0
        %1287 = vmatpush.msra.mxu0 0.0
        %1288 = vmatpush.msra.mxu0 %v1265
        %1289 = vmatpush.msra.mxu0 %v1264
        %1290 = vmatpush.msra.mxu0 %v1263
        %1291 = vmatpush.msra.mxu0 %v1262
        %1292 = vmatmul.f32.gmra.mxu0 %v1271
        %v1293 = vpop.f32.mrf.mxu0
        %v1294 = vadd.f32 %v1268, %v1293
        %1295 = vmatmul.f32.gmra.mxu0 %v1274
        %v1296 = vpop.f32.mrf.mxu0
        %v1297 = vadd.f32 %v1268, %v1296
        %1298 = vdwg.mxu0
        %v1299 = vmax.f32 %v1294, 0.0
        %v1300 = vmax.f32 %v1297, 0.0
        %v1301 = vld [vmem:[%s12] sm:$0xff]
        %v1302 = vld [vmem:[%s12 + $0x8] sm:$0xff]
        %v1303 = vld [vmem:[%s12 + $0x10] sm:$0xff]
        %v1304 = vld [vmem:[%s12 + $0x18] sm:$0xff]
        %v1305 = vld [vmem:[%s12 + $0x20] sm:$0xff]
        %v1306 = vld [vmem:[%s12 + $0x28] sm:$0xff]
        %v1307 = vld [vmem:[%s12 + $0x30] sm:$0xff]
        %v1308 = vld [vmem:[%s12 + $0x38] sm:$0xff]
        %v1309 = vld [vmem:[%s13] sm:$0x1]
        %v1311 = vperm.slane %v1309, 0
        %vm1313 = vcmask 523264
        %v1315 = vsel %vm1313, %v1299, 0
        %v1318 = vsel %vm1313, %v1300, 0
        %1320 = vmatpush.msra.mxu0 0.0
        %1321 = vmatpush.msra.mxu0 0.0
        %1322 = vmatpush.msra.mxu0 0.0
        %1323 = vmatpush.msra.mxu0 0.0
        %1324 = vmatpush.msra.mxu0 0.0
        %1325 = vmatpush.msra.mxu0 0.0
        %1326 = vmatpush.msra.mxu0 0.0
        %1327 = vmatpush.msra.mxu0 0.0
        %1328 = vmatpush.msra.mxu0 %v1308
        %1329 = vmatpush.msra.mxu0 %v1307
        %1330 = vmatpush.msra.mxu0 %v1306
        %1331 = vmatpush.msra.mxu0 %v1305
        %1332 = vmatpush.msra.mxu0 %v1304
        %1333 = vmatpush.msra.mxu0 %v1303
        %1334 = vmatpush.msra.mxu0 %v1302
        %1335 = vmatpush.msra.mxu0 %v1301
        %1336 = vmatmul.f32.gmra.mxu0 %v1315
        %v1337 = vpop.f32.mrf.mxu0
        %v1338 = vadd.f32 %v1311, %v1337
        %1339 = vmatmul.f32.gmra.mxu0 %v1318
        %v1340 = vpop.f32.mrf.mxu0
        %v1341 = vadd.f32 %v1311, %v1340
        %1342 = vdwg.mxu0
        %s1343 = sadd.s32 %s565, 8
        %s1344 = sld [smem:[#allocation3 + %s1343]]
        %v1345 = vstv %s1344
        %v1346 = vmul.f32 %v1345, %v1338
        %v1347 = vmul.f32 %v1345, %v1341
        %s1348 = scalar_lea.vmem %s10, 32
        %v1349 = vld [vmem:[%s1348] sm:$0xff]
        %v1350 = vld [vmem:[%s1348 + $0x8] sm:$0xff]
        %v1351 = vld [vmem:[%s1348 + $0x10] sm:$0xff]
        %v1352 = vld [vmem:[%s1348 + $0x18] sm:$0xff]
        %s1353 = scalar_lea.vmem %s11, 1
        %v1354 = vld [vmem:[%s1353] sm:$0x1]
        %v1356 = vperm.slane %v1354, 0
        %1358 = vmatpush.msra.mxu0 0.0
        %1359 = vmatpush.msra.mxu0 0.0
        %1360 = vmatpush.msra.mxu0 0.0
        %1361 = vmatpush.msra.mxu0 0.0
        %1362 = vmatpush.msra.mxu0 0.0
        %1363 = vmatpush.msra.mxu0 0.0
        %1364 = vmatpush.msra.mxu0 0.0
        %1365 = vmatpush.msra.mxu0 0.0
        %1366 = vmatpush.msra.mxu0 0.0
        %1367 = vmatpush.msra.mxu0 0.0
        %1368 = vmatpush.msra.mxu0 0.0
        %1369 = vmatpush.msra.mxu0 0.0
        %1370 = vmatpush.msra.mxu0 %v1352
        %1371 = vmatpush.msra.mxu0 %v1351
        %1372 = vmatpush.msra.mxu0 %v1350
        %1373 = vmatpush.msra.mxu0 %v1349
        %1374 = vmatmul.f32.gmra.mxu0 %v1271
        %v1375 = vpop.f32.mrf.mxu0
        %v1376 = vadd.f32 %v1356, %v1375
        %1377 = vmatmul.f32.gmra.mxu0 %v1274
        %v1378 = vpop.f32.mrf.mxu0
        %v1379 = vadd.f32 %v1356, %v1378
        %1380 = vdwg.mxu0
        %v1381 = vmax.f32 %v1376, 0.0
        %v1382 = vmax.f32 %v1379, 0.0
        %s1383 = scalar_lea.vmem %s12, 64
        %v1384 = vld [vmem:[%s1383] sm:$0xff]
        %v1385 = vld [vmem:[%s1383 + $0x8] sm:$0xff]
        %v1386 = vld [vmem:[%s1383 + $0x10] sm:$0xff]
        %v1387 = vld [vmem:[%s1383 + $0x18] sm:$0xff]
        %v1388 = vld [vmem:[%s1383 + $0x20] sm:$0xff]
        %v1389 = vld [vmem:[%s1383 + $0x28] sm:$0xff]
        %v1390 = vld [vmem:[%s1383 + $0x30] sm:$0xff]
        %v1391 = vld [vmem:[%s1383 + $0x38] sm:$0xff]
        %s1392 = scalar_lea.vmem %s13, 1
        %v1393 = vld [vmem:[%s1392] sm:$0x1]
        %v1395 = vperm.slane %v1393, 0
        %v1398 = vsel %vm1313, %v1381, 0
        %v1401 = vsel %vm1313, %v1382, 0
        %1403 = vmatpush.msra.mxu0 0.0
        %1404 = vmatpush.msra.mxu0 0.0
        %1405 = vmatpush.msra.mxu0 0.0
        %1406 = vmatpush.msra.mxu0 0.0
        %1407 = vmatpush.msra.mxu0 0.0
        %1408 = vmatpush.msra.mxu0 0.0
        %1409 = vmatpush.msra.mxu0 0.0
        %1410 = vmatpush.msra.mxu0 0.0
        %1411 = vmatpush.msra.mxu0 %v1391
        %1412 = vmatpush.msra.mxu0 %v1390
        %1413 = vmatpush.msra.mxu0 %v1389
        %1414 = vmatpush.msra.mxu0 %v1388
        %1415 = vmatpush.msra.mxu0 %v1387
        %1416 = vmatpush.msra.mxu0 %v1386
        %1417 = vmatpush.msra.mxu0 %v1385
        %1418 = vmatpush.msra.mxu0 %v1384
        %1419 = vmatmul.f32.gmra.mxu0 %v1398
        %v1420 = vpop.f32.mrf.mxu0
        %v1421 = vadd.f32 %v1395, %v1420
        %1422 = vmatmul.f32.gmra.mxu0 %v1401
        %v1423 = vpop.f32.mrf.mxu0
        %v1424 = vadd.f32 %v1395, %v1423
        %1425 = vdwg.mxu0
        %s1426 = sadd.s32 %s565, 9
        %s1427 = sld [smem:[#allocation3 + %s1426]]
        %v1428 = vstv %s1427
        %v1429 = vmul.f32 %v1428, %v1421
        %v1430 = vmul.f32 %v1428, %v1424
        %v1431 = vadd.f32 %v1346, %v1429
        %v1432 = vadd.f32 %v1347, %v1430
        %s1433 = scalar_lea.vmem %s10, 64
        %v1434 = vld [vmem:[%s1433] sm:$0xff]
        %v1435 = vld [vmem:[%s1433 + $0x8] sm:$0xff]
        %v1436 = vld [vmem:[%s1433 + $0x10] sm:$0xff]
        %v1437 = vld [vmem:[%s1433 + $0x18] sm:$0xff]
        %s1438 = scalar_lea.vmem %s11, 2
        %v1439 = vld [vmem:[%s1438] sm:$0x1]
        %v1441 = vperm.slane %v1439, 0
        %1443 = vmatpush.msra.mxu0 0.0
        %1444 = vmatpush.msra.mxu0 0.0
        %1445 = vmatpush.msra.mxu0 0.0
        %1446 = vmatpush.msra.mxu0 0.0
        %1447 = vmatpush.msra.mxu0 0.0
        %1448 = vmatpush.msra.mxu0 0.0
        %1449 = vmatpush.msra.mxu0 0.0
        %1450 = vmatpush.msra.mxu0 0.0
        %1451 = vmatpush.msra.mxu0 0.0
        %1452 = vmatpush.msra.mxu0 0.0
        %1453 = vmatpush.msra.mxu0 0.0
        %1454 = vmatpush.msra.mxu0 0.0
        %1455 = vmatpush.msra.mxu0 %v1437
        %1456 = vmatpush.msra.mxu0 %v1436
        %1457 = vmatpush.msra.mxu0 %v1435
        %1458 = vmatpush.msra.mxu0 %v1434
        %1459 = vmatmul.f32.gmra.mxu0 %v1271
        %v1460 = vpop.f32.mrf.mxu0
        %v1461 = vadd.f32 %v1441, %v1460
        %1462 = vmatmul.f32.gmra.mxu0 %v1274
        %v1463 = vpop.f32.mrf.mxu0
        %v1464 = vadd.f32 %v1441, %v1463
        %1465 = vdwg.mxu0
        %v1466 = vmax.f32 %v1461, 0.0
        %v1467 = vmax.f32 %v1464, 0.0
        %s1468 = scalar_lea.vmem %s12, 128
        %v1469 = vld [vmem:[%s1468] sm:$0xff]
        %v1470 = vld [vmem:[%s1468 + $0x8] sm:$0xff]
        %v1471 = vld [vmem:[%s1468 + $0x10] sm:$0xff]
        %v1472 = vld [vmem:[%s1468 + $0x18] sm:$0xff]
        %v1473 = vld [vmem:[%s1468 + $0x20] sm:$0xff]
        %v1474 = vld [vmem:[%s1468 + $0x28] sm:$0xff]
        %v1475 = vld [vmem:[%s1468 + $0x30] sm:$0xff]
        %v1476 = vld [vmem:[%s1468 + $0x38] sm:$0xff]
        %s1477 = scalar_lea.vmem %s13, 2
        %v1478 = vld [vmem:[%s1477] sm:$0x1]
        %v1480 = vperm.slane %v1478, 0
        %v1483 = vsel %vm1313, %v1466, 0
        %v1486 = vsel %vm1313, %v1467, 0
        %1488 = vmatpush.msra.mxu0 0.0
        %1489 = vmatpush.msra.mxu0 0.0
        %1490 = vmatpush.msra.mxu0 0.0
        %1491 = vmatpush.msra.mxu0 0.0
        %1492 = vmatpush.msra.mxu0 0.0
        %1493 = vmatpush.msra.mxu0 0.0
        %1494 = vmatpush.msra.mxu0 0.0
        %1495 = vmatpush.msra.mxu0 0.0
        %1496 = vmatpush.msra.mxu0 %v1476
        %1497 = vmatpush.msra.mxu0 %v1475
        %1498 = vmatpush.msra.mxu0 %v1474
        %1499 = vmatpush.msra.mxu0 %v1473
        %1500 = vmatpush.msra.mxu0 %v1472
        %1501 = vmatpush.msra.mxu0 %v1471
        %1502 = vmatpush.msra.mxu0 %v1470
        %1503 = vmatpush.msra.mxu0 %v1469
        %1504 = vmatmul.f32.gmra.mxu0 %v1483
        %v1505 = vpop.f32.mrf.mxu0
        %v1506 = vadd.f32 %v1480, %v1505
        %1507 = vmatmul.f32.gmra.mxu0 %v1486
        %v1508 = vpop.f32.mrf.mxu0
        %v1509 = vadd.f32 %v1480, %v1508
        %1510 = vdwg.mxu0
        %s1511 = sadd.s32 %s565, 10
        %s1512 = sld [smem:[#allocation3 + %s1511]]
        %v1513 = vstv %s1512
        %v1514 = vmul.f32 %v1513, %v1506
        %v1515 = vmul.f32 %v1513, %v1509
        %v1516 = vadd.f32 %v1431, %v1514
        %v1517 = vadd.f32 %v1432, %v1515
        %s1518 = scalar_lea.vmem %s10, 96
        %v1519 = vld [vmem:[%s1518] sm:$0xff]
        %v1520 = vld [vmem:[%s1518 + $0x8] sm:$0xff]
        %v1521 = vld [vmem:[%s1518 + $0x10] sm:$0xff]
        %v1522 = vld [vmem:[%s1518 + $0x18] sm:$0xff]
        %s1523 = scalar_lea.vmem %s11, 3
        %v1524 = vld [vmem:[%s1523] sm:$0x1]
        %v1526 = vperm.slane %v1524, 0
        %1528 = vmatpush.msra.mxu0 0.0
        %1529 = vmatpush.msra.mxu0 0.0
        %1530 = vmatpush.msra.mxu0 0.0
        %1531 = vmatpush.msra.mxu0 0.0
        %1532 = vmatpush.msra.mxu0 0.0
        %1533 = vmatpush.msra.mxu0 0.0
        %1534 = vmatpush.msra.mxu0 0.0
        %1535 = vmatpush.msra.mxu0 0.0
        %1536 = vmatpush.msra.mxu0 0.0
        %1537 = vmatpush.msra.mxu0 0.0
        %1538 = vmatpush.msra.mxu0 0.0
        %1539 = vmatpush.msra.mxu0 0.0
        %1540 = vmatpush.msra.mxu0 %v1522
        %1541 = vmatpush.msra.mxu0 %v1521
        %1542 = vmatpush.msra.mxu0 %v1520
        %1543 = vmatpush.msra.mxu0 %v1519
        %1544 = vmatmul.f32.gmra.mxu0 %v1271
        %v1545 = vpop.f32.mrf.mxu0
        %v1546 = vadd.f32 %v1526, %v1545
        %1547 = vmatmul.f32.gmra.mxu0 %v1274
        %v1548 = vpop.f32.mrf.mxu0
        %v1549 = vadd.f32 %v1526, %v1548
        %1550 = vdwg.mxu0
        %v1551 = vmax.f32 %v1546, 0.0
        %v1552 = vmax.f32 %v1549, 0.0
        %s1553 = scalar_lea.vmem %s12, 192
        %v1554 = vld [vmem:[%s1553] sm:$0xff]
        %v1555 = vld [vmem:[%s1553 + $0x8] sm:$0xff]
        %v1556 = vld [vmem:[%s1553 + $0x10] sm:$0xff]
        %v1557 = vld [vmem:[%s1553 + $0x18] sm:$0xff]
        %v1558 = vld [vmem:[%s1553 + $0x20] sm:$0xff]
        %v1559 = vld [vmem:[%s1553 + $0x28] sm:$0xff]
        %v1560 = vld [vmem:[%s1553 + $0x30] sm:$0xff]
        %v1561 = vld [vmem:[%s1553 + $0x38] sm:$0xff]
        %s1562 = scalar_lea.vmem %s13, 3
        %v1563 = vld [vmem:[%s1562] sm:$0x1]
        %v1565 = vperm.slane %v1563, 0
        %v1568 = vsel %vm1313, %v1551, 0
        %v1571 = vsel %vm1313, %v1552, 0
        %1573 = vmatpush.msra.mxu0 0.0
        %1574 = vmatpush.msra.mxu0 0.0
        %1575 = vmatpush.msra.mxu0 0.0
        %1576 = vmatpush.msra.mxu0 0.0
        %1577 = vmatpush.msra.mxu0 0.0
        %1578 = vmatpush.msra.mxu0 0.0
        %1579 = vmatpush.msra.mxu0 0.0
        %1580 = vmatpush.msra.mxu0 0.0
        %1581 = vmatpush.msra.mxu0 %v1561
        %1582 = vmatpush.msra.mxu0 %v1560
        %1583 = vmatpush.msra.mxu0 %v1559
        %1584 = vmatpush.msra.mxu0 %v1558
        %1585 = vmatpush.msra.mxu0 %v1557
        %1586 = vmatpush.msra.mxu0 %v1556
        %1587 = vmatpush.msra.mxu0 %v1555
        %1588 = vmatpush.msra.mxu0 %v1554
        %1589 = vmatmul.f32.gmra.mxu0 %v1568
        %v1590 = vpop.f32.mrf.mxu0
        %v1591 = vadd.f32 %v1565, %v1590
        %1592 = vmatmul.f32.gmra.mxu0 %v1571
        %v1593 = vpop.f32.mrf.mxu0
        %v1594 = vadd.f32 %v1565, %v1593
        %1595 = vdwg.mxu0
        %s1596 = sadd.s32 %s565, 11
        %s1597 = sld [smem:[#allocation3 + %s1596]]
        %v1598 = vstv %s1597
        %v1599 = vmul.f32 %v1598, %v1591
        %v1600 = vmul.f32 %v1598, %v1594
        %v1601 = vadd.f32 %v1516, %v1599
        %v1602 = vadd.f32 %v1517, %v1600
        %v1603 = vadd.f32 %v1260, %v1601
        %v1604 = vadd.f32 %v1261, %v1602
        %v1605 = vsel %vm674, %v1603, 0.0
        %v1606 = vsel %vm678, %v1604, 0.0
        %v1607 = vadd.f32 %v1605, %v1606
        %v1608 = vrot.slane %v1607, 4
        %v1609 = vadd.f32 %v1607, %v1608
        %v1610 = vrot.slane %v1609, 2
        %v1611 = vadd.f32 %v1609, %v1610
        %v1612 = vrot.slane %v1611, 1
        %v1613 = vadd.f32 %v1611, %v1612
        %v1614 = vmul.f32 %v1613, %v1221
        %v1615 = vsub.f32 %v1603, %v1614
        %v1616 = vsub.f32 %v1604, %v1614
        %v1617 = vmul.f32 %v1615, %v1615
        %v1618 = vmul.f32 %v1616, %v1616
        %v1619 = vsel %vm674, %v1617, 0.0
        %v1620 = vsel %vm678, %v1618, 0.0
        %v1621 = vadd.f32 %v1619, %v1620
        %v1622 = vrot.slane %v1621, 4
        %v1623 = vadd.f32 %v1621, %v1622
        %v1624 = vrot.slane %v1623, 2
        %v1625 = vadd.f32 %v1623, %v1624
        %v1626 = vrot.slane %v1625, 1
        %v1627 = vadd.f32 %v1625, %v1626
        %v1628 = vmul.f32 %v1627, %v1221
        %v1629 = vadd.f32 %v1628, 1e-05
        %v1630 = vrsqrt.pop %v1629
        %v1631 = vmul.f32 %v1630, %v1629
        %v1632 = vmul.f32 %v1631, %v1630
        %v1633 = vmul.f32 0.5, %v1632
        %v1634 = vsub.f32 1.5, %v1633
        %v1635 = vmul.f32 %v1630, %v1634
        %vm1636 = vweird.f32 %v1629
        %vm1637 = vweird.f32 %v1630
        %vm1638 = vmor %vm1636, %vm1637
        %v1639 = vsel %vm1638, %v1630, %v1635
        %v1640 = vmul.f32 %v1615, %v1639
        %v1641 = vmul.f32 %v1616, %v1639
        %v1642 = vld [vmem:[%s14] sm:$0x1]
        %v1644 = vperm.slane %v1642, 0
        %v1646 = vmul.f32 %v1640, %v1644
        %v1647 = vmul.f32 %v1641, %v1644
        %v1648 = vld [vmem:[%s15] sm:$0x1]
        %v1650 = vperm.slane %v1648, 0
        %v1652 = vadd.f32 %v1646, %v1650
        %v1653 = vadd.f32 %v1647, %v1650
        %s1654 = scalar_lea.vmem %s5, 32
        %v1655 = vld [vmem:[%s1654] sm:$0xff]
        %v1656 = vld [vmem:[%s1654 + $0x8] sm:$0xff]
        %v1657 = vld [vmem:[%s1654 + $0x10] sm:$0xff]
        %v1658 = vld [vmem:[%s1654 + $0x18] sm:$0xff]
        %v1660 = vsel %vm674, %v1652, 0
        %v1663 = vsel %vm674, %v1653, 0
        %1665 = vmatpush.msra.mxu0 0.0
        %1666 = vmatpush.msra.mxu0 0.0
        %1667 = vmatpush.msra.mxu0 0.0
        %1668 = vmatpush.msra.mxu0 0.0
        %1669 = vmatpush.msra.mxu0 0.0
        %1670 = vmatpush.msra.mxu0 0.0
        %1671 = vmatpush.msra.mxu0 0.0
        %1672 = vmatpush.msra.mxu0 0.0
        %1673 = vmatpush.msra.mxu0 0.0
        %1674 = vmatpush.msra.mxu0 0.0
        %1675 = vmatpush.msra.mxu0 0.0
        %1676 = vmatpush.msra.mxu0 0.0
        %1677 = vmatpush.msra.mxu0 %v1658
        %1678 = vmatpush.msra.mxu0 %v1657
        %1679 = vmatpush.msra.mxu0 %v1656
        %1680 = vmatpush.msra.mxu0 %v1655
        %1681 = vmatmul.f32.gmra.mxu0 %v1660
        %v1682 = vpop.f32.mrf.mxu0
        %v1683 = vadd.f32 0.0, %v1682
        %1684 = vmatmul.f32.gmra.mxu0 %v1663
        %v1685 = vpop.f32.mrf.mxu0
        %v1686 = vadd.f32 0.0, %v1685
        %1687 = vdwg.mxu0
        %1690 = vrot.lane.b32.xlu0 %v1683, 96
        %v1691 = vpop.permute.xlu0 %1690
        %1692 = vrot.lane.b32.xlu0 %v1686, 96
        %v1693 = vpop.permute.xlu0 %1692
        %v1694 = vsel %vm721, %v1683, 0
        %v1696 = vsel %vm721, %v1686, 0
        %v1698 = vsel %vm721, %v1691, 0
        %v1700 = vsel %vm721, %v1693, 0
        %1702 = vmatpush.xpose.msra.mxu0 0.0
        %1703 = vmatpush.xpose.msra.mxu0 0.0
        %1704 = vmatpush.xpose.msra.mxu0 0.0
        %1705 = vmatpush.xpose.msra.mxu0 0.0
        %1706 = vmatpush.xpose.msra.mxu0 0.0
        %1707 = vmatpush.xpose.msra.mxu0 0.0
        %1708 = vmatpush.xpose.msra.mxu0 0.0
        %1709 = vmatpush.xpose.msra.mxu0 0.0
        %1710 = vmatpush.xpose.msra.mxu0 0.0
        %1711 = vmatpush.xpose.msra.mxu0 0.0
        %1712 = vmatpush.xpose.msra.mxu0 0.0
        %1713 = vmatpush.xpose.msra.mxu0 0.0
        %1714 = vmatpush.xpose.msra.mxu0 0.0
        %1715 = vmatpush.xpose.msra.mxu0 0.0
        %1716 = vmatpush.xpose.msra.mxu0 %v1700
        %1717 = vmatpush.xpose.msra.mxu0 %v1698
        %1718 = vmatmul.f32.gmra.mxu0 %v1694
        %v1719 = vpop.f32.mrf.mxu0
        %v1720 = vadd.f32 0.0, %v1719
        %1721 = vmatmul.f32.gmra.mxu0 %v1696
        %v1722 = vpop.f32.mrf.mxu0
        %v1723 = vadd.f32 0.0, %v1722
        %1724 = vdwg.mxu0
        %v1725 = vmul.f32 %v1720, 0.35355338
        %v1726 = vmul.f32 %v1723, 0.35355338
        %v1727 = vsel %vm755, %v1725, -inf
        %1728 = vmax.xlane.f32.xlu0 %v1727
        %v1729 = vpop.xlane.xlu0 %1728
        %v1730 = vsel %vm759, %v1726, -inf
        %1731 = vmax.xlane.f32.xlu0 %v1730
        %v1732 = vpop.xlane.xlu0 %1731
        %v1733 = vsub.f32 %v1725, %v1729
        %v1734 = vsub.f32 %v1726, %v1732
        %v1735 = vmul.f32 %v1733, 1.442695
        %v1736 = vpow.pop %v1735
        %v1737 = vmul.f32 %v1734, 1.442695
        %v1738 = vpow.pop %v1737
        %v1739 = vsel %vm755, %v1736, 0.0
        %1740 = vadd.xlane.f32.xlu0 %v1739
        %v1741 = vpop.xlane.xlu0 %1740
        %v1742 = vsel %vm759, %v1738, 0.0
        %1743 = vadd.xlane.f32.xlu0 %v1742
        %v1744 = vpop.xlane.xlu0 %1743
        %v1745 = vrcp.pop %v1741
        %v1746 = vrcp.pop %v1744
        %v1747 = vmul.f32 %v1736, %v1745
        %v1748 = vmul.f32 %v1738, %v1746
        %1749 = vrot.lane.b32.xlu0 %v1683, 64
        %v1750 = vpop.permute.xlu0 %1749
        %1751 = vrot.lane.b32.xlu0 %v1686, 64
        %v1752 = vpop.permute.xlu0 %1751
        %v1755 = vsel %vm755, %v1747, 0
        %v1758 = vsel %vm755, %v1748, 0
        %v1760 = vsel %vm790, %v1752, 0
        %1762 = vmatpush.msra.mxu0 0.0
        %1763 = vmatpush.msra.mxu0 0.0
        %1764 = vmatpush.msra.mxu0 0.0
        %1765 = vmatpush.msra.mxu0 0.0
        %1766 = vmatpush.msra.mxu0 0.0
        %1767 = vmatpush.msra.mxu0 0.0
        %1768 = vmatpush.msra.mxu0 0.0
        %1769 = vmatpush.msra.mxu0 0.0
        %1770 = vmatpush.msra.mxu0 0.0
        %1771 = vmatpush.msra.mxu0 0.0
        %1772 = vmatpush.msra.mxu0 0.0
        %1773 = vmatpush.msra.mxu0 0.0
        %1774 = vmatpush.msra.mxu0 0.0
        %1775 = vmatpush.msra.mxu0 0.0
        %1776 = vmatpush.msra.mxu0 %v1760
        %1777 = vmatpush.msra.mxu0 %v1750
        %1778 = vmatmul.f32.gmra.mxu0 %v1755
        %v1779 = vpop.f32.mrf.mxu0
        %v1780 = vadd.f32 0.0, %v1779
        %1781 = vmatmul.f32.gmra.mxu0 %v1758
        %v1782 = vpop.f32.mrf.mxu0
        %v1783 = vadd.f32 0.0, %v1782
        %1784 = vdwg.mxu0
        %1785 = vrot.lane.b32.xlu0 %v1683, 120
        %v1786 = vpop.permute.xlu0 %1785
        %1787 = vrot.lane.b32.xlu0 %v1686, 120
        %v1788 = vpop.permute.xlu0 %1787
        %1789 = vrot.lane.b32.xlu0 %v1683, 88
        %v1790 = vpop.permute.xlu0 %1789
        %1791 = vrot.lane.b32.xlu0 %v1686, 88
        %v1792 = vpop.permute.xlu0 %1791
        %v1793 = vsel %vm721, %v1786, 0
        %v1795 = vsel %vm721, %v1788, 0
        %v1797 = vsel %vm721, %v1790, 0
        %v1799 = vsel %vm721, %v1792, 0
        %1801 = vmatpush.xpose.msra.mxu0 0.0
        %1802 = vmatpush.xpose.msra.mxu0 0.0
        %1803 = vmatpush.xpose.msra.mxu0 0.0
        %1804 = vmatpush.xpose.msra.mxu0 0.0
        %1805 = vmatpush.xpose.msra.mxu0 0.0
        %1806 = vmatpush.xpose.msra.mxu0 0.0
        %1807 = vmatpush.xpose.msra.mxu0 0.0
        %1808 = vmatpush.xpose.msra.mxu0 0.0
        %1809 = vmatpush.xpose.msra.mxu0 0.0
        %1810 = vmatpush.xpose.msra.mxu0 0.0
        %1811 = vmatpush.xpose.msra.mxu0 0.0
        %1812 = vmatpush.xpose.msra.mxu0 0.0
        %1813 = vmatpush.xpose.msra.mxu0 0.0
        %1814 = vmatpush.xpose.msra.mxu0 0.0
        %1815 = vmatpush.xpose.msra.mxu0 %v1799
        %1816 = vmatpush.xpose.msra.mxu0 %v1797
        %1817 = vmatmul.f32.gmra.mxu0 %v1793
        %v1818 = vpop.f32.mrf.mxu0
        %v1819 = vadd.f32 0.0, %v1818
        %1820 = vmatmul.f32.gmra.mxu0 %v1795
        %v1821 = vpop.f32.mrf.mxu0
        %v1822 = vadd.f32 0.0, %v1821
        %1823 = vdwg.mxu0
        %v1824 = vmul.f32 %v1819, 0.35355338
        %v1825 = vmul.f32 %v1822, 0.35355338
        %v1826 = vsel %vm755, %v1824, -inf
        %1827 = vmax.xlane.f32.xlu0 %v1826
        %v1828 = vpop.xlane.xlu0 %1827
        %v1829 = vsel %vm759, %v1825, -inf
        %1830 = vmax.xlane.f32.xlu0 %v1829
        %v1831 = vpop.xlane.xlu0 %1830
        %v1832 = vsub.f32 %v1824, %v1828
        %v1833 = vsub.f32 %v1825, %v1831
        %v1834 = vmul.f32 %v1832, 1.442695
        %v1835 = vpow.pop %v1834
        %v1836 = vmul.f32 %v1833, 1.442695
        %v1837 = vpow.pop %v1836
        %v1838 = vsel %vm755, %v1835, 0.0
        %1839 = vadd.xlane.f32.xlu0 %v1838
        %v1840 = vpop.xlane.xlu0 %1839
        %v1841 = vsel %vm759, %v1837, 0.0
        %1842 = vadd.xlane.f32.xlu0 %v1841
        %v1843 = vpop.xlane.xlu0 %1842
        %v1844 = vrcp.pop %v1840
        %v1845 = vrcp.pop %v1843
        %v1846 = vmul.f32 %v1835, %v1844
        %v1847 = vmul.f32 %v1837, %v1845
        %1848 = vrot.lane.b32.xlu0 %v1683, 56
        %v1849 = vpop.permute.xlu0 %1848
        %1850 = vrot.lane.b32.xlu0 %v1686, 56
        %v1851 = vpop.permute.xlu0 %1850
        %v1854 = vsel %vm755, %v1846, 0
        %v1857 = vsel %vm755, %v1847, 0
        %v1859 = vsel %vm790, %v1851, 0
        %1861 = vmatpush.msra.mxu0 0.0
        %1862 = vmatpush.msra.mxu0 0.0
        %1863 = vmatpush.msra.mxu0 0.0
        %1864 = vmatpush.msra.mxu0 0.0
        %1865 = vmatpush.msra.mxu0 0.0
        %1866 = vmatpush.msra.mxu0 0.0
        %1867 = vmatpush.msra.mxu0 0.0
        %1868 = vmatpush.msra.mxu0 0.0
        %1869 = vmatpush.msra.mxu0 0.0
        %1870 = vmatpush.msra.mxu0 0.0
        %1871 = vmatpush.msra.mxu0 0.0
        %1872 = vmatpush.msra.mxu0 0.0
        %1873 = vmatpush.msra.mxu0 0.0
        %1874 = vmatpush.msra.mxu0 0.0
        %1875 = vmatpush.msra.mxu0 %v1859
        %1876 = vmatpush.msra.mxu0 %v1849
        %1877 = vmatmul.f32.gmra.mxu0 %v1854
        %v1878 = vpop.f32.mrf.mxu0
        %v1879 = vadd.f32 0.0, %v1878
        %1880 = vmatmul.f32.gmra.mxu0 %v1857
        %v1881 = vpop.f32.mrf.mxu0
        %v1882 = vadd.f32 0.0, %v1881
        %1883 = vdwg.mxu0
        %1884 = vrot.lane.b32.xlu0 %v1683, 112
        %v1885 = vpop.permute.xlu0 %1884
        %1886 = vrot.lane.b32.xlu0 %v1686, 112
        %v1887 = vpop.permute.xlu0 %1886
        %1888 = vrot.lane.b32.xlu0 %v1683, 80
        %v1889 = vpop.permute.xlu0 %1888
        %1890 = vrot.lane.b32.xlu0 %v1686, 80
        %v1891 = vpop.permute.xlu0 %1890
        %v1892 = vsel %vm721, %v1885, 0
        %v1894 = vsel %vm721, %v1887, 0
        %v1896 = vsel %vm721, %v1889, 0
        %v1898 = vsel %vm721, %v1891, 0
        %1900 = vmatpush.xpose.msra.mxu0 0.0
        %1901 = vmatpush.xpose.msra.mxu0 0.0
        %1902 = vmatpush.xpose.msra.mxu0 0.0
        %1903 = vmatpush.xpose.msra.mxu0 0.0
        %1904 = vmatpush.xpose.msra.mxu0 0.0
        %1905 = vmatpush.xpose.msra.mxu0 0.0
        %1906 = vmatpush.xpose.msra.mxu0 0.0
        %1907 = vmatpush.xpose.msra.mxu0 0.0
        %1908 = vmatpush.xpose.msra.mxu0 0.0
        %1909 = vmatpush.xpose.msra.mxu0 0.0
        %1910 = vmatpush.xpose.msra.mxu0 0.0
        %1911 = vmatpush.xpose.msra.mxu0 0.0
        %1912 = vmatpush.xpose.msra.mxu0 0.0
        %1913 = vmatpush.xpose.msra.mxu0 0.0
        %1914 = vmatpush.xpose.msra.mxu0 %v1898
        %1915 = vmatpush.xpose.msra.mxu0 %v1896
        %1916 = vmatmul.f32.gmra.mxu0 %v1892
        %v1917 = vpop.f32.mrf.mxu0
        %v1918 = vadd.f32 0.0, %v1917
        %1919 = vmatmul.f32.gmra.mxu0 %v1894
        %v1920 = vpop.f32.mrf.mxu0
        %v1921 = vadd.f32 0.0, %v1920
        %1922 = vdwg.mxu0
        %v1923 = vmul.f32 %v1918, 0.35355338
        %v1924 = vmul.f32 %v1921, 0.35355338
        %v1925 = vsel %vm755, %v1923, -inf
        %1926 = vmax.xlane.f32.xlu0 %v1925
        %v1927 = vpop.xlane.xlu0 %1926
        %v1928 = vsel %vm759, %v1924, -inf
        %1929 = vmax.xlane.f32.xlu0 %v1928
        %v1930 = vpop.xlane.xlu0 %1929
        %v1931 = vsub.f32 %v1923, %v1927
        %v1932 = vsub.f32 %v1924, %v1930
        %v1933 = vmul.f32 %v1931, 1.442695
        %v1934 = vpow.pop %v1933
        %v1935 = vmul.f32 %v1932, 1.442695
        %v1936 = vpow.pop %v1935
        %v1937 = vsel %vm755, %v1934, 0.0
        %1938 = vadd.xlane.f32.xlu0 %v1937
        %v1939 = vpop.xlane.xlu0 %1938
        %v1940 = vsel %vm759, %v1936, 0.0
        %1941 = vadd.xlane.f32.xlu0 %v1940
        %v1942 = vpop.xlane.xlu0 %1941
        %v1943 = vrcp.pop %v1939
        %v1944 = vrcp.pop %v1942
        %v1945 = vmul.f32 %v1934, %v1943
        %v1946 = vmul.f32 %v1936, %v1944
        %1947 = vrot.lane.b32.xlu0 %v1683, 48
        %v1948 = vpop.permute.xlu0 %1947
        %1949 = vrot.lane.b32.xlu0 %v1686, 48
        %v1950 = vpop.permute.xlu0 %1949
        %v1953 = vsel %vm755, %v1945, 0
        %v1956 = vsel %vm755, %v1946, 0
        %v1958 = vsel %vm790, %v1950, 0
        %1960 = vmatpush.msra.mxu0 0.0
        %1961 = vmatpush.msra.mxu0 0.0
        %1962 = vmatpush.msra.mxu0 0.0
        %1963 = vmatpush.msra.mxu0 0.0
        %1964 = vmatpush.msra.mxu0 0.0
        %1965 = vmatpush.msra.mxu0 0.0
        %1966 = vmatpush.msra.mxu0 0.0
        %1967 = vmatpush.msra.mxu0 0.0
        %1968 = vmatpush.msra.mxu0 0.0
        %1969 = vmatpush.msra.mxu0 0.0
        %1970 = vmatpush.msra.mxu0 0.0
        %1971 = vmatpush.msra.mxu0 0.0
        %1972 = vmatpush.msra.mxu0 0.0
        %1973 = vmatpush.msra.mxu0 0.0
        %1974 = vmatpush.msra.mxu0 %v1958
        %1975 = vmatpush.msra.mxu0 %v1948
        %1976 = vmatmul.f32.gmra.mxu0 %v1953
        %v1977 = vpop.f32.mrf.mxu0
        %v1978 = vadd.f32 0.0, %v1977
        %1979 = vmatmul.f32.gmra.mxu0 %v1956
        %v1980 = vpop.f32.mrf.mxu0
        %v1981 = vadd.f32 0.0, %v1980
        %1982 = vdwg.mxu0
        %1983 = vrot.lane.b32.xlu0 %v1683, 104
        %v1984 = vpop.permute.xlu0 %1983
        %1985 = vrot.lane.b32.xlu0 %v1686, 104
        %v1986 = vpop.permute.xlu0 %1985
        %1987 = vrot.lane.b32.xlu0 %v1683, 72
        %v1988 = vpop.permute.xlu0 %1987
        %1989 = vrot.lane.b32.xlu0 %v1686, 72
        %v1990 = vpop.permute.xlu0 %1989
        %v1991 = vsel %vm721, %v1984, 0
        %v1993 = vsel %vm721, %v1986, 0
        %v1995 = vsel %vm721, %v1988, 0
        %v1997 = vsel %vm721, %v1990, 0
        %1999 = vmatpush.xpose.msra.mxu0 0.0
        %2000 = vmatpush.xpose.msra.mxu0 0.0
        %2001 = vmatpush.xpose.msra.mxu0 0.0
        %2002 = vmatpush.xpose.msra.mxu0 0.0
        %2003 = vmatpush.xpose.msra.mxu0 0.0
        %2004 = vmatpush.xpose.msra.mxu0 0.0
        %2005 = vmatpush.xpose.msra.mxu0 0.0
        %2006 = vmatpush.xpose.msra.mxu0 0.0
        %2007 = vmatpush.xpose.msra.mxu0 0.0
        %2008 = vmatpush.xpose.msra.mxu0 0.0
        %2009 = vmatpush.xpose.msra.mxu0 0.0
        %2010 = vmatpush.xpose.msra.mxu0 0.0
        %2011 = vmatpush.xpose.msra.mxu0 0.0
        %2012 = vmatpush.xpose.msra.mxu0 0.0
        %2013 = vmatpush.xpose.msra.mxu0 %v1997
        %2014 = vmatpush.xpose.msra.mxu0 %v1995
        %2015 = vmatmul.f32.gmra.mxu0 %v1991
        %v2016 = vpop.f32.mrf.mxu0
        %v2017 = vadd.f32 0.0, %v2016
        %2018 = vmatmul.f32.gmra.mxu0 %v1993
        %v2019 = vpop.f32.mrf.mxu0
        %v2020 = vadd.f32 0.0, %v2019
        %2021 = vdwg.mxu0
        %v2022 = vmul.f32 %v2017, 0.35355338
        %v2023 = vmul.f32 %v2020, 0.35355338
        %v2024 = vsel %vm755, %v2022, -inf
        %2025 = vmax.xlane.f32.xlu0 %v2024
        %v2026 = vpop.xlane.xlu0 %2025
        %v2027 = vsel %vm759, %v2023, -inf
        %2028 = vmax.xlane.f32.xlu0 %v2027
        %v2029 = vpop.xlane.xlu0 %2028
        %v2030 = vsub.f32 %v2022, %v2026
        %v2031 = vsub.f32 %v2023, %v2029
        %v2032 = vmul.f32 %v2030, 1.442695
        %v2033 = vpow.pop %v2032
        %v2034 = vmul.f32 %v2031, 1.442695
        %v2035 = vpow.pop %v2034
        %v2036 = vsel %vm755, %v2033, 0.0
        %2037 = vadd.xlane.f32.xlu0 %v2036
        %v2038 = vpop.xlane.xlu0 %2037
        %v2039 = vsel %vm759, %v2035, 0.0
        %2040 = vadd.xlane.f32.xlu0 %v2039
        %v2041 = vpop.xlane.xlu0 %2040
        %v2042 = vrcp.pop %v2038
        %v2043 = vrcp.pop %v2041
        %v2044 = vmul.f32 %v2033, %v2042
        %v2045 = vmul.f32 %v2035, %v2043
        %2046 = vrot.lane.b32.xlu0 %v1683, 40
        %v2047 = vpop.permute.xlu0 %2046
        %2048 = vrot.lane.b32.xlu0 %v1686, 40
        %v2049 = vpop.permute.xlu0 %2048
        %v2052 = vsel %vm755, %v2044, 0
        %v2055 = vsel %vm755, %v2045, 0
        %v2057 = vsel %vm790, %v2049, 0
        %2059 = vmatpush.msra.mxu0 0.0
        %2060 = vmatpush.msra.mxu0 0.0
        %2061 = vmatpush.msra.mxu0 0.0
        %2062 = vmatpush.msra.mxu0 0.0
        %2063 = vmatpush.msra.mxu0 0.0
        %2064 = vmatpush.msra.mxu0 0.0
        %2065 = vmatpush.msra.mxu0 0.0
        %2066 = vmatpush.msra.mxu0 0.0
        %2067 = vmatpush.msra.mxu0 0.0
        %2068 = vmatpush.msra.mxu0 0.0
        %2069 = vmatpush.msra.mxu0 0.0
        %2070 = vmatpush.msra.mxu0 0.0
        %2071 = vmatpush.msra.mxu0 0.0
        %2072 = vmatpush.msra.mxu0 0.0
        %2073 = vmatpush.msra.mxu0 %v2057
        %2074 = vmatpush.msra.mxu0 %v2047
        %2075 = vmatmul.f32.gmra.mxu0 %v2052
        %v2076 = vpop.f32.mrf.mxu0
        %v2077 = vadd.f32 0.0, %v2076
        %2078 = vmatmul.f32.gmra.mxu0 %v2055
        %v2079 = vpop.f32.mrf.mxu0
        %v2080 = vadd.f32 0.0, %v2079
        %2081 = vdwg.mxu0
        %2084 = vrot.lane.b32.xlu0 %v1879, 8
        %v2085 = vpop.permute.xlu0 %2084
        %2086 = vrot.lane.b32.xlu0 %v1882, 8
        %v2087 = vpop.permute.xlu0 %2086
        %2092 = vrot.lane.b32.xlu0 %v1978, 16
        %v2093 = vpop.permute.xlu0 %2092
        %2094 = vrot.lane.b32.xlu0 %v1981, 16
        %v2095 = vpop.permute.xlu0 %2094
        %2100 = vrot.lane.b32.xlu0 %v2077, 24
        %v2101 = vpop.permute.xlu0 %2100
        %2102 = vrot.lane.b32.xlu0 %v2080, 24
        %v2103 = vpop.permute.xlu0 %2102
        %v2106 = vsel %vm721, %v1780, %v2085
        %v2107 = vsel %vm721, %v1783, %v2087
        %v2108 = vsel %vm1139, %v2106, %v2093
        %v2109 = vsel %vm1139, %v2107, %v2095
        %v2110 = vsel %vm1142, %v2108, %v2101
        %v2111 = vsel %vm1142, %v2109, %v2103
        %v2112 = vperm.slane %v1686, 0
        %v2113 = vmul.f32 %v1152, %v2112
        %v2114 = vmul.f32 %v1153, %v2112
        %2117 = vrot.lane.b32.xlu0 %v2113, 32
        %v2118 = vpop.permute.xlu0 %2117
        %2119 = vrot.lane.b32.xlu0 %v2114, 32
        %v2120 = vpop.permute.xlu0 %2119
        %v2123 = vadd.f32 %v2110, %v2118
        %v2124 = vadd.f32 %v2111, %v2120
        %s2125 = scalar_lea.vmem %s6, 32
        %v2126 = vld [vmem:[%s2125] sm:$0xff]
        %v2127 = vld [vmem:[%s2125 + $0x8] sm:$0xff]
        %v2128 = vld [vmem:[%s2125 + $0x10] sm:$0xff]
        %v2129 = vld [vmem:[%s2125 + $0x18] sm:$0xff]
        %s2130 = scalar_lea.vmem %s7, 1
        %v2131 = vld [vmem:[%s2130] sm:$0x1]
        %v2133 = vperm.slane %v2131, 0
        %v2136 = vsel %vm674, %v2123, 0
        %v2139 = vsel %vm674, %v2124, 0
        %2141 = vmatpush.msra.mxu0 0.0
        %2142 = vmatpush.msra.mxu0 0.0
        %2143 = vmatpush.msra.mxu0 0.0
        %2144 = vmatpush.msra.mxu0 0.0
        %2145 = vmatpush.msra.mxu0 0.0
        %2146 = vmatpush.msra.mxu0 0.0
        %2147 = vmatpush.msra.mxu0 0.0
        %2148 = vmatpush.msra.mxu0 0.0
        %2149 = vmatpush.msra.mxu0 0.0
        %2150 = vmatpush.msra.mxu0 0.0
        %2151 = vmatpush.msra.mxu0 0.0
        %2152 = vmatpush.msra.mxu0 0.0
        %2153 = vmatpush.msra.mxu0 %v2129
        %2154 = vmatpush.msra.mxu0 %v2128
        %2155 = vmatpush.msra.mxu0 %v2127
        %2156 = vmatpush.msra.mxu0 %v2126
        %2157 = vmatmul.f32.gmra.mxu0 %v2136
        %v2158 = vpop.f32.mrf.mxu0
        %v2159 = vadd.f32 %v2133, %v2158
        %2160 = vmatmul.f32.gmra.mxu0 %v2139
        %v2161 = vpop.f32.mrf.mxu0
        %v2162 = vadd.f32 %v2133, %v2161
        %2163 = vdwg.mxu0
        %v2164 = vadd.f32 %v1652, %v2159
        %v2165 = vadd.f32 %v1653, %v2162
        %v2166 = vsel %vm674, %v2164, 0.0
        %v2167 = vsel %vm678, %v2165, 0.0
        %v2168 = vadd.f32 %v2166, %v2167
        %v2169 = vrot.slane %v2168, 4
        %v2170 = vadd.f32 %v2168, %v2169
        %v2171 = vrot.slane %v2170, 2
        %v2172 = vadd.f32 %v2170, %v2171
        %v2173 = vrot.slane %v2172, 1
        %v2174 = vadd.f32 %v2172, %v2173
        %v2175 = vmul.f32 %v2174, %v1221
        %v2176 = vsub.f32 %v2164, %v2175
        %v2177 = vsub.f32 %v2165, %v2175
        %v2178 = vmul.f32 %v2176, %v2176
        %v2179 = vmul.f32 %v2177, %v2177
        %v2180 = vsel %vm674, %v2178, 0.0
        %v2181 = vsel %vm678, %v2179, 0.0
        %v2182 = vadd.f32 %v2180, %v2181
        %v2183 = vrot.slane %v2182, 4
        %v2184 = vadd.f32 %v2182, %v2183
        %v2185 = vrot.slane %v2184, 2
        %v2186 = vadd.f32 %v2184, %v2185
        %v2187 = vrot.slane %v2186, 1
        %v2188 = vadd.f32 %v2186, %v2187
        %v2189 = vmul.f32 %v2188, %v1221
        %v2190 = vadd.f32 %v2189, 1e-05
        %v2191 = vrsqrt.pop %v2190
        %v2192 = vmul.f32 %v2191, %v2190
        %v2193 = vmul.f32 %v2192, %v2191
        %v2194 = vmul.f32 0.5, %v2193
        %v2195 = vsub.f32 1.5, %v2194
        %v2196 = vmul.f32 %v2191, %v2195
        %vm2197 = vweird.f32 %v2190
        %vm2198 = vweird.f32 %v2191
        %vm2199 = vmor %vm2197, %vm2198
        %v2200 = vsel %vm2199, %v2191, %v2196
        %v2201 = vmul.f32 %v2176, %v2200
        %v2202 = vmul.f32 %v2177, %v2200
        %s2203 = scalar_lea.vmem %s8, 1
        %v2204 = vld [vmem:[%s2203] sm:$0x1]
        %v2206 = vperm.slane %v2204, 0
        %v2208 = vmul.f32 %v2201, %v2206
        %v2209 = vmul.f32 %v2202, %v2206
        %s2210 = scalar_lea.vmem %s9, 1
        %v2211 = vld [vmem:[%s2210] sm:$0x1]
        %v2213 = vperm.slane %v2211, 0
        %v2215 = vadd.f32 %v2208, %v2213
        %v2216 = vadd.f32 %v2209, %v2213
        %s2217 = scalar_lea.vmem %s10, 128
        %v2218 = vld [vmem:[%s2217] sm:$0xff]
        %v2219 = vld [vmem:[%s2217 + $0x8] sm:$0xff]
        %v2220 = vld [vmem:[%s2217 + $0x10] sm:$0xff]
        %v2221 = vld [vmem:[%s2217 + $0x18] sm:$0xff]
        %s2222 = scalar_lea.vmem %s11, 4
        %v2223 = vld [vmem:[%s2222] sm:$0x1]
        %v2225 = vperm.slane %v2223, 0
        %v2228 = vsel %vm674, %v2215, 0
        %v2231 = vsel %vm674, %v2216, 0
        %2233 = vmatpush.msra.mxu0 0.0
        %2234 = vmatpush.msra.mxu0 0.0
        %2235 = vmatpush.msra.mxu0 0.0
        %2236 = vmatpush.msra.mxu0 0.0
        %2237 = vmatpush.msra.mxu0 0.0
        %2238 = vmatpush.msra.mxu0 0.0
        %2239 = vmatpush.msra.mxu0 0.0
        %2240 = vmatpush.msra.mxu0 0.0
        %2241 = vmatpush.msra.mxu0 0.0
        %2242 = vmatpush.msra.mxu0 0.0
        %2243 = vmatpush.msra.mxu0 0.0
        %2244 = vmatpush.msra.mxu0 0.0
        %2245 = vmatpush.msra.mxu0 %v2221
        %2246 = vmatpush.msra.mxu0 %v2220
        %2247 = vmatpush.msra.mxu0 %v2219
        %2248 = vmatpush.msra.mxu0 %v2218
        %2249 = vmatmul.f32.gmra.mxu0 %v2228
        %v2250 = vpop.f32.mrf.mxu0
        %v2251 = vadd.f32 %v2225, %v2250
        %2252 = vmatmul.f32.gmra.mxu0 %v2231
        %v2253 = vpop.f32.mrf.mxu0
        %v2254 = vadd.f32 %v2225, %v2253
        %2255 = vdwg.mxu0
        %v2256 = vmax.f32 %v2251, 0.0
        %v2257 = vmax.f32 %v2254, 0.0
        %s2258 = scalar_lea.vmem %s12, 256
        %v2259 = vld [vmem:[%s2258] sm:$0xff]
        %v2260 = vld [vmem:[%s2258 + $0x8] sm:$0xff]
        %v2261 = vld [vmem:[%s2258 + $0x10] sm:$0xff]
        %v2262 = vld [vmem:[%s2258 + $0x18] sm:$0xff]
        %v2263 = vld [vmem:[%s2258 + $0x20] sm:$0xff]
        %v2264 = vld [vmem:[%s2258 + $0x28] sm:$0xff]
        %v2265 = vld [vmem:[%s2258 + $0x30] sm:$0xff]
        %v2266 = vld [vmem:[%s2258 + $0x38] sm:$0xff]
        %s2267 = scalar_lea.vmem %s13, 4
        %v2268 = vld [vmem:[%s2267] sm:$0x1]
        %v2270 = vperm.slane %v2268, 0
        %v2273 = vsel %vm1313, %v2256, 0
        %v2276 = vsel %vm1313, %v2257, 0
        %2278 = vmatpush.msra.mxu0 0.0
        %2279 = vmatpush.msra.mxu0 0.0
        %2280 = vmatpush.msra.mxu0 0.0
        %2281 = vmatpush.msra.mxu0 0.0
        %2282 = vmatpush.msra.mxu0 0.0
        %2283 = vmatpush.msra.mxu0 0.0
        %2284 = vmatpush.msra.mxu0 0.0
        %2285 = vmatpush.msra.mxu0 0.0
        %2286 = vmatpush.msra.mxu0 %v2266
        %2287 = vmatpush.msra.mxu0 %v2265
        %2288 = vmatpush.msra.mxu0 %v2264
        %2289 = vmatpush.msra.mxu0 %v2263
        %2290 = vmatpush.msra.mxu0 %v2262
        %2291 = vmatpush.msra.mxu0 %v2261
        %2292 = vmatpush.msra.mxu0 %v2260
        %2293 = vmatpush.msra.mxu0 %v2259
        %2294 = vmatmul.f32.gmra.mxu0 %v2273
        %v2295 = vpop.f32.mrf.mxu0
        %v2296 = vadd.f32 %v2270, %v2295
        %2297 = vmatmul.f32.gmra.mxu0 %v2276
        %v2298 = vpop.f32.mrf.mxu0
        %v2299 = vadd.f32 %v2270, %v2298
        %2300 = vdwg.mxu0
        %s2301 = sadd.s32 %s565, 16
        %s2302 = sld [smem:[#allocation3 + %s2301]]
        %v2303 = vstv %s2302
        %v2304 = vmul.f32 %v2303, %v2296
        %v2305 = vmul.f32 %v2303, %v2299
        %s2306 = scalar_lea.vmem %s10, 160
        %v2307 = vld [vmem:[%s2306] sm:$0xff]
        %v2308 = vld [vmem:[%s2306 + $0x8] sm:$0xff]
        %v2309 = vld [vmem:[%s2306 + $0x10] sm:$0xff]
        %v2310 = vld [vmem:[%s2306 + $0x18] sm:$0xff]
        %s2311 = scalar_lea.vmem %s11, 5
        %v2312 = vld [vmem:[%s2311] sm:$0x1]
        %v2314 = vperm.slane %v2312, 0
        %2316 = vmatpush.msra.mxu0 0.0
        %2317 = vmatpush.msra.mxu0 0.0
        %2318 = vmatpush.msra.mxu0 0.0
        %2319 = vmatpush.msra.mxu0 0.0
        %2320 = vmatpush.msra.mxu0 0.0
        %2321 = vmatpush.msra.mxu0 0.0
        %2322 = vmatpush.msra.mxu0 0.0
        %2323 = vmatpush.msra.mxu0 0.0
        %2324 = vmatpush.msra.mxu0 0.0
        %2325 = vmatpush.msra.mxu0 0.0
        %2326 = vmatpush.msra.mxu0 0.0
        %2327 = vmatpush.msra.mxu0 0.0
        %2328 = vmatpush.msra.mxu0 %v2310
        %2329 = vmatpush.msra.mxu0 %v2309
        %2330 = vmatpush.msra.mxu0 %v2308
        %2331 = vmatpush.msra.mxu0 %v2307
        %2332 = vmatmul.f32.gmra.mxu0 %v2228
        %v2333 = vpop.f32.mrf.mxu0
        %v2334 = vadd.f32 %v2314, %v2333
        %2335 = vmatmul.f32.gmra.mxu0 %v2231
        %v2336 = vpop.f32.mrf.mxu0
        %v2337 = vadd.f32 %v2314, %v2336
        %2338 = vdwg.mxu0
        %v2339 = vmax.f32 %v2334, 0.0
        %v2340 = vmax.f32 %v2337, 0.0
        %s2341 = scalar_lea.vmem %s12, 320
        %v2342 = vld [vmem:[%s2341] sm:$0xff]
        %v2343 = vld [vmem:[%s2341 + $0x8] sm:$0xff]
        %v2344 = vld [vmem:[%s2341 + $0x10] sm:$0xff]
        %v2345 = vld [vmem:[%s2341 + $0x18] sm:$0xff]
        %v2346 = vld [vmem:[%s2341 + $0x20] sm:$0xff]
        %v2347 = vld [vmem:[%s2341 + $0x28] sm:$0xff]
        %v2348 = vld [vmem:[%s2341 + $0x30] sm:$0xff]
        %v2349 = vld [vmem:[%s2341 + $0x38] sm:$0xff]
        %s2350 = scalar_lea.vmem %s13, 5
        %v2351 = vld [vmem:[%s2350] sm:$0x1]
        %v2353 = vperm.slane %v2351, 0
        %v2356 = vsel %vm1313, %v2339, 0
        %v2359 = vsel %vm1313, %v2340, 0
        %2361 = vmatpush.msra.mxu0 0.0
        %2362 = vmatpush.msra.mxu0 0.0
        %2363 = vmatpush.msra.mxu0 0.0
        %2364 = vmatpush.msra.mxu0 0.0
        %2365 = vmatpush.msra.mxu0 0.0
        %2366 = vmatpush.msra.mxu0 0.0
        %2367 = vmatpush.msra.mxu0 0.0
        %2368 = vmatpush.msra.mxu0 0.0
        %2369 = vmatpush.msra.mxu0 %v2349
        %2370 = vmatpush.msra.mxu0 %v2348
        %2371 = vmatpush.msra.mxu0 %v2347
        %2372 = vmatpush.msra.mxu0 %v2346
        %2373 = vmatpush.msra.mxu0 %v2345
        %2374 = vmatpush.msra.mxu0 %v2344
        %2375 = vmatpush.msra.mxu0 %v2343
        %2376 = vmatpush.msra.mxu0 %v2342
        %2377 = vmatmul.f32.gmra.mxu0 %v2356
        %v2378 = vpop.f32.mrf.mxu0
        %v2379 = vadd.f32 %v2353, %v2378
        %2380 = vmatmul.f32.gmra.mxu0 %v2359
        %v2381 = vpop.f32.mrf.mxu0
        %v2382 = vadd.f32 %v2353, %v2381
        %2383 = vdwg.mxu0
        %s2384 = sadd.s32 %s565, 17
        %s2385 = sld [smem:[#allocation3 + %s2384]]
        %v2386 = vstv %s2385
        %v2387 = vmul.f32 %v2386, %v2379
        %v2388 = vmul.f32 %v2386, %v2382
        %v2389 = vadd.f32 %v2304, %v2387
        %v2390 = vadd.f32 %v2305, %v2388
        %s2391 = scalar_lea.vmem %s10, 192
        %v2392 = vld [vmem:[%s2391] sm:$0xff]
        %v2393 = vld [vmem:[%s2391 + $0x8] sm:$0xff]
        %v2394 = vld [vmem:[%s2391 + $0x10] sm:$0xff]
        %v2395 = vld [vmem:[%s2391 + $0x18] sm:$0xff]
        %s2396 = scalar_lea.vmem %s11, 6
        %v2397 = vld [vmem:[%s2396] sm:$0x1]
        %v2399 = vperm.slane %v2397, 0
        %2401 = vmatpush.msra.mxu0 0.0
        %2402 = vmatpush.msra.mxu0 0.0
        %2403 = vmatpush.msra.mxu0 0.0
        %2404 = vmatpush.msra.mxu0 0.0
        %2405 = vmatpush.msra.mxu0 0.0
        %2406 = vmatpush.msra.mxu0 0.0
        %2407 = vmatpush.msra.mxu0 0.0
        %2408 = vmatpush.msra.mxu0 0.0
        %2409 = vmatpush.msra.mxu0 0.0
        %2410 = vmatpush.msra.mxu0 0.0
        %2411 = vmatpush.msra.mxu0 0.0
        %2412 = vmatpush.msra.mxu0 0.0
        %2413 = vmatpush.msra.mxu0 %v2395
        %2414 = vmatpush.msra.mxu0 %v2394
        %2415 = vmatpush.msra.mxu0 %v2393
        %2416 = vmatpush.msra.mxu0 %v2392
        %2417 = vmatmul.f32.gmra.mxu0 %v2228
        %v2418 = vpop.f32.mrf.mxu0
        %v2419 = vadd.f32 %v2399, %v2418
        %2420 = vmatmul.f32.gmra.mxu0 %v2231
        %v2421 = vpop.f32.mrf.mxu0
        %v2422 = vadd.f32 %v2399, %v2421
        %2423 = vdwg.mxu0
        %v2424 = vmax.f32 %v2419, 0.0
        %v2425 = vmax.f32 %v2422, 0.0
        %s2426 = scalar_lea.vmem %s12, 384
        %v2427 = vld [vmem:[%s2426] sm:$0xff]
        %v2428 = vld [vmem:[%s2426 + $0x8] sm:$0xff]
        %v2429 = vld [vmem:[%s2426 + $0x10] sm:$0xff]
        %v2430 = vld [vmem:[%s2426 + $0x18] sm:$0xff]
        %v2431 = vld [vmem:[%s2426 + $0x20] sm:$0xff]
        %v2432 = vld [vmem:[%s2426 + $0x28] sm:$0xff]
        %v2433 = vld [vmem:[%s2426 + $0x30] sm:$0xff]
        %v2434 = vld [vmem:[%s2426 + $0x38] sm:$0xff]
        %s2435 = scalar_lea.vmem %s13, 6
        %v2436 = vld [vmem:[%s2435] sm:$0x1]
        %v2438 = vperm.slane %v2436, 0
        %v2441 = vsel %vm1313, %v2424, 0
        %v2444 = vsel %vm1313, %v2425, 0
        %2446 = vmatpush.msra.mxu0 0.0
        %2447 = vmatpush.msra.mxu0 0.0
        %2448 = vmatpush.msra.mxu0 0.0
        %2449 = vmatpush.msra.mxu0 0.0
        %2450 = vmatpush.msra.mxu0 0.0
        %2451 = vmatpush.msra.mxu0 0.0
        %2452 = vmatpush.msra.mxu0 0.0
        %2453 = vmatpush.msra.mxu0 0.0
        %2454 = vmatpush.msra.mxu0 %v2434
        %2455 = vmatpush.msra.mxu0 %v2433
        %2456 = vmatpush.msra.mxu0 %v2432
        %2457 = vmatpush.msra.mxu0 %v2431
        %2458 = vmatpush.msra.mxu0 %v2430
        %2459 = vmatpush.msra.mxu0 %v2429
        %2460 = vmatpush.msra.mxu0 %v2428
        %2461 = vmatpush.msra.mxu0 %v2427
        %2462 = vmatmul.f32.gmra.mxu0 %v2441
        %v2463 = vpop.f32.mrf.mxu0
        %v2464 = vadd.f32 %v2438, %v2463
        %2465 = vmatmul.f32.gmra.mxu0 %v2444
        %v2466 = vpop.f32.mrf.mxu0
        %v2467 = vadd.f32 %v2438, %v2466
        %2468 = vdwg.mxu0
        %s2469 = sadd.s32 %s565, 18
        %s2470 = sld [smem:[#allocation3 + %s2469]]
        %v2471 = vstv %s2470
        %v2472 = vmul.f32 %v2471, %v2464
        %v2473 = vmul.f32 %v2471, %v2467
        %v2474 = vadd.f32 %v2389, %v2472
        %v2475 = vadd.f32 %v2390, %v2473
        %s2476 = scalar_lea.vmem %s10, 224
        %v2477 = vld [vmem:[%s2476] sm:$0xff]
        %v2478 = vld [vmem:[%s2476 + $0x8] sm:$0xff]
        %v2479 = vld [vmem:[%s2476 + $0x10] sm:$0xff]
        %v2480 = vld [vmem:[%s2476 + $0x18] sm:$0xff]
        %s2481 = scalar_lea.vmem %s11, 7
        %v2482 = vld [vmem:[%s2481] sm:$0x1]
        %v2484 = vperm.slane %v2482, 0
        %2486 = vmatpush.msra.mxu0 0.0
        %2487 = vmatpush.msra.mxu0 0.0
        %2488 = vmatpush.msra.mxu0 0.0
        %2489 = vmatpush.msra.mxu0 0.0
        %2490 = vmatpush.msra.mxu0 0.0
        %2491 = vmatpush.msra.mxu0 0.0
        %2492 = vmatpush.msra.mxu0 0.0
        %2493 = vmatpush.msra.mxu0 0.0
        %2494 = vmatpush.msra.mxu0 0.0
        %2495 = vmatpush.msra.mxu0 0.0
        %2496 = vmatpush.msra.mxu0 0.0
        %2497 = vmatpush.msra.mxu0 0.0
        %2498 = vmatpush.msra.mxu0 %v2480
        %2499 = vmatpush.msra.mxu0 %v2479
        %2500 = vmatpush.msra.mxu0 %v2478
        %2501 = vmatpush.msra.mxu0 %v2477
        %2502 = vmatmul.f32.gmra.mxu0 %v2228
        %v2503 = vpop.f32.mrf.mxu0
        %v2504 = vadd.f32 %v2484, %v2503
        %2505 = vmatmul.f32.gmra.mxu0 %v2231
        %v2506 = vpop.f32.mrf.mxu0
        %v2507 = vadd.f32 %v2484, %v2506
        %2508 = vdwg.mxu0
        %v2509 = vmax.f32 %v2504, 0.0
        %v2510 = vmax.f32 %v2507, 0.0
        %s2511 = scalar_lea.vmem %s12, 448
        %v2512 = vld [vmem:[%s2511] sm:$0xff]
        %v2513 = vld [vmem:[%s2511 + $0x8] sm:$0xff]
        %v2514 = vld [vmem:[%s2511 + $0x10] sm:$0xff]
        %v2515 = vld [vmem:[%s2511 + $0x18] sm:$0xff]
        %v2516 = vld [vmem:[%s2511 + $0x20] sm:$0xff]
        %v2517 = vld [vmem:[%s2511 + $0x28] sm:$0xff]
        %v2518 = vld [vmem:[%s2511 + $0x30] sm:$0xff]
        %v2519 = vld [vmem:[%s2511 + $0x38] sm:$0xff]
        %s2520 = scalar_lea.vmem %s13, 7
        %v2521 = vld [vmem:[%s2520] sm:$0x1]
        %v2523 = vperm.slane %v2521, 0
        %v2526 = vsel %vm1313, %v2509, 0
        %v2529 = vsel %vm1313, %v2510, 0
        %2531 = vmatpush.msra.mxu0 0.0
        %2532 = vmatpush.msra.mxu0 0.0
        %2533 = vmatpush.msra.mxu0 0.0
        %2534 = vmatpush.msra.mxu0 0.0
        %2535 = vmatpush.msra.mxu0 0.0
        %2536 = vmatpush.msra.mxu0 0.0
        %2537 = vmatpush.msra.mxu0 0.0
        %2538 = vmatpush.msra.mxu0 0.0
        %2539 = vmatpush.msra.mxu0 %v2519
        %2540 = vmatpush.msra.mxu0 %v2518
        %2541 = vmatpush.msra.mxu0 %v2517
        %2542 = vmatpush.msra.mxu0 %v2516
        %2543 = vmatpush.msra.mxu0 %v2515
        %2544 = vmatpush.msra.mxu0 %v2514
        %2545 = vmatpush.msra.mxu0 %v2513
        %2546 = vmatpush.msra.mxu0 %v2512
        %2547 = vmatmul.f32.gmra.mxu0 %v2526
        %v2548 = vpop.f32.mrf.mxu0
        %v2549 = vadd.f32 %v2523, %v2548
        %2550 = vmatmul.f32.gmra.mxu0 %v2529
        %v2551 = vpop.f32.mrf.mxu0
        %v2552 = vadd.f32 %v2523, %v2551
        %2553 = vdwg.mxu0
        %s2554 = sadd.s32 %s565, 19
        %s2555 = sld [smem:[#allocation3 + %s2554]]
        %v2556 = vstv %s2555
        %v2557 = vmul.f32 %v2556, %v2549
        %v2558 = vmul.f32 %v2556, %v2552
        %v2559 = vadd.f32 %v2474, %v2557
        %v2560 = vadd.f32 %v2475, %v2558
        %v2561 = vadd.f32 %v2215, %v2559
        %v2562 = vadd.f32 %v2216, %v2560
        %v2563 = vsel %vm674, %v2561, 0.0
        %v2564 = vsel %vm678, %v2562, 0.0
        %v2565 = vadd.f32 %v2563, %v2564
        %v2566 = vrot.slane %v2565, 4
        %v2567 = vadd.f32 %v2565, %v2566
        %v2568 = vrot.slane %v2567, 2
        %v2569 = vadd.f32 %v2567, %v2568
        %v2570 = vrot.slane %v2569, 1
        %v2571 = vadd.f32 %v2569, %v2570
        %v2572 = vmul.f32 %v2571, %v1221
        %v2573 = vsub.f32 %v2561, %v2572
        %v2574 = vsub.f32 %v2562, %v2572
        %v2575 = vmul.f32 %v2573, %v2573
        %v2576 = vmul.f32 %v2574, %v2574
        %v2577 = vsel %vm674, %v2575, 0.0
        %v2578 = vsel %vm678, %v2576, 0.0
        %v2579 = vadd.f32 %v2577, %v2578
        %v2580 = vrot.slane %v2579, 4
        %v2581 = vadd.f32 %v2579, %v2580
        %v2582 = vrot.slane %v2581, 2
        %v2583 = vadd.f32 %v2581, %v2582
        %v2584 = vrot.slane %v2583, 1
        %v2585 = vadd.f32 %v2583, %v2584
        %v2586 = vmul.f32 %v2585, %v1221
        %v2587 = vadd.f32 %v2586, 1e-05
        %v2588 = vrsqrt.pop %v2587
        %v2589 = vmul.f32 %v2588, %v2587
        %v2590 = vmul.f32 %v2589, %v2588
        %v2591 = vmul.f32 0.5, %v2590
        %v2592 = vsub.f32 1.5, %v2591
        %v2593 = vmul.f32 %v2588, %v2592
        %vm2594 = vweird.f32 %v2587
        %vm2595 = vweird.f32 %v2588
        %vm2596 = vmor %vm2594, %vm2595
        %v2597 = vsel %vm2596, %v2588, %v2593
        %v2598 = vmul.f32 %v2573, %v2597
        %s2599 = scalar_lea.vmem %s14, 1
        %v2600 = vld [vmem:[%s2599] sm:$0x1]
        %v2602 = vperm.slane %v2600, 0
        %v2604 = vmul.f32 %v2598, %v2602
        %s2605 = scalar_lea.vmem %s15, 1
        %v2606 = vld [vmem:[%s2605] sm:$0x1]
        %v2608 = vperm.slane %v2606, 0
        %v2610 = vadd.f32 %v2604, %v2608
        %2611 = vst.msk [vmem:[%s526] sm:$0xff] %vm674, %v2610
        %s2612 = sand.u32 %s380, 1
        %s2613 = scalar_lea.sflag [#allocation4], %s2612
        %s2614 = sand.u32 %s380, 1
        %s2615 = smul.addr %s2614, 8
        %s2616 = scalar_lea.vmem [#allocation6], %s2615
        // Predicated region
        $region89: #{_lambda_.3} parent=83 // pred_check
          %p2617 = pneg %p390
        $region90: #{_lambda_.3} parent=83 // pred_check_branch
          %2619 = sbr.rel (%p2617) target = $region92
        $region91: #{_lambda_.3} parent=83 // pred_region
          %2621 = vsyncadd %s2613, 0
          %s2622 = smul.addr %s31, 8
          %s2623 = scalar_lea.hbm %s16, %s2622
          %s2625 = sshll.u32 %s2616, 4
          %s2626 = int_to_ptr.vmem [resolvable:$true] %s2625
          %s2627 = sshll.u32 %s2623, 4
          %s2628 = int_to_ptr.hbm [resolvable:$true] %s2627
          %2630 = dma.vmem_to_hbm [thread:$0]  %s2626, 128, %s2628, %s2613
        $region92: #{_lambda_.3} parent=83 // pred_fallthru
          _
      $region84: #{_lambda_.3} parent=5 // pred_fallthru
        _
      %p2631 = scmp.le.s32.totalorder 2, %s26
      // Predicated region
      $region93: #{_lambda_.3} parent=5 // pred_check
        %p2632 = pneg %p2631
      $region94: #{_lambda_.3} parent=5 // pred_check_branch
        %2634 = sbr.rel (%p2632) target = $region96
      $region95: #{_lambda_.3} parent=5 // pred_region
        %s2635 = ssub.s32 %s26, 2
        // Predicated region
        $region97: #{_lambda_.3} parent=95 // pred_check
          %p2636 = pneg %p396
        $region98: #{_lambda_.3} parent=95 // pred_check_branch
          %2638 = sbr.rel (%p2636) target = $region100
        $region99: #{_lambda_.3} parent=95 // pred_region
          %s2639 = sand.u32 %s381, 1
          %s2640 = scalar_lea.sflag [#allocation4], %s2639
          %s2641 = sand.u32 %s381, 1
          %s2642 = smul.addr %s2641, 8
          %s2643 = scalar_lea.vmem [#allocation6], %s2642
          %2645 = dma.done %s2640, 128
        $region100: #{_lambda_.3} parent=95 // pred_fallthru
          _
      $region96: #{_lambda_.3} parent=5 // pred_fallthru
        _
    $region6: #{_lambda_.3} parent=1 // loop_footer
      %s30 = sadd.s32 1, %s26
    $region7: #{_lambda_.3} parent=1 // loop_footer_branch
      %25 = sbr.rel target = $region3
    $region8: #{_lambda_.3} parent=1 // loop_exit
      _
    %2646 = vsyncpa [#allocation4], 1
    %s2647 = scalar_lea.sflag [#allocation4], 1
    %2648 = vsyncpa %s2647, 1
    %2649 = vsyncpa [#allocation5], 1
    %s2650 = scalar_lea.sflag [#allocation5], 1
    %2651 = vsyncpa %s2650, 1

</llo_original>
